<compile_context>
chip_gen: v6e
topology: v6e:2x2x1
jax: 0.10.0
libtpu: 0.0.40
codegen_flags: <defaults>
</compile_context>

<pallas_src>
import jax
import jax.numpy as jnp
from jax.experimental import pallas as pl
from jax.experimental.pallas import tpu as pltpu

# ---- scaled-down ESM2-style config (real esm2_t36_3B: 36 layers, D=2560, H=40)
VOCAB = 33          # ESM alphabet size
NUM_LAYERS = 2      # TODO(synk): real backbone has 36 layers
D = 32              # hidden size (real: 2560 == 1280*2, the classifier in_features)
H = 4               # attention heads
HD = D // H         # head dim (real: 64)
FFN = 64            # feed-forward inner dim (real: 4*D)
NUM_LABELS = 2
LBL_PAD = 128       # lane-dense classifier output slab; real logits in [:, :NUM_LABELS]
EPS = 1e-5


# --------------------------- in-kernel helpers --------------------------------

def _layer_norm(x, w, b):
    # one-pass variance: E[x^2] - mu^2 (saves one XLU reduction vs. two-pass)
    mu = jnp.mean(x, axis=-1, keepdims=True)
    ms = jnp.mean(x * x, axis=-1, keepdims=True)
    var = ms - mu * mu
    return (x - mu) * jax.lax.rsqrt(var + EPS) * w + b


def _erf(x):
    # Abramowitz & Stegun 7.1.26 polynomial erf (|err| < 1.5e-7). Composed only
    # of exp / mul / add / div / select so it lowers cleanly (VPU + EUP) and
    # gives ESM2's exact-erf GELU instead of the tanh approximation.
    a1, a2, a3, a4, a5 = 0.254829592, -0.284496736, 1.421413741, -1.453152027, 1.061405429
    p = 0.3275911
    sgn = jnp.where(x >= 0.0, 1.0, -1.0)
    ax = jnp.abs(x)
    t = 1.0 / (1.0 + p * ax)
    poly = ((((a5 * t + a4) * t + a3) * t + a2) * t + a1) * t
    return sgn * (1.0 - poly * jnp.exp(-ax * ax))


def _gelu_erf(x):
    return 0.5 * x * (1.0 + _erf(x * 0.7071067811865476))


def _rotate_half(x):
    half = x.shape[-1] // 2
    return jnp.concatenate([-x[..., half:], x[..., :half]], axis=-1)


def _softmax_lastdim(s):
    m = jnp.max(s, axis=-1, keepdims=True)
    e = jnp.exp(s - m)
    return e * pl.reciprocal(jnp.sum(e, axis=-1, keepdims=True), approx=True)


# --------------------------- fused backbone kernel ----------------------------

def backbone_kernel(x_ref, cos_ref, sin_ref,
                    ln1w, ln1b, wq, bq, wk, bk, wv, bv, wo, bo,
                    ln2w, ln2b, w1, b1, w2, b2,
                    lnfw, lnfb, wc, bc,
                    out_ref, h_res):
    """One (batch, layer) grid step of the fused ESM2-style backbone.

    grid = (B, NUM_LAYERS).  The residual stream of the current batch element
    lives in the VMEM scratch `h_res` across the layer axis; per-layer weight
    blocks stream in via their BlockSpecs (double-buffered by the pipeline).
    The final layer norm + [1:-1] slice + classifier are fused into the last
    layer step, writing a lane-dense (S-2, 128) logits slab.
    """
    layer = pl.program_id(1)
    seq, dm = x_ref.shape
    hd = cos_ref.shape[-1]
    nh = dm // hd

    @pl.when(layer == 0)
    def _():
        h_res[...] = x_ref[...]

    x = h_res[...]                                              # (S, D) f32 residual

    # ---------------- self-attention block (pre-LN) ----------------
    h = _layer_norm(x, ln1w[...], ln1b[...])
    hb = h.astype(jnp.bfloat16)                                 # bf16 MXU operands
    q = jnp.dot(hb, wq[...], preferred_element_type=jnp.float32) + bq[...]
    k = jnp.dot(hb, wk[...], preferred_element_type=jnp.float32) + bk[...]
    v = jnp.dot(hb, wv[...], preferred_element_type=jnp.float32) + bv[...]

    # pack heads: (S, D) -> (H, S, HD); batched einsums, no per-head loop/concat
    q = jnp.transpose(q.reshape(seq, nh, hd), (1, 0, 2))
    k = jnp.transpose(k.reshape(seq, nh, hd), (1, 0, 2))
    v = jnp.transpose(v.reshape(seq, nh, hd), (1, 0, 2))

    # rotary position embeddings on q/k (ESM2)
    cos = cos_ref[...][None, :, :]                              # (1, S, HD)
    sin = sin_ref[...][None, :, :]
    q = q * cos + _rotate_half(q) * sin
    k = k * cos + _rotate_half(k) * sin

    scale = 1.0 / (hd ** 0.5)
    s = jnp.einsum("hqd,hkd->hqk",
                   q.astype(jnp.bfloat16), k.astype(jnp.bfloat16),
                   preferred_element_type=jnp.float32) * scale
    # TODO(synk): key-padding mask for padded batches is not applied here.
    p = _softmax_lastdim(s)
    ctx = jnp.einsum("hqk,hkd->hqd",
                     p.astype(jnp.bfloat16), v.astype(jnp.bfloat16),
                     preferred_element_type=jnp.float32)        # (H, S, HD)
    attn = jnp.transpose(ctx, (1, 0, 2)).reshape(seq, dm)
    x = x + jnp.dot(attn.astype(jnp.bfloat16), wo[...],
                    preferred_element_type=jnp.float32) + bo[...]

    # ---------------- feed-forward block (pre-LN) ----------------
    h2 = _layer_norm(x, ln2w[...], ln2b[...])
    f = jnp.dot(h2.astype(jnp.bfloat16), w1[...],
                preferred_element_type=jnp.float32) + b1[...]
    f = _gelu_erf(f)                                            # exact erf-GELU
    f = jnp.dot(f.astype(jnp.bfloat16), w2[...],
                preferred_element_type=jnp.float32) + b2[...]
    x = x + f

    h_res[...] = x                                              # stays in VMEM

    # --------- fused emb_layer_norm_after + [1:-1] slice + classifier ---------
    @pl.when(layer == pl.num_programs(1) - 1)
    def _():
        rep = x[1:-1, :]                                        # drop BOS / EOS
        hf = _layer_norm(rep, lnfw[...], lnfb[...])
        out_ref[...] = jnp.dot(hf.astype(jnp.bfloat16), wc[...],
                               preferred_element_type=jnp.float32) + bc[...]


# --------------------------- wrapper -------------------------------------------

def _rotary_tables(seq_len, head_dim):
    inv_freq = 1.0 / (10000.0 ** (jnp.arange(0, head_dim, 2, dtype=jnp.float32)
                                  / head_dim))
    t = jnp.arange(seq_len, dtype=jnp.float32)
    freqs = t[:, None] * inv_freq[None, :]
    emb = jnp.concatenate([freqs, freqs], axis=-1)              # (S, HD)
    return jnp.cos(emb), jnp.sin(emb)


_LAYER_NAMES = ("ln1w", "ln1b", "wq", "bq", "wk", "bk", "wv", "bv", "wo", "bo",
                "ln2w", "ln2b", "w1", "b1", "w2", "b2")


def esm1v_token_classification_forward(token_ids, params):
    """token_ids: (B, S) int32  ->  logits: (B, S-2, NUM_LABELS) float32."""
    B, S = token_ids.shape
    # embedding lookup is plain-JAX glue (gather); everything else runs in-kernel
    x = jnp.take(params["embed"], token_ids, axis=0).astype(jnp.float32)
    cos, sin = _rotary_tables(S, HD)

    stk = params["layers"]
    args = (x, cos, sin) + tuple(stk[n] for n in _LAYER_NAMES) + \
           (params["lnfw"], params["lnfb"], params["wc"], params["bc"])

    def full_spec(a):
        return pl.BlockSpec(a.shape, lambda b, l, _nd=a.ndim: (0,) * _nd)

    def per_layer_spec(a):
        return pl.BlockSpec((None,) + a.shape[1:], lambda b, l: (l, 0, 0))

    in_specs = [pl.BlockSpec((None, S, D), lambda b, l: (b, 0, 0)),
                full_spec(cos), full_spec(sin)]
    in_specs += [per_layer_spec(stk[n]) for n in _LAYER_NAMES]
    in_specs += [full_spec(params[n]) for n in ("lnfw", "lnfb", "wc", "bc")]

    out = pl.pallas_call(
        backbone_kernel,
        grid=(B, NUM_LAYERS),
        in_specs=in_specs,
        out_specs=pl.BlockSpec((None, S - 2, LBL_PAD), lambda b, l: (b, 0, 0)),
        out_shape=jax.ShapeDtypeStruct((B, S - 2, LBL_PAD), jnp.float32),
        scratch_shapes=[pltpu.VMEM((S, D), jnp.float32)],
        compiler_params=pltpu.CompilerParams(
            dimension_semantics=("parallel", "arbitrary")),
    )(*args)
    # TODO(synk): at real scale (D=2560, FFN=10240) the per-layer weights must be
    # streamed as K/N-tiled bf16 BlockSpec blocks (~2.5 MB tiles) with an
    # accumulator scratch, the sequence dim tiled to >=128 rows, and
    # vmem_limit_bytes re-derived for v7x's 64 MiB VMEM.
    return out[:, :, :NUM_LABELS]                               # glue slice


# --------------------------- deterministic params ------------------------------

def init_params(key):
    def nrm(k, shape, dtype=jnp.float32, scale=0.02):
        return (scale * jax.random.normal(k, shape, dtype=jnp.float32)).astype(dtype)

    keys = jax.random.split(key, NUM_LAYERS + 2)
    params = {"embed": nrm(keys[0], (VOCAB, D))}

    lkeys = [jax.random.split(keys[1 + li], 6) for li in range(NUM_LAYERS)]

    def per_layer(fn):
        return jnp.stack([fn(li) for li in range(NUM_LAYERS)], axis=0)

    bf16 = jnp.bfloat16
    params["layers"] = {
        "ln1w": jnp.ones((NUM_LAYERS, 1, D), jnp.float32),
        "ln1b": jnp.zeros((NUM_LAYERS, 1, D), jnp.float32),
        "wq": per_layer(lambda li: nrm(lkeys[li][0], (D, D), bf16)),
        "bq": jnp.zeros((NUM_LAYERS, 1, D), jnp.float32),
        "wk": per_layer(lambda li: nrm(lkeys[li][1], (D, D), bf16)),
        "bk": jnp.zeros((NUM_LAYERS, 1, D), jnp.float32),
        "wv": per_layer(lambda li: nrm(lkeys[li][2], (D, D), bf16)),
        "bv": jnp.zeros((NUM_LAYERS, 1, D), jnp.float32),
        "wo": per_layer(lambda li: nrm(lkeys[li][3], (D, D), bf16)),
        "bo": jnp.zeros((NUM_LAYERS, 1, D), jnp.float32),
        "ln2w": jnp.ones((NUM_LAYERS, 1, D), jnp.float32),
        "ln2b": jnp.zeros((NUM_LAYERS, 1, D), jnp.float32),
        "w1": per_layer(lambda li: nrm(lkeys[li][4], (D, FFN), bf16)),
        "b1": jnp.zeros((NUM_LAYERS, 1, FFN), jnp.float32),
        "w2": per_layer(lambda li: nrm(lkeys[li][5], (FFN, D), bf16)),
        "b2": jnp.zeros((NUM_LAYERS, 1, D), jnp.float32),
    }
    kc = keys[-1]
    params["lnfw"] = jnp.ones((1, D), jnp.float32)
    params["lnfb"] = jnp.zeros((1, D), jnp.float32)
    wc_full = jnp.zeros((D, LBL_PAD), jnp.float32).at[:, :NUM_LABELS].set(
        nrm(kc, (D, NUM_LABELS)))
    params["wc"] = wc_full.astype(bf16)        # lane-dense padded classifier weight
    params["bc"] = jnp.zeros((1, LBL_PAD), jnp.float32)
    return params


if __name__ == "__main__":
    key = jax.random.PRNGKey(0)
    k_tok, k_par = jax.random.split(key)

    B, S = 2, 8                                 # batch=2, seq (incl. BOS/EOS)=8
    token_ids = jax.random.randint(k_tok, (B, S), 0, VOCAB, dtype=jnp.int32)
    params = init_params(k_par)

    fwd = jax.jit(esm1v_token_classification_forward)
    logits = jax.block_until_ready(fwd(token_ids, params))
    assert logits.shape == (B, S - 2, NUM_LABELS), logits.shape
    assert logits.dtype == jnp.float32
    print("KERNEL_OK")
</pallas_src>

<mosaic_0001>
module attributes {stable_mosaic.version = 11 : i64} {
  func.func @backbone_kernel(%arg0: i32, %arg1: i32, %arg2: memref<1x8x32xf32, #tpu.memory_space<vmem>>, %arg3: memref<8x8xf32, #tpu.memory_space<vmem>>, %arg4: memref<8x8xf32, #tpu.memory_space<vmem>>, %arg5: memref<1x1x32xf32, #tpu.memory_space<vmem>>, %arg6: memref<1x1x32xf32, #tpu.memory_space<vmem>>, %arg7: memref<1x32x32xbf16, #tpu.memory_space<vmem>>, %arg8: memref<1x1x32xf32, #tpu.memory_space<vmem>>, %arg9: memref<1x32x32xbf16, #tpu.memory_space<vmem>>, %arg10: memref<1x1x32xf32, #tpu.memory_space<vmem>>, %arg11: memref<1x32x32xbf16, #tpu.memory_space<vmem>>, %arg12: memref<1x1x32xf32, #tpu.memory_space<vmem>>, %arg13: memref<1x32x32xbf16, #tpu.memory_space<vmem>>, %arg14: memref<1x1x32xf32, #tpu.memory_space<vmem>>, %arg15: memref<1x1x32xf32, #tpu.memory_space<vmem>>, %arg16: memref<1x1x32xf32, #tpu.memory_space<vmem>>, %arg17: memref<1x32x64xbf16, #tpu.memory_space<vmem>>, %arg18: memref<1x1x64xf32, #tpu.memory_space<vmem>>, %arg19: memref<1x64x32xbf16, #tpu.memory_space<vmem>>, %arg20: memref<1x1x32xf32, #tpu.memory_space<vmem>>, %arg21: memref<1x32xf32, #tpu.memory_space<vmem>>, %arg22: memref<1x32xf32, #tpu.memory_space<vmem>>, %arg23: memref<32x128xbf16, #tpu.memory_space<vmem>>, %arg24: memref<1x128xf32, #tpu.memory_space<vmem>>, %arg25: memref<1x6x128xf32, #tpu.memory_space<vmem>>, %arg26: memref<8x32xf32, #tpu.memory_space<vmem>>) attributes {dimension_semantics = [#tpu.dimension_semantics<parallel>, #tpu.dimension_semantics<arbitrary>], iteration_bounds = array<i64: 2, 2>, scalar_prefetch = 0 : i64, scratch_operands = 1 : i64, tpu.core_type = #tpu.core_type<tc>, window_params = [{transform_indices = @transform_0, window_bounds = array<i64: 1, 8, 32>}, {pipeline_mode = #tpu.pipeline_mode<synchronous>, transform_indices = @transform_1, window_bounds = array<i64: 8, 8>}, {pipeline_mode = #tpu.pipeline_mode<synchronous>, transform_indices = @transform_2, window_bounds = array<i64: 8, 8>}, {transform_indices = @transform_3, window_bounds = array<i64: 1, 1, 32>}, {transform_indices = @transform_4, window_bounds = array<i64: 1, 1, 32>}, {transform_indices = @transform_5, window_bounds = array<i64: 1, 32, 32>}, {transform_indices = @transform_6, window_bounds = array<i64: 1, 1, 32>}, {transform_indices = @transform_7, window_bounds = array<i64: 1, 32, 32>}, {transform_indices = @transform_8, window_bounds = array<i64: 1, 1, 32>}, {transform_indices = @transform_9, window_bounds = array<i64: 1, 32, 32>}, {transform_indices = @transform_10, window_bounds = array<i64: 1, 1, 32>}, {transform_indices = @transform_11, window_bounds = array<i64: 1, 32, 32>}, {transform_indices = @transform_12, window_bounds = array<i64: 1, 1, 32>}, {transform_indices = @transform_13, window_bounds = array<i64: 1, 1, 32>}, {transform_indices = @transform_14, window_bounds = array<i64: 1, 1, 32>}, {transform_indices = @transform_15, window_bounds = array<i64: 1, 32, 64>}, {transform_indices = @transform_16, window_bounds = array<i64: 1, 1, 64>}, {transform_indices = @transform_17, window_bounds = array<i64: 1, 64, 32>}, {transform_indices = @transform_18, window_bounds = array<i64: 1, 1, 32>}, {pipeline_mode = #tpu.pipeline_mode<synchronous>, transform_indices = @transform_19, window_bounds = array<i64: 1, 32>}, {pipeline_mode = #tpu.pipeline_mode<synchronous>, transform_indices = @transform_20, window_bounds = array<i64: 1, 32>}, {pipeline_mode = #tpu.pipeline_mode<synchronous>, transform_indices = @transform_21, window_bounds = array<i64: 32, 128>}, {pipeline_mode = #tpu.pipeline_mode<synchronous>, transform_indices = @transform_22, window_bounds = array<i64: 1, 128>}, {transform_indices = @transform_23, window_bounds = array<i64: 1, 6, 128>}]} {
    %c0_i32 = arith.constant 0 : i32
    %0 = arith.cmpi eq, %arg1, %c0_i32 : i32
    %1 = arith.extui %0 : i1 to i32
    %c0_i32_0 = arith.constant 0 : i32
    %2 = arith.cmpi ne, %1, %c0_i32_0 : i32
    scf.if %2 {
      %c0_95 = arith.constant 0 : index
      %c0_96 = arith.constant 0 : index
      %c0_97 = arith.constant 0 : index
      %199 = vector.load %arg2[%c0_95, %c0_96, %c0_97] : memref<1x8x32xf32, #tpu.memory_space<vmem>>, vector<1x8x32xf32>
      %200 = vector.shape_cast %199 : vector<1x8x32xf32> to vector<8x32xf32>
      %c0_98 = arith.constant 0 : index
      %c0_99 = arith.constant 0 : index
      %201 = vector.load %arg26[%c0_98, %c0_99] : memref<8x32xf32, #tpu.memory_space<vmem>>, vector<8x32xf32>
      tpu.vector_store %arg26[%c0_98, %c0_99], %200 {strides = array<i32>} : memref<8x32xf32, #tpu.memory_space<vmem>>, vector<8x32xf32>,
    } else {
    }
    %c0 = arith.constant 0 : index
    %c0_1 = arith.constant 0 : index
    %3 = vector.load %arg26[%c0, %c0_1] : memref<8x32xf32, #tpu.memory_space<vmem>>, vector<8x32xf32>
    %c0_2 = arith.constant 0 : index
    %c0_3 = arith.constant 0 : index
    %c0_4 = arith.constant 0 : index
    %4 = vector.load %arg5[%c0_2, %c0_3, %c0_4] : memref<1x1x32xf32, #tpu.memory_space<vmem>>, vector<1x1x32xf32>
    %5 = vector.shape_cast %4 : vector<1x1x32xf32> to vector<1x32xf32>
    %c0_5 = arith.constant 0 : index
    %c0_6 = arith.constant 0 : index
    %c0_7 = arith.constant 0 : index
    %6 = vector.load %arg6[%c0_5, %c0_6, %c0_7] : memref<1x1x32xf32, #tpu.memory_space<vmem>>, vector<1x1x32xf32>
    %7 = vector.shape_cast %6 : vector<1x1x32xf32> to vector<1x32xf32>
    %cst = arith.constant dense<0.000000e+00> : vector<8xf32>
    %8 = vector.multi_reduction <add>, %3, %cst [1] : vector<8x32xf32> to vector<8xf32>
    %9 = vector.shape_cast %8 : vector<8xf32> to vector<8x1xf32>
    %cst_8 = arith.constant 3.200000e+01 : f32
    %10 = vector.broadcast %cst_8 : f32 to vector<8x1xf32>
    %11 = arith.divf %9, %10 : vector<8x1xf32>
    %12 = arith.mulf %3, %3 : vector<8x32xf32>
    %cst_9 = arith.constant dense<0.000000e+00> : vector<8xf32>
    %13 = vector.multi_reduction <add>, %12, %cst_9 [1] : vector<8x32xf32> to vector<8xf32>
    %14 = vector.shape_cast %13 : vector<8xf32> to vector<8x1xf32>
    %cst_10 = arith.constant 3.200000e+01 : f32
    %15 = vector.broadcast %cst_10 : f32 to vector<8x1xf32>
    %16 = arith.divf %14, %15 : vector<8x1xf32>
    %17 = arith.mulf %11, %11 : vector<8x1xf32>
    %18 = arith.subf %16, %17 : vector<8x1xf32>
    %19 = vector.broadcast %11 : vector<8x1xf32> to vector<8x32xf32>
    %20 = arith.subf %3, %19 : vector<8x32xf32>
    %cst_11 = arith.constant 9.99999974E-6 : f32
    %21 = vector.broadcast %cst_11 : f32 to vector<8x1xf32>
    %22 = arith.addf %18, %21 : vector<8x1xf32>
    %23 = math.rsqrt %22 : vector<8x1xf32>
    %24 = vector.broadcast %23 : vector<8x1xf32> to vector<8x32xf32>
    %25 = arith.mulf %20, %24 : vector<8x32xf32>
    %26 = vector.broadcast %5 : vector<1x32xf32> to vector<8x32xf32>
    %27 = arith.mulf %25, %26 : vector<8x32xf32>
    %28 = vector.broadcast %7 : vector<1x32xf32> to vector<8x32xf32>
    %29 = arith.addf %27, %28 : vector<8x32xf32>
    %30 = arith.truncf %29 : vector<8x32xf32> to vector<8x32xbf16>
    %c0_12 = arith.constant 0 : index
    %c0_13 = arith.constant 0 : index
    %c0_14 = arith.constant 0 : index
    %31 = vector.load %arg7[%c0_12, %c0_13, %c0_14] : memref<1x32x32xbf16, #tpu.memory_space<vmem>>, vector<1x32x32xbf16>
    %32 = vector.shape_cast %31 : vector<1x32x32xbf16> to vector<32x32xbf16>
    %cst_15 = arith.constant dense<0.000000e+00> : vector<8x32xf32>
    %33 = tpu.matmul %30, %32, %cst_15 {dimension_numbers = #tpu.dot_dimension_numbers<[1], [0], [0], [1], [0, 0, 1, 1], [], []>} : vector<8x32xbf16>, vector<32x32xbf16>, vector<8x32xf32> -> vector<8x32xf32>
    %c0_16 = arith.constant 0 : index
    %c0_17 = arith.constant 0 : index
    %c0_18 = arith.constant 0 : index
    %34 = vector.load %arg8[%c0_16, %c0_17, %c0_18] : memref<1x1x32xf32, #tpu.memory_space<vmem>>, vector<1x1x32xf32>
    %35 = vector.shape_cast %34 : vector<1x1x32xf32> to vector<1x32xf32>
    %36 = vector.broadcast %35 : vector<1x32xf32> to vector<8x32xf32>
    %37 = arith.addf %33, %36 : vector<8x32xf32>
    %c0_19 = arith.constant 0 : index
    %c0_20 = arith.constant 0 : index
    %c0_21 = arith.constant 0 : index
    %38 = vector.load %arg9[%c0_19, %c0_20, %c0_21] : memref<1x32x32xbf16, #tpu.memory_space<vmem>>, vector<1x32x32xbf16>
    %39 = vector.shape_cast %38 : vector<1x32x32xbf16> to vector<32x32xbf16>
    %cst_22 = arith.constant dense<0.000000e+00> : vector<8x32xf32>
    %40 = tpu.matmul %30, %39, %cst_22 {dimension_numbers = #tpu.dot_dimension_numbers<[1], [0], [0], [1], [0, 0, 1, 1], [], []>} : vector<8x32xbf16>, vector<32x32xbf16>, vector<8x32xf32> -> vector<8x32xf32>
    %c0_23 = arith.constant 0 : index
    %c0_24 = arith.constant 0 : index
    %c0_25 = arith.constant 0 : index
    %41 = vector.load %arg10[%c0_23, %c0_24, %c0_25] : memref<1x1x32xf32, #tpu.memory_space<vmem>>, vector<1x1x32xf32>
    %42 = vector.shape_cast %41 : vector<1x1x32xf32> to vector<1x32xf32>
    %43 = vector.broadcast %42 : vector<1x32xf32> to vector<8x32xf32>
    %44 = arith.addf %40, %43 : vector<8x32xf32>
    %c0_26 = arith.constant 0 : index
    %c0_27 = arith.constant 0 : index
    %c0_28 = arith.constant 0 : index
    %45 = vector.load %arg11[%c0_26, %c0_27, %c0_28] : memref<1x32x32xbf16, #tpu.memory_space<vmem>>, vector<1x32x32xbf16>
    %46 = vector.shape_cast %45 : vector<1x32x32xbf16> to vector<32x32xbf16>
    %cst_29 = arith.constant dense<0.000000e+00> : vector<8x32xf32>
    %47 = tpu.matmul %30, %46, %cst_29 {dimension_numbers = #tpu.dot_dimension_numbers<[1], [0], [0], [1], [0, 0, 1, 1], [], []>} : vector<8x32xbf16>, vector<32x32xbf16>, vector<8x32xf32> -> vector<8x32xf32>
    %c0_30 = arith.constant 0 : index
    %c0_31 = arith.constant 0 : index
    %c0_32 = arith.constant 0 : index
    %48 = vector.load %arg12[%c0_30, %c0_31, %c0_32] : memref<1x1x32xf32, #tpu.memory_space<vmem>>, vector<1x1x32xf32>
    %49 = vector.shape_cast %48 : vector<1x1x32xf32> to vector<1x32xf32>
    %50 = vector.broadcast %49 : vector<1x32xf32> to vector<8x32xf32>
    %51 = arith.addf %47, %50 : vector<8x32xf32>
    %52 = vector.shape_cast %37 : vector<8x32xf32> to vector<8x4x8xf32>
    %53 = tpu.transpose %52, [1, 0, 2] : vector<8x4x8xf32> -> vector<4x8x8xf32>
    %54 = vector.shape_cast %44 : vector<8x32xf32> to vector<8x4x8xf32>
    %55 = tpu.transpose %54, [1, 0, 2] : vector<8x4x8xf32> -> vector<4x8x8xf32>
    %56 = vector.shape_cast %51 : vector<8x32xf32> to vector<8x4x8xf32>
    %57 = tpu.transpose %56, [1, 0, 2] : vector<8x4x8xf32> -> vector<4x8x8xf32>
    %c0_33 = arith.constant 0 : index
    %c0_34 = arith.constant 0 : index
    %58 = vector.load %arg3[%c0_33, %c0_34] : memref<8x8xf32, #tpu.memory_space<vmem>>, vector<8x8xf32>
    %59 = vector.shape_cast %58 : vector<8x8xf32> to vector<1x8x8xf32>
    %c0_35 = arith.constant 0 : index
    %c0_36 = arith.constant 0 : index
    %60 = vector.load %arg4[%c0_35, %c0_36] : memref<8x8xf32, #tpu.memory_space<vmem>>, vector<8x8xf32>
    %61 = vector.shape_cast %60 : vector<8x8xf32> to vector<1x8x8xf32>
    %62 = vector.broadcast %59 : vector<1x8x8xf32> to vector<4x8x8xf32>
    %63 = arith.mulf %53, %62 : vector<4x8x8xf32>
    %64 = vector.extract_strided_slice %53 {offsets = [0, 0, 4], sizes = [4, 8, 4], strides = [1, 1, 1]} : vector<4x8x8xf32> to vector<4x8x4xf32>
    %cst_37 = arith.constant 0.000000e+00 : f32
    %65 = vector.broadcast %cst_37 : f32 to vector<4x8x4xf32>
    %66 = arith.subf %65, %64 : vector<4x8x4xf32>
    %67 = vector.extract_strided_slice %53 {offsets = [0, 0, 0], sizes = [4, 8, 4], strides = [1, 1, 1]} : vector<4x8x8xf32> to vector<4x8x4xf32>
    %68 = tpu.concatenate %66, %67 in 2 : vector<4x8x4xf32>, vector<4x8x4xf32> -> vector<4x8x8xf32>
    %69 = vector.broadcast %61 : vector<1x8x8xf32> to vector<4x8x8xf32>
    %70 = arith.mulf %68, %69 : vector<4x8x8xf32>
    %71 = arith.addf %63, %70 : vector<4x8x8xf32>
    %72 = vector.broadcast %59 : vector<1x8x8xf32> to vector<4x8x8xf32>
    %73 = arith.mulf %55, %72 : vector<4x8x8xf32>
    %74 = vector.extract_strided_slice %55 {offsets = [0, 0, 4], sizes = [4, 8, 4], strides = [1, 1, 1]} : vector<4x8x8xf32> to vector<4x8x4xf32>
    %cst_38 = arith.constant 0.000000e+00 : f32
    %75 = vector.broadcast %cst_38 : f32 to vector<4x8x4xf32>
    %76 = arith.subf %75, %74 : vector<4x8x4xf32>
    %77 = vector.extract_strided_slice %55 {offsets = [0, 0, 0], sizes = [4, 8, 4], strides = [1, 1, 1]} : vector<4x8x8xf32> to vector<4x8x4xf32>
    %78 = tpu.concatenate %76, %77 in 2 : vector<4x8x4xf32>, vector<4x8x4xf32> -> vector<4x8x8xf32>
    %79 = vector.broadcast %61 : vector<1x8x8xf32> to vector<4x8x8xf32>
    %80 = arith.mulf %78, %79 : vector<4x8x8xf32>
    %81 = arith.addf %73, %80 : vector<4x8x8xf32>
    %82 = arith.truncf %71 : vector<4x8x8xf32> to vector<4x8x8xbf16>
    %83 = arith.truncf %81 : vector<4x8x8xf32> to vector<4x8x8xbf16>
    "tpu.trace_start"() <{level = 10 : i32, message = "hqd,hkd->hqk"}> : () -> ()
    %cst_39 = arith.constant dense<0.000000e+00> : vector<4x8x8xf32>
    %84 = tpu.matmul %82, %83, %cst_39 {dimension_numbers = #tpu.dot_dimension_numbers<[2], [2], [1], [1], [0, 0, 0, 1, 1, 1], [0], [0]>} : vector<4x8x8xbf16>, vector<4x8x8xbf16>, vector<4x8x8xf32> -> vector<4x8x8xf32>
    "tpu.trace_stop"() : () -> ()
    %cst_40 = arith.constant 0.353553385 : f32
    %85 = vector.broadcast %cst_40 : f32 to vector<4x8x8xf32>
    %86 = arith.mulf %84, %85 : vector<4x8x8xf32>
    %cst_41 = arith.constant dense<0xFF800000> : vector<4x8xf32>
    %87 = vector.multi_reduction <maximumf>, %86, %cst_41 [2] : vector<4x8x8xf32> to vector<4x8xf32>
    %88 = vector.shape_cast %87 : vector<4x8xf32> to vector<4x8x1xf32>
    %89 = vector.broadcast %88 : vector<4x8x1xf32> to vector<4x8x8xf32>
    %90 = arith.subf %86, %89 : vector<4x8x8xf32>
    %91 = math.exp %90 : vector<4x8x8xf32>
    %cst_42 = arith.constant dense<0.000000e+00> : vector<4x8xf32>
    %92 = vector.multi_reduction <add>, %91, %cst_42 [2] : vector<4x8x8xf32> to vector<4x8xf32>
    %93 = vector.shape_cast %92 : vector<4x8xf32> to vector<4x8x1xf32>
    %94 = tpu.reciprocal %93 {approx = true} : vector<4x8x1xf32> -> vector<4x8x1xf32>
    %95 = vector.broadcast %94 : vector<4x8x1xf32> to vector<4x8x8xf32>
    %96 = arith.mulf %91, %95 : vector<4x8x8xf32>
    %97 = arith.truncf %96 : vector<4x8x8xf32> to vector<4x8x8xbf16>
    %98 = arith.truncf %57 : vector<4x8x8xf32> to vector<4x8x8xbf16>
    "tpu.trace_start"() <{level = 10 : i32, message = "hqk,hkd->hqd"}> : () -> ()
    %cst_43 = arith.constant dense<0.000000e+00> : vector<4x8x8xf32>
    %99 = tpu.matmul %97, %98, %cst_43 {dimension_numbers = #tpu.dot_dimension_numbers<[2], [1], [1], [2], [0, 0, 0, 1, 1, 2], [0], [0]>} : vector<4x8x8xbf16>, vector<4x8x8xbf16>, vector<4x8x8xf32> -> vector<4x8x8xf32>
    "tpu.trace_stop"() : () -> ()
    %100 = tpu.transpose %99, [1, 0, 2] : vector<4x8x8xf32> -> vector<8x4x8xf32>
    %101 = vector.shape_cast %100 : vector<8x4x8xf32> to vector<8x32xf32>
    %102 = arith.truncf %101 : vector<8x32xf32> to vector<8x32xbf16>
    %c0_44 = arith.constant 0 : index
    %c0_45 = arith.constant 0 : index
    %c0_46 = arith.constant 0 : index
    %103 = vector.load %arg13[%c0_44, %c0_45, %c0_46] : memref<1x32x32xbf16, #tpu.memory_space<vmem>>, vector<1x32x32xbf16>
    %104 = vector.shape_cast %103 : vector<1x32x32xbf16> to vector<32x32xbf16>
    %cst_47 = arith.constant dense<0.000000e+00> : vector<8x32xf32>
    %105 = tpu.matmul %102, %104, %cst_47 {dimension_numbers = #tpu.dot_dimension_numbers<[1], [0], [0], [1], [0, 0, 1, 1], [], []>} : vector<8x32xbf16>, vector<32x32xbf16>, vector<8x32xf32> -> vector<8x32xf32>
    %106 = arith.addf %3, %105 : vector<8x32xf32>
    %c0_48 = arith.constant 0 : index
    %c0_49 = arith.constant 0 : index
    %c0_50 = arith.constant 0 : index
    %107 = vector.load %arg14[%c0_48, %c0_49, %c0_50] : memref<1x1x32xf32, #tpu.memory_space<vmem>>, vector<1x1x32xf32>
    %108 = vector.shape_cast %107 : vector<1x1x32xf32> to vector<1x32xf32>
    %109 = vector.broadcast %108 : vector<1x32xf32> to vector<8x32xf32>
    %110 = arith.addf %106, %109 : vector<8x32xf32>
    %c0_51 = arith.constant 0 : index
    %c0_52 = arith.constant 0 : index
    %c0_53 = arith.constant 0 : index
    %111 = vector.load %arg15[%c0_51, %c0_52, %c0_53] : memref<1x1x32xf32, #tpu.memory_space<vmem>>, vector<1x1x32xf32>
    %112 = vector.shape_cast %111 : vector<1x1x32xf32> to vector<1x32xf32>
    %c0_54 = arith.constant 0 : index
    %c0_55 = arith.constant 0 : index
    %c0_56 = arith.constant 0 : index
    %113 = vector.load %arg16[%c0_54, %c0_55, %c0_56] : memref<1x1x32xf32, #tpu.memory_space<vmem>>, vector<1x1x32xf32>
    %114 = vector.shape_cast %113 : vector<1x1x32xf32> to vector<1x32xf32>
    %cst_57 = arith.constant dense<0.000000e+00> : vector<8xf32>
    %115 = vector.multi_reduction <add>, %110, %cst_57 [1] : vector<8x32xf32> to vector<8xf32>
    %116 = vector.shape_cast %115 : vector<8xf32> to vector<8x1xf32>
    %cst_58 = arith.constant 3.200000e+01 : f32
    %117 = vector.broadcast %cst_58 : f32 to vector<8x1xf32>
    %118 = arith.divf %116, %117 : vector<8x1xf32>
    %119 = arith.mulf %110, %110 : vector<8x32xf32>
    %cst_59 = arith.constant dense<0.000000e+00> : vector<8xf32>
    %120 = vector.multi_reduction <add>, %119, %cst_59 [1] : vector<8x32xf32> to vector<8xf32>
    %121 = vector.shape_cast %120 : vector<8xf32> to vector<8x1xf32>
    %cst_60 = arith.constant 3.200000e+01 : f32
    %122 = vector.broadcast %cst_60 : f32 to vector<8x1xf32>
    %123 = arith.divf %121, %122 : vector<8x1xf32>
    %124 = arith.mulf %118, %118 : vector<8x1xf32>
    %125 = arith.subf %123, %124 : vector<8x1xf32>
    %126 = vector.broadcast %118 : vector<8x1xf32> to vector<8x32xf32>
    %127 = arith.subf %110, %126 : vector<8x32xf32>
    %cst_61 = arith.constant 9.99999974E-6 : f32
    %128 = vector.broadcast %cst_61 : f32 to vector<8x1xf32>
    %129 = arith.addf %125, %128 : vector<8x1xf32>
    %130 = math.rsqrt %129 : vector<8x1xf32>
    %131 = vector.broadcast %130 : vector<8x1xf32> to vector<8x32xf32>
    %132 = arith.mulf %127, %131 : vector<8x32xf32>
    %133 = vector.broadcast %112 : vector<1x32xf32> to vector<8x32xf32>
    %134 = arith.mulf %132, %133 : vector<8x32xf32>
    %135 = vector.broadcast %114 : vector<1x32xf32> to vector<8x32xf32>
    %136 = arith.addf %134, %135 : vector<8x32xf32>
    %137 = arith.truncf %136 : vector<8x32xf32> to vector<8x32xbf16>
    %c0_62 = arith.constant 0 : index
    %c0_63 = arith.constant 0 : index
    %c0_64 = arith.constant 0 : index
    %138 = vector.load %arg17[%c0_62, %c0_63, %c0_64] : memref<1x32x64xbf16, #tpu.memory_space<vmem>>, vector<1x32x64xbf16>
    %139 = vector.shape_cast %138 : vector<1x32x64xbf16> to vector<32x64xbf16>
    %cst_65 = arith.constant dense<0.000000e+00> : vector<8x64xf32>
    %140 = tpu.matmul %137, %139, %cst_65 {dimension_numbers = #tpu.dot_dimension_numbers<[1], [0], [0], [1], [0, 0, 1, 1], [], []>} : vector<8x32xbf16>, vector<32x64xbf16>, vector<8x64xf32> -> vector<8x64xf32>
    %c0_66 = arith.constant 0 : index
    %c0_67 = arith.constant 0 : index
    %c0_68 = arith.constant 0 : index
    %141 = vector.load %arg18[%c0_66, %c0_67, %c0_68] : memref<1x1x64xf32, #tpu.memory_space<vmem>>, vector<1x1x64xf32>
    %142 = vector.shape_cast %141 : vector<1x1x64xf32> to vector<1x64xf32>
    %143 = vector.broadcast %142 : vector<1x64xf32> to vector<8x64xf32>
    %144 = arith.addf %140, %143 : vector<8x64xf32>
    %cst_69 = arith.constant 5.000000e-01 : f32
    %145 = vector.broadcast %cst_69 : f32 to vector<8x64xf32>
    %146 = arith.mulf %145, %144 : vector<8x64xf32>
    %cst_70 = arith.constant 0.707106769 : f32
    %147 = vector.broadcast %cst_70 : f32 to vector<8x64xf32>
    %148 = arith.mulf %144, %147 : vector<8x64xf32>
    %cst_71 = arith.constant 0.000000e+00 : f32
    %149 = vector.broadcast %cst_71 : f32 to vector<8x64xf32>
    %150 = arith.cmpf oge, %148, %149 : vector<8x64xf32>
    %cst_72 = arith.constant 1.000000e+00 : f32
    %cst_73 = arith.constant -1.000000e+00 : f32
    %151 = vector.broadcast %cst_72 : f32 to vector<8x64xf32>
    %152 = vector.broadcast %cst_73 : f32 to vector<8x64xf32>
    %153 = arith.select %150, %151, %152 : vector<8x64xi1>, vector<8x64xf32>
    %154 = math.absf %148 : vector<8x64xf32>
    %cst_74 = arith.constant 0.327591091 : f32
    %155 = vector.broadcast %cst_74 : f32 to vector<8x64xf32>
    %156 = arith.mulf %155, %154 : vector<8x64xf32>
    %cst_75 = arith.constant 1.000000e+00 : f32
    %157 = vector.broadcast %cst_75 : f32 to vector<8x64xf32>
    %158 = arith.addf %157, %156 : vector<8x64xf32>
    %cst_76 = arith.constant 1.000000e+00 : f32
    %159 = vector.broadcast %cst_76 : f32 to vector<8x64xf32>
    %160 = arith.divf %159, %158 : vector<8x64xf32>
    %cst_77 = arith.constant 1.06140542 : f32
    %161 = vector.broadcast %cst_77 : f32 to vector<8x64xf32>
    %162 = arith.mulf %161, %160 : vector<8x64xf32>
    %cst_78 = arith.constant -1.45315206 : f32
    %163 = vector.broadcast %cst_78 : f32 to vector<8x64xf32>
    %164 = arith.addf %162, %163 : vector<8x64xf32>
    %165 = arith.mulf %164, %160 : vector<8x64xf32>
    %cst_79 = arith.constant 1.42141378 : f32
    %166 = vector.broadcast %cst_79 : f32 to vector<8x64xf32>
    %167 = arith.addf %165, %166 : vector<8x64xf32>
    %168 = arith.mulf %167, %160 : vector<8x64xf32>
    %cst_80 = arith.constant -0.284496725 : f32
    %169 = vector.broadcast %cst_80 : f32 to vector<8x64xf32>
    %170 = arith.addf %168, %169 : vector<8x64xf32>
    %171 = arith.mulf %170, %160 : vector<8x64xf32>
    %cst_81 = arith.constant 0.254829586 : f32
    %172 = vector.broadcast %cst_81 : f32 to vector<8x64xf32>
    %173 = arith.addf %171, %172 : vector<8x64xf32>
    %174 = arith.mulf %173, %160 : vector<8x64xf32>
    %cst_82 = arith.constant 0.000000e+00 : f32
    %175 = vector.broadcast %cst_82 : f32 to vector<8x64xf32>
    %176 = arith.subf %175, %154 : vector<8x64xf32>
    %177 = arith.mulf %176, %154 : vector<8x64xf32>
    %178 = math.exp %177 : vector<8x64xf32>
    %179 = arith.mulf %174, %178 : vector<8x64xf32>
    %cst_83 = arith.constant 1.000000e+00 : f32
    %180 = vector.broadcast %cst_83 : f32 to vector<8x64xf32>
    %181 = arith.subf %180, %179 : vector<8x64xf32>
    %182 = arith.mulf %153, %181 : vector<8x64xf32>
    %cst_84 = arith.constant 1.000000e+00 : f32
    %183 = vector.broadcast %cst_84 : f32 to vector<8x64xf32>
    %184 = arith.addf %183, %182 : vector<8x64xf32>
    %185 = arith.mulf %146, %184 : vector<8x64xf32>
    %186 = arith.truncf %185 : vector<8x64xf32> to vector<8x64xbf16>
    %c0_85 = arith.constant 0 : index
    %c0_86 = arith.constant 0 : index
    %c0_87 = arith.constant 0 : index
    %187 = vector.load %arg19[%c0_85, %c0_86, %c0_87] : memref<1x64x32xbf16, #tpu.memory_space<vmem>>, vector<1x64x32xbf16>
    %188 = vector.shape_cast %187 : vector<1x64x32xbf16> to vector<64x32xbf16>
    %cst_88 = arith.constant dense<0.000000e+00> : vector<8x32xf32>
    %189 = tpu.matmul %186, %188, %cst_88 {dimension_numbers = #tpu.dot_dimension_numbers<[1], [0], [0], [1], [0, 0, 1, 1], [], []>} : vector<8x64xbf16>, vector<64x32xbf16>, vector<8x32xf32> -> vector<8x32xf32>
    %c0_89 = arith.constant 0 : index
    %c0_90 = arith.constant 0 : index
    %c0_91 = arith.constant 0 : index
    %190 = vector.load %arg20[%c0_89, %c0_90, %c0_91] : memref<1x1x32xf32, #tpu.memory_space<vmem>>, vector<1x1x32xf32>
    %191 = vector.shape_cast %190 : vector<1x1x32xf32> to vector<1x32xf32>
    %192 = vector.broadcast %191 : vector<1x32xf32> to vector<8x32xf32>
    %193 = arith.addf %189, %192 : vector<8x32xf32>
    %194 = arith.addf %110, %193 : vector<8x32xf32>
    %c0_92 = arith.constant 0 : index
    %c0_93 = arith.constant 0 : index
    %195 = vector.load %arg26[%c0_92, %c0_93] : memref<8x32xf32, #tpu.memory_space<vmem>>, vector<8x32xf32>
    tpu.vector_store %arg26[%c0_92, %c0_93], %194 {strides = array<i32>} : memref<8x32xf32, #tpu.memory_space<vmem>>, vector<8x32xf32>,
    %c1_i32 = arith.constant 1 : i32
    %196 = arith.cmpi eq, %arg1, %c1_i32 : i32
    %197 = arith.extui %196 : i1 to i32
    %c0_i32_94 = arith.constant 0 : i32
    %198 = arith.cmpi ne, %197, %c0_i32_94 : i32
    scf.if %198 {
      %199 = vector.extract_strided_slice %194 {offsets = [1, 0], sizes = [6, 32], strides = [1, 1]} : vector<8x32xf32> to vector<6x32xf32>
      %c0_95 = arith.constant 0 : index
      %c0_96 = arith.constant 0 : index
      %200 = vector.load %arg21[%c0_95, %c0_96] : memref<1x32xf32, #tpu.memory_space<vmem>>, vector<1x32xf32>
      %c0_97 = arith.constant 0 : index
      %c0_98 = arith.constant 0 : index
      %201 = vector.load %arg22[%c0_97, %c0_98] : memref<1x32xf32, #tpu.memory_space<vmem>>, vector<1x32xf32>
      %cst_99 = arith.constant dense<0.000000e+00> : vector<6xf32>
      %202 = vector.multi_reduction <add>, %199, %cst_99 [1] : vector<6x32xf32> to vector<6xf32>
      %203 = vector.shape_cast %202 : vector<6xf32> to vector<6x1xf32>
      %cst_100 = arith.constant 3.200000e+01 : f32
      %204 = vector.broadcast %cst_100 : f32 to vector<6x1xf32>
      %205 = arith.divf %203, %204 : vector<6x1xf32>
      %206 = arith.mulf %199, %199 : vector<6x32xf32>
      %cst_101 = arith.constant dense<0.000000e+00> : vector<6xf32>
      %207 = vector.multi_reduction <add>, %206, %cst_101 [1] : vector<6x32xf32> to vector<6xf32>
      %208 = vector.shape_cast %207 : vector<6xf32> to vector<6x1xf32>
      %cst_102 = arith.constant 3.200000e+01 : f32
      %209 = vector.broadcast %cst_102 : f32 to vector<6x1xf32>
      %210 = arith.divf %208, %209 : vector<6x1xf32>
      %211 = arith.mulf %205, %205 : vector<6x1xf32>
      %212 = arith.subf %210, %211 : vector<6x1xf32>
      %213 = vector.broadcast %205 : vector<6x1xf32> to vector<6x32xf32>
      %214 = arith.subf %199, %213 : vector<6x32xf32>
      %cst_103 = arith.constant 9.99999974E-6 : f32
      %215 = vector.broadcast %cst_103 : f32 to vector<6x1xf32>
      %216 = arith.addf %212, %215 : vector<6x1xf32>
      %217 = math.rsqrt %216 : vector<6x1xf32>
      %218 = vector.broadcast %217 : vector<6x1xf32> to vector<6x32xf32>
      %219 = arith.mulf %214, %218 : vector<6x32xf32>
      %220 = vector.broadcast %200 : vector<1x32xf32> to vector<6x32xf32>
      %221 = arith.mulf %219, %220 : vector<6x32xf32>
      %222 = vector.broadcast %201 : vector<1x32xf32> to vector<6x32xf32>
      %223 = arith.addf %221, %222 : vector<6x32xf32>
      %224 = arith.truncf %223 : vector<6x32xf32> to vector<6x32xbf16>
      %c0_104 = arith.constant 0 : index
      %c0_105 = arith.constant 0 : index
      %225 = vector.load %arg23[%c0_104, %c0_105] : memref<32x128xbf16, #tpu.memory_space<vmem>>, vector<32x128xbf16>
      %cst_106 = arith.constant dense<0.000000e+00> : vector<6x128xf32>
      %226 = tpu.matmul %224, %225, %cst_106 {dimension_numbers = #tpu.dot_dimension_numbers<[1], [0], [0], [1], [0, 0, 1, 1], [], []>} : vector<6x32xbf16>, vector<32x128xbf16>, vector<6x128xf32> -> vector<6x128xf32>
      %c0_107 = arith.constant 0 : index
      %c0_108 = arith.constant 0 : index
      %227 = vector.load %arg24[%c0_107, %c0_108] : memref<1x128xf32, #tpu.memory_space<vmem>>, vector<1x128xf32>
      %228 = vector.broadcast %227 : vector<1x128xf32> to vector<6x128xf32>
      %229 = arith.addf %226, %228 : vector<6x128xf32>
      %c0_109 = arith.constant 0 : index
      %c0_110 = arith.constant 0 : index
      %c0_111 = arith.constant 0 : index
      %230 = vector.load %arg25[%c0_109, %c0_110, %c0_111] : memref<1x6x128xf32, #tpu.memory_space<vmem>>, vector<1x6x128xf32>
      %231 = vector.shape_cast %230 : vector<1x6x128xf32> to vector<6x128xf32>
      %232 = vector.shape_cast %229 : vector<6x128xf32> to vector<1x6x128xf32>
      tpu.vector_store %arg25[%c0_109, %c0_110, %c0_111], %232 {strides = array<i32>} : memref<1x6x128xf32, #tpu.memory_space<vmem>>, vector<1x6x128xf32>,
    } else {
    }
    return
  }
  func.func @transform_0(%arg0: i32, %arg1: i32) -> (i32, i32, i32) {
    %c0_i32 = arith.constant 0 : i32
    %c0_i32_0 = arith.constant 0 : i32
    %c0_i32_1 = arith.constant 0 : i32
    return %arg0, %c0_i32, %c0_i32_0 : i32, i32, i32
  }
  func.func @transform_1(%arg0: i32, %arg1: i32) -> (i32, i32) {
    %c0_i32 = arith.constant 0 : i32
    %c0_i32_0 = arith.constant 0 : i32
    %c0_i32_1 = arith.constant 0 : i32
    return %c0_i32, %c0_i32_0 : i32, i32
  }
  func.func @transform_2(%arg0: i32, %arg1: i32) -> (i32, i32) {
    %c0_i32 = arith.constant 0 : i32
    %c0_i32_0 = arith.constant 0 : i32
    %c0_i32_1 = arith.constant 0 : i32
    return %c0_i32, %c0_i32_0 : i32, i32
  }
  func.func @transform_3(%arg0: i32, %arg1: i32) -> (i32, i32, i32) {
    %c0_i32 = arith.constant 0 : i32
    %c0_i32_0 = arith.constant 0 : i32
    %c0_i32_1 = arith.constant 0 : i32
    return %arg1, %c0_i32, %c0_i32_0 : i32, i32, i32
  }
  func.func @transform_4(%arg0: i32, %arg1: i32) -> (i32, i32, i32) {
    %c0_i32 = arith.constant 0 : i32
    %c0_i32_0 = arith.constant 0 : i32
    %c0_i32_1 = arith.constant 0 : i32
    return %arg1, %c0_i32, %c0_i32_0 : i32, i32, i32
  }
  func.func @transform_5(%arg0: i32, %arg1: i32) -> (i32, i32, i32) {
    %c0_i32 = arith.constant 0 : i32
    %c0_i32_0 = arith.constant 0 : i32
    %c0_i32_1 = arith.constant 0 : i32
    return %arg1, %c0_i32, %c0_i32_0 : i32, i32, i32
  }
  func.func @transform_6(%arg0: i32, %arg1: i32) -> (i32, i32, i32) {
    %c0_i32 = arith.constant 0 : i32
    %c0_i32_0 = arith.constant 0 : i32
    %c0_i32_1 = arith.constant 0 : i32
    return %arg1, %c0_i32, %c0_i32_0 : i32, i32, i32
  }
  func.func @transform_7(%arg0: i32, %arg1: i32) -> (i32, i32, i32) {
    %c0_i32 = arith.constant 0 : i32
    %c0_i32_0 = arith.constant 0 : i32
    %c0_i32_1 = arith.constant 0 : i32
    return %arg1, %c0_i32, %c0_i32_0 : i32, i32, i32
  }
  func.func @transform_8(%arg0: i32, %arg1: i32) -> (i32, i32, i32) {
    %c0_i32 = arith.constant 0 : i32
    %c0_i32_0 = arith.constant 0 : i32
    %c0_i32_1 = arith.constant 0 : i32
    return %arg1, %c0_i32, %c0_i32_0 : i32, i32, i32
  }
  func.func @transform_9(%arg0: i32, %arg1: i32) -> (i32, i32, i32) {
    %c0_i32 = arith.constant 0 : i32
    %c0_i32_0 = arith.constant 0 : i32
    %c0_i32_1 = arith.constant 0 : i32
    return %arg1, %c0_i32, %c0_i32_0 : i32, i32, i32
  }
  func.func @transform_10(%arg0: i32, %arg1: i32) -> (i32, i32, i32) {
    %c0_i32 = arith.constant 0 : i32
    %c0_i32_0 = arith.constant 0 : i32
    %c0_i32_1 = arith.constant 0 : i32
    return %arg1, %c0_i32, %c0_i32_0 : i32, i32, i32
  }
  func.func @transform_11(%arg0: i32, %arg1: i32) -> (i32, i32, i32) {
    %c0_i32 = arith.constant 0 : i32
    %c0_i32_0 = arith.constant 0 : i32
    %c0_i32_1 = arith.constant 0 : i32
    return %arg1, %c0_i32, %c0_i32_0 : i32, i32, i32
  }
  func.func @transform_12(%arg0: i32, %arg1: i32) -> (i32, i32, i32) {
    %c0_i32 = arith.constant 0 : i32
    %c0_i32_0 = arith.constant 0 : i32
    %c0_i32_1 = arith.constant 0 : i32
    return %arg1, %c0_i32, %c0_i32_0 : i32, i32, i32
  }
  func.func @transform_13(%arg0: i32, %arg1: i32) -> (i32, i32, i32) {
    %c0_i32 = arith.constant 0 : i32
    %c0_i32_0 = arith.constant 0 : i32
    %c0_i32_1 = arith.constant 0 : i32
    return %arg1, %c0_i32, %c0_i32_0 : i32, i32, i32
  }
  func.func @transform_14(%arg0: i32, %arg1: i32) -> (i32, i32, i32) {
    %c0_i32 = arith.constant 0 : i32
    %c0_i32_0 = arith.constant 0 : i32
    %c0_i32_1 = arith.constant 0 : i32
    return %arg1, %c0_i32, %c0_i32_0 : i32, i32, i32
  }
  func.func @transform_15(%arg0: i32, %arg1: i32) -> (i32, i32, i32) {
    %c0_i32 = arith.constant 0 : i32
    %c0_i32_0 = arith.constant 0 : i32
    %c0_i32_1 = arith.constant 0 : i32
    return %arg1, %c0_i32, %c0_i32_0 : i32, i32, i32
  }
  func.func @transform_16(%arg0: i32, %arg1: i32) -> (i32, i32, i32) {
    %c0_i32 = arith.constant 0 : i32
    %c0_i32_0 = arith.constant 0 : i32
    %c0_i32_1 = arith.constant 0 : i32
    return %arg1, %c0_i32, %c0_i32_0 : i32, i32, i32
  }
  func.func @transform_17(%arg0: i32, %arg1: i32) -> (i32, i32, i32) {
    %c0_i32 = arith.constant 0 : i32
    %c0_i32_0 = arith.constant 0 : i32
    %c0_i32_1 = arith.constant 0 : i32
    return %arg1, %c0_i32, %c0_i32_0 : i32, i32, i32
  }
  func.func @transform_18(%arg0: i32, %arg1: i32) -> (i32, i32, i32) {
    %c0_i32 = arith.constant 0 : i32
    %c0_i32_0 = arith.constant 0 : i32
    %c0_i32_1 = arith.constant 0 : i32
    return %arg1, %c0_i32, %c0_i32_0 : i32, i32, i32
  }
  func.func @transform_19(%arg0: i32, %arg1: i32) -> (i32, i32) {
    %c0_i32 = arith.constant 0 : i32
    %c0_i32_0 = arith.constant 0 : i32
    %c0_i32_1 = arith.constant 0 : i32
    return %c0_i32, %c0_i32_0 : i32, i32
  }
  func.func @transform_20(%arg0: i32, %arg1: i32) -> (i32, i32) {
    %c0_i32 = arith.constant 0 : i32
    %c0_i32_0 = arith.constant 0 : i32
    %c0_i32_1 = arith.constant 0 : i32
    return %c0_i32, %c0_i32_0 : i32, i32
  }
  func.func @transform_21(%arg0: i32, %arg1: i32) -> (i32, i32) {
    %c0_i32 = arith.constant 0 : i32
    %c0_i32_0 = arith.constant 0 : i32
    %c0_i32_1 = arith.constant 0 : i32
    return %c0_i32, %c0_i32_0 : i32, i32
  }
  func.func @transform_22(%arg0: i32, %arg1: i32) -> (i32, i32) {
    %c0_i32 = arith.constant 0 : i32
    %c0_i32_0 = arith.constant 0 : i32
    %c0_i32_1 = arith.constant 0 : i32
    return %c0_i32, %c0_i32_0 : i32, i32
  }
  func.func @transform_23(%arg0: i32, %arg1: i32) -> (i32, i32, i32) {
    %c0_i32 = arith.constant 0 : i32
    %c0_i32_0 = arith.constant 0 : i32
    %c0_i32_1 = arith.constant 0 : i32
    return %arg0, %c0_i32, %c0_i32_0 : i32, i32, i32
  }
}

</mosaic_0001>

<llo_original>
// kernel: esm1v_token_classification_forward.1
$region0: #{esm1v_token_classification_forward.1}
  #allocation0 [shape = 'u32[]', space=smem, size = 0x4, offset = 0x4, fixed_abs, tag = 'smem constant byte address 0x4 - core index']
  #allocation1 [shape = 'u32[144,128]{1,0:T(1,128)}', space=vmem, size = 0x12000, scoped, tag = 'internal scratch']
  #allocation2 [shape = 'f32[8,32]{1,0:T(8,128)}', space=vmem, size = 0x1000, scoped, tag = 'scratch operand']
  %s0 = inlined_call_operand.vmem [shape: f32[2,8,32], index: 0, kind: input, shape index: {}]
  %s1 = inlined_call_operand.vmem [shape: f32[8,8], index: 1, kind: input, shape index: {}]
  %s2 = inlined_call_operand.vmem [shape: f32[8,8], index: 2, kind: input, shape index: {}]
  %s3 = inlined_call_operand.vmem [shape: f32[2,1,32], index: 3, kind: input, shape index: {}]
  %s4 = inlined_call_operand.vmem [shape: f32[2,1,32], index: 4, kind: input, shape index: {}]
  %s5 = inlined_call_operand.vmem [shape: bf16[2,32,32], index: 5, kind: input, shape index: {}]
  %s6 = inlined_call_operand.vmem [shape: f32[2,1,32], index: 6, kind: input, shape index: {}]
  %s7 = inlined_call_operand.vmem [shape: bf16[2,32,32], index: 7, kind: input, shape index: {}]
  %s8 = inlined_call_operand.vmem [shape: f32[2,1,32], index: 8, kind: input, shape index: {}]
  %s9 = inlined_call_operand.vmem [shape: bf16[2,32,32], index: 9, kind: input, shape index: {}]
  %s10 = inlined_call_operand.vmem [shape: f32[2,1,32], index: 10, kind: input, shape index: {}]
  %s11 = inlined_call_operand.vmem [shape: bf16[2,32,32], index: 11, kind: input, shape index: {}]
  %s12 = inlined_call_operand.vmem [shape: f32[2,1,32], index: 12, kind: input, shape index: {}]
  %s13 = inlined_call_operand.vmem [shape: f32[2,1,32], index: 13, kind: input, shape index: {}]
  %s14 = inlined_call_operand.vmem [shape: f32[2,1,32], index: 14, kind: input, shape index: {}]
  %s15 = inlined_call_operand.vmem [shape: bf16[2,32,64], index: 15, kind: input, shape index: {}]
  %s16 = inlined_call_operand.vmem [shape: f32[2,1,64], index: 16, kind: input, shape index: {}]
  %s17 = inlined_call_operand.vmem [shape: bf16[2,64,32], index: 17, kind: input, shape index: {}]
  %s18 = inlined_call_operand.vmem [shape: f32[2,1,32], index: 18, kind: input, shape index: {}]
  %s19 = inlined_call_operand.vmem [shape: f32[1,32], index: 19, kind: input, shape index: {}]
  %s20 = inlined_call_operand.vmem [shape: f32[1,32], index: 20, kind: input, shape index: {}]
  %s21 = inlined_call_operand.vmem [shape: bf16[32,128], index: 21, kind: input, shape index: {}]
  %s22 = inlined_call_operand.vmem [shape: f32[1,128], index: 22, kind: input, shape index: {}]
  %s23 = inlined_call_operand.vmem [shape: f32[2,6,128], index: 23, kind: output, shape index: {}]
  %s24 = sld [smem:[#allocation0]]
  $region133: #{esm1v_token_classification_forward.1} parent=0
    _
  %s26 = ssub.s32 1, %s24
  %s27 = scalar_select 0, %s26, %s24
  loop: start=0, step=1, limit=6
  $region2: #{esm1v_token_classification_forward.1} parent=0 // loop_pre_header
    _
  $region3: #{esm1v_token_classification_forward.1} parent=0 // loop_header
    %s29 = sphi 0, %s33
    %p30 = scmp.ge.s32.totalorder %s29, 6
    %s36 = sphi 0, %s48
    %s37 = sphi 0, %s44
    %s38 = sphi 0, %s36
    %s39 = sphi 0, %s37
    %s40 = sphi 0, %s38
    %s41 = sphi 0, %s39
    %s51 = sphi 0, %s53
    %s54 = sphi 0, %s51
    %s55 = sphi 0, %s54
    %s71 = sphi 0, %s55
    %s75 = sphi 0, %s75
    %s77 = sphi 0, %s75
    %s78 = sphi 0, %s77
    %s92 = sphi 0, %s78
    %s96 = sphi 0, %s96
    %s98 = sphi 0, %s96
    %s99 = sphi 0, %s98
    %s113 = sphi 0, %s99
    %s119 = sphi 0, %s121
    %s122 = sphi 0, %s119
    %s123 = sphi 0, %s122
    %s139 = sphi 0, %s123
    %s145 = sphi 0, %s147
    %s148 = sphi 0, %s145
    %s149 = sphi 0, %s148
    %s165 = sphi 0, %s149
    %s171 = sphi 0, %s173
    %s174 = sphi 0, %s171
    %s175 = sphi 0, %s174
    %s191 = sphi 0, %s175
    %s197 = sphi 0, %s199
    %s200 = sphi 0, %s197
    %s201 = sphi 0, %s200
    %s217 = sphi 0, %s201
    %s223 = sphi 0, %s225
    %s226 = sphi 0, %s223
    %s227 = sphi 0, %s226
    %s243 = sphi 0, %s227
    %s249 = sphi 0, %s251
    %s252 = sphi 0, %s249
    %s253 = sphi 0, %s252
    %s269 = sphi 0, %s253
    %s275 = sphi 0, %s277
    %s278 = sphi 0, %s275
    %s279 = sphi 0, %s278
    %s295 = sphi 0, %s279
    %s301 = sphi 0, %s303
    %s304 = sphi 0, %s301
    %s305 = sphi 0, %s304
    %s321 = sphi 0, %s305
    %s327 = sphi 0, %s329
    %s330 = sphi 0, %s327
    %s331 = sphi 0, %s330
    %s347 = sphi 0, %s331
    %s353 = sphi 0, %s355
    %s356 = sphi 0, %s353
    %s357 = sphi 0, %s356
    %s373 = sphi 0, %s357
    %s379 = sphi 0, %s381
    %s382 = sphi 0, %s379
    %s383 = sphi 0, %s382
    %s399 = sphi 0, %s383
    %s405 = sphi 0, %s407
    %s408 = sphi 0, %s405
    %s409 = sphi 0, %s408
    %s425 = sphi 0, %s409
    %s431 = sphi 0, %s433
    %s434 = sphi 0, %s431
    %s435 = sphi 0, %s434
    %s451 = sphi 0, %s435
    %s457 = sphi 0, %s459
    %s460 = sphi 0, %s457
    %s461 = sphi 0, %s460
    %s477 = sphi 0, %s461
    %s483 = sphi 0, %s485
    %s486 = sphi 0, %s483
    %s487 = sphi 0, %s486
    %s503 = sphi 0, %s487
    %s509 = sphi 0, %s511
    %s512 = sphi 0, %s509
    %s513 = sphi 0, %s512
    %s529 = sphi 0, %s513
    %s533 = sphi 0, %s533
    %s535 = sphi 0, %s533
    %s536 = sphi 0, %s535
    %s550 = sphi 0, %s536
    %s554 = sphi 0, %s554
    %s556 = sphi 0, %s554
    %s557 = sphi 0, %s556
    %s571 = sphi 0, %s557
    %s575 = sphi 0, %s575
    %s577 = sphi 0, %s575
    %s578 = sphi 0, %s577
    %s592 = sphi 0, %s578
    %s596 = sphi 0, %s596
    %s598 = sphi 0, %s596
    %s599 = sphi 0, %s598
    %s613 = sphi 0, %s599
    %s619 = sphi 0, %s621
    %s622 = sphi 0, %s619
    %s623 = sphi 0, %s622
    %s639 = sphi 0, %s623
  $region4: #{esm1v_token_classification_forward.1} parent=0 // loop_header_branch
    %32 = sbr.rel (%p30) target = $region8
  $region5: #{esm1v_token_classification_forward.1} parent=0 // loop_body
    %s34 = ssub.s32 %s29, 1
    %s35 = ssub.s32 %s29, 2
    %s42 = sadd.s32 1, %s37
    %p43 = scmp.ge.s32.totalorder %s42, 2
    %s44 = scalar_select %p43, 0, %s42
    %s45 = sadd.s32 1, %s36
    %s46 = scalar_select %p43, %s45, %s36
    %p47 = scmp.ge.s32.totalorder %s46, 2
    %s48 = scalar_select %p47, 0, %s46
    %s49 = ssub.s32 %s36, %s48
    %p50 = scmp.eq.s32.totalorder %s49, 0
    %s52 = sadd.s32 %s51, 1
    %s53 = scalar_select %p50, %s51, %s52
    %p56 = pneg %p50
    %p57 = scmp.eq.s32.totalorder %s29, 3
    %p58 = por %p56, %p57
    %p59 = scmp.ne.s32.totalorder %s51, %s54
    %p60 = scmp.eq.s32.totalorder %s29, 0
    %p61 = por %p59, %p60
    %p62 = scmp.ne.s32.totalorder %s51, %s54
    %p63 = scmp.eq.s32.totalorder %s34, 3
    %p64 = por %p62, %p63
    %p65 = scmp.ne.s32.totalorder %s54, %s55
    %p66 = scmp.eq.s32.totalorder %s34, 0
    %p67 = por %p65, %p66
    %p68 = scmp.ne.s32.totalorder %s54, %s55
    %p69 = scmp.eq.s32.totalorder %s35, 3
    %p70 = por %p68, %p69
    %p72 = scmp.ne.s32.totalorder %s55, %s71
    %p73 = scmp.eq.s32.totalorder %s35, 0
    %p74 = por %p72, %p73
    %s76 = sadd.s32 %s75, 1
    %p79 = scmp.eq.s32.totalorder %s29, 3
    %p80 = scmp.ne.s32.totalorder %s75, %s77
    %p81 = scmp.eq.s32.totalorder %s29, 0
    %p82 = por %p80, %p81
    %p83 = scmp.ne.s32.totalorder %s75, %s77
    %p84 = scmp.eq.s32.totalorder %s34, 3
    %p85 = por %p83, %p84
    %p86 = scmp.ne.s32.totalorder %s77, %s78
    %p87 = scmp.eq.s32.totalorder %s34, 0
    %p88 = por %p86, %p87
    %p89 = scmp.ne.s32.totalorder %s77, %s78
    %p90 = scmp.eq.s32.totalorder %s35, 3
    %p91 = por %p89, %p90
    %p93 = scmp.ne.s32.totalorder %s78, %s92
    %p94 = scmp.eq.s32.totalorder %s35, 0
    %p95 = por %p93, %p94
    %s97 = sadd.s32 %s96, 1
    %p100 = scmp.eq.s32.totalorder %s29, 3
    %p101 = scmp.ne.s32.totalorder %s96, %s98
    %p102 = scmp.eq.s32.totalorder %s29, 0
    %p103 = por %p101, %p102
    %p104 = scmp.ne.s32.totalorder %s96, %s98
    %p105 = scmp.eq.s32.totalorder %s34, 3
    %p106 = por %p104, %p105
    %p107 = scmp.ne.s32.totalorder %s98, %s99
    %p108 = scmp.eq.s32.totalorder %s34, 0
    %p109 = por %p107, %p108
    %p110 = scmp.ne.s32.totalorder %s98, %s99
    %p111 = scmp.eq.s32.totalorder %s35, 3
    %p112 = por %p110, %p111
    %p114 = scmp.ne.s32.totalorder %s99, %s113
    %p115 = scmp.eq.s32.totalorder %s35, 0
    %p116 = por %p114, %p115
    %s117 = ssub.s32 %s37, %s44
    %p118 = scmp.eq.s32.totalorder %s117, 0
    %s120 = sadd.s32 %s119, 1
    %s121 = scalar_select %p118, %s119, %s120
    %p124 = pneg %p118
    %p125 = scmp.eq.s32.totalorder %s29, 3
    %p126 = por %p124, %p125
    %p127 = scmp.ne.s32.totalorder %s119, %s122
    %p128 = scmp.eq.s32.totalorder %s29, 0
    %p129 = por %p127, %p128
    %p130 = scmp.ne.s32.totalorder %s119, %s122
    %p131 = scmp.eq.s32.totalorder %s34, 3
    %p132 = por %p130, %p131
    %p133 = scmp.ne.s32.totalorder %s122, %s123
    %p134 = scmp.eq.s32.totalorder %s34, 0
    %p135 = por %p133, %p134
    %p136 = scmp.ne.s32.totalorder %s122, %s123
    %p137 = scmp.eq.s32.totalorder %s35, 3
    %p138 = por %p136, %p137
    %p140 = scmp.ne.s32.totalorder %s123, %s139
    %p141 = scmp.eq.s32.totalorder %s35, 0
    %p142 = por %p140, %p141
    %s143 = ssub.s32 %s37, %s44
    %p144 = scmp.eq.s32.totalorder %s143, 0
    %s146 = sadd.s32 %s145, 1
    %s147 = scalar_select %p144, %s145, %s146
    %p150 = pneg %p144
    %p151 = scmp.eq.s32.totalorder %s29, 3
    %p152 = por %p150, %p151
    %p153 = scmp.ne.s32.totalorder %s145, %s148
    %p154 = scmp.eq.s32.totalorder %s29, 0
    %p155 = por %p153, %p154
    %p156 = scmp.ne.s32.totalorder %s145, %s148
    %p157 = scmp.eq.s32.totalorder %s34, 3
    %p158 = por %p156, %p157
    %p159 = scmp.ne.s32.totalorder %s148, %s149
    %p160 = scmp.eq.s32.totalorder %s34, 0
    %p161 = por %p159, %p160
    %p162 = scmp.ne.s32.totalorder %s148, %s149
    %p163 = scmp.eq.s32.totalorder %s35, 3
    %p164 = por %p162, %p163
    %p166 = scmp.ne.s32.totalorder %s149, %s165
    %p167 = scmp.eq.s32.totalorder %s35, 0
    %p168 = por %p166, %p167
    %s169 = ssub.s32 %s37, %s44
    %p170 = scmp.eq.s32.totalorder %s169, 0
    %s172 = sadd.s32 %s171, 1
    %s173 = scalar_select %p170, %s171, %s172
    %p176 = pneg %p170
    %p177 = scmp.eq.s32.totalorder %s29, 3
    %p178 = por %p176, %p177
    %p179 = scmp.ne.s32.totalorder %s171, %s174
    %p180 = scmp.eq.s32.totalorder %s29, 0
    %p181 = por %p179, %p180
    %p182 = scmp.ne.s32.totalorder %s171, %s174
    %p183 = scmp.eq.s32.totalorder %s34, 3
    %p184 = por %p182, %p183
    %p185 = scmp.ne.s32.totalorder %s174, %s175
    %p186 = scmp.eq.s32.totalorder %s34, 0
    %p187 = por %p185, %p186
    %p188 = scmp.ne.s32.totalorder %s174, %s175
    %p189 = scmp.eq.s32.totalorder %s35, 3
    %p190 = por %p188, %p189
    %p192 = scmp.ne.s32.totalorder %s175, %s191
    %p193 = scmp.eq.s32.totalorder %s35, 0
    %p194 = por %p192, %p193
    %s195 = ssub.s32 %s37, %s44
    %p196 = scmp.eq.s32.totalorder %s195, 0
    %s198 = sadd.s32 %s197, 1
    %s199 = scalar_select %p196, %s197, %s198
    %p202 = pneg %p196
    %p203 = scmp.eq.s32.totalorder %s29, 3
    %p204 = por %p202, %p203
    %p205 = scmp.ne.s32.totalorder %s197, %s200
    %p206 = scmp.eq.s32.totalorder %s29, 0
    %p207 = por %p205, %p206
    %p208 = scmp.ne.s32.totalorder %s197, %s200
    %p209 = scmp.eq.s32.totalorder %s34, 3
    %p210 = por %p208, %p209
    %p211 = scmp.ne.s32.totalorder %s200, %s201
    %p212 = scmp.eq.s32.totalorder %s34, 0
    %p213 = por %p211, %p212
    %p214 = scmp.ne.s32.totalorder %s200, %s201
    %p215 = scmp.eq.s32.totalorder %s35, 3
    %p216 = por %p214, %p215
    %p218 = scmp.ne.s32.totalorder %s201, %s217
    %p219 = scmp.eq.s32.totalorder %s35, 0
    %p220 = por %p218, %p219
    %s221 = ssub.s32 %s37, %s44
    %p222 = scmp.eq.s32.totalorder %s221, 0
    %s224 = sadd.s32 %s223, 1
    %s225 = scalar_select %p222, %s223, %s224
    %p228 = pneg %p222
    %p229 = scmp.eq.s32.totalorder %s29, 3
    %p230 = por %p228, %p229
    %p231 = scmp.ne.s32.totalorder %s223, %s226
    %p232 = scmp.eq.s32.totalorder %s29, 0
    %p233 = por %p231, %p232
    %p234 = scmp.ne.s32.totalorder %s223, %s226
    %p235 = scmp.eq.s32.totalorder %s34, 3
    %p236 = por %p234, %p235
    %p237 = scmp.ne.s32.totalorder %s226, %s227
    %p238 = scmp.eq.s32.totalorder %s34, 0
    %p239 = por %p237, %p238
    %p240 = scmp.ne.s32.totalorder %s226, %s227
    %p241 = scmp.eq.s32.totalorder %s35, 3
    %p242 = por %p240, %p241
    %p244 = scmp.ne.s32.totalorder %s227, %s243
    %p245 = scmp.eq.s32.totalorder %s35, 0
    %p246 = por %p244, %p245
    %s247 = ssub.s32 %s37, %s44
    %p248 = scmp.eq.s32.totalorder %s247, 0
    %s250 = sadd.s32 %s249, 1
    %s251 = scalar_select %p248, %s249, %s250
    %p254 = pneg %p248
    %p255 = scmp.eq.s32.totalorder %s29, 3
    %p256 = por %p254, %p255
    %p257 = scmp.ne.s32.totalorder %s249, %s252
    %p258 = scmp.eq.s32.totalorder %s29, 0
    %p259 = por %p257, %p258
    %p260 = scmp.ne.s32.totalorder %s249, %s252
    %p261 = scmp.eq.s32.totalorder %s34, 3
    %p262 = por %p260, %p261
    %p263 = scmp.ne.s32.totalorder %s252, %s253
    %p264 = scmp.eq.s32.totalorder %s34, 0
    %p265 = por %p263, %p264
    %p266 = scmp.ne.s32.totalorder %s252, %s253
    %p267 = scmp.eq.s32.totalorder %s35, 3
    %p268 = por %p266, %p267
    %p270 = scmp.ne.s32.totalorder %s253, %s269
    %p271 = scmp.eq.s32.totalorder %s35, 0
    %p272 = por %p270, %p271
    %s273 = ssub.s32 %s37, %s44
    %p274 = scmp.eq.s32.totalorder %s273, 0
    %s276 = sadd.s32 %s275, 1
    %s277 = scalar_select %p274, %s275, %s276
    %p280 = pneg %p274
    %p281 = scmp.eq.s32.totalorder %s29, 3
    %p282 = por %p280, %p281
    %p283 = scmp.ne.s32.totalorder %s275, %s278
    %p284 = scmp.eq.s32.totalorder %s29, 0
    %p285 = por %p283, %p284
    %p286 = scmp.ne.s32.totalorder %s275, %s278
    %p287 = scmp.eq.s32.totalorder %s34, 3
    %p288 = por %p286, %p287
    %p289 = scmp.ne.s32.totalorder %s278, %s279
    %p290 = scmp.eq.s32.totalorder %s34, 0
    %p291 = por %p289, %p290
    %p292 = scmp.ne.s32.totalorder %s278, %s279
    %p293 = scmp.eq.s32.totalorder %s35, 3
    %p294 = por %p292, %p293
    %p296 = scmp.ne.s32.totalorder %s279, %s295
    %p297 = scmp.eq.s32.totalorder %s35, 0
    %p298 = por %p296, %p297
    %s299 = ssub.s32 %s37, %s44
    %p300 = scmp.eq.s32.totalorder %s299, 0
    %s302 = sadd.s32 %s301, 1
    %s303 = scalar_select %p300, %s301, %s302
    %p306 = pneg %p300
    %p307 = scmp.eq.s32.totalorder %s29, 3
    %p308 = por %p306, %p307
    %p309 = scmp.ne.s32.totalorder %s301, %s304
    %p310 = scmp.eq.s32.totalorder %s29, 0
    %p311 = por %p309, %p310
    %p312 = scmp.ne.s32.totalorder %s301, %s304
    %p313 = scmp.eq.s32.totalorder %s34, 3
    %p314 = por %p312, %p313
    %p315 = scmp.ne.s32.totalorder %s304, %s305
    %p316 = scmp.eq.s32.totalorder %s34, 0
    %p317 = por %p315, %p316
    %p318 = scmp.ne.s32.totalorder %s304, %s305
    %p319 = scmp.eq.s32.totalorder %s35, 3
    %p320 = por %p318, %p319
    %p322 = scmp.ne.s32.totalorder %s305, %s321
    %p323 = scmp.eq.s32.totalorder %s35, 0
    %p324 = por %p322, %p323
    %s325 = ssub.s32 %s37, %s44
    %p326 = scmp.eq.s32.totalorder %s325, 0
    %s328 = sadd.s32 %s327, 1
    %s329 = scalar_select %p326, %s327, %s328
    %p332 = pneg %p326
    %p333 = scmp.eq.s32.totalorder %s29, 3
    %p334 = por %p332, %p333
    %p335 = scmp.ne.s32.totalorder %s327, %s330
    %p336 = scmp.eq.s32.totalorder %s29, 0
    %p337 = por %p335, %p336
    %p338 = scmp.ne.s32.totalorder %s327, %s330
    %p339 = scmp.eq.s32.totalorder %s34, 3
    %p340 = por %p338, %p339
    %p341 = scmp.ne.s32.totalorder %s330, %s331
    %p342 = scmp.eq.s32.totalorder %s34, 0
    %p343 = por %p341, %p342
    %p344 = scmp.ne.s32.totalorder %s330, %s331
    %p345 = scmp.eq.s32.totalorder %s35, 3
    %p346 = por %p344, %p345
    %p348 = scmp.ne.s32.totalorder %s331, %s347
    %p349 = scmp.eq.s32.totalorder %s35, 0
    %p350 = por %p348, %p349
    %s351 = ssub.s32 %s37, %s44
    %p352 = scmp.eq.s32.totalorder %s351, 0
    %s354 = sadd.s32 %s353, 1
    %s355 = scalar_select %p352, %s353, %s354
    %p358 = pneg %p352
    %p359 = scmp.eq.s32.totalorder %s29, 3
    %p360 = por %p358, %p359
    %p361 = scmp.ne.s32.totalorder %s353, %s356
    %p362 = scmp.eq.s32.totalorder %s29, 0
    %p363 = por %p361, %p362
    %p364 = scmp.ne.s32.totalorder %s353, %s356
    %p365 = scmp.eq.s32.totalorder %s34, 3
    %p366 = por %p364, %p365
    %p367 = scmp.ne.s32.totalorder %s356, %s357
    %p368 = scmp.eq.s32.totalorder %s34, 0
    %p369 = por %p367, %p368
    %p370 = scmp.ne.s32.totalorder %s356, %s357
    %p371 = scmp.eq.s32.totalorder %s35, 3
    %p372 = por %p370, %p371
    %p374 = scmp.ne.s32.totalorder %s357, %s373
    %p375 = scmp.eq.s32.totalorder %s35, 0
    %p376 = por %p374, %p375
    %s377 = ssub.s32 %s37, %s44
    %p378 = scmp.eq.s32.totalorder %s377, 0
    %s380 = sadd.s32 %s379, 1
    %s381 = scalar_select %p378, %s379, %s380
    %p384 = pneg %p378
    %p385 = scmp.eq.s32.totalorder %s29, 3
    %p386 = por %p384, %p385
    %p387 = scmp.ne.s32.totalorder %s379, %s382
    %p388 = scmp.eq.s32.totalorder %s29, 0
    %p389 = por %p387, %p388
    %p390 = scmp.ne.s32.totalorder %s379, %s382
    %p391 = scmp.eq.s32.totalorder %s34, 3
    %p392 = por %p390, %p391
    %p393 = scmp.ne.s32.totalorder %s382, %s383
    %p394 = scmp.eq.s32.totalorder %s34, 0
    %p395 = por %p393, %p394
    %p396 = scmp.ne.s32.totalorder %s382, %s383
    %p397 = scmp.eq.s32.totalorder %s35, 3
    %p398 = por %p396, %p397
    %p400 = scmp.ne.s32.totalorder %s383, %s399
    %p401 = scmp.eq.s32.totalorder %s35, 0
    %p402 = por %p400, %p401
    %s403 = ssub.s32 %s37, %s44
    %p404 = scmp.eq.s32.totalorder %s403, 0
    %s406 = sadd.s32 %s405, 1
    %s407 = scalar_select %p404, %s405, %s406
    %p410 = pneg %p404
    %p411 = scmp.eq.s32.totalorder %s29, 3
    %p412 = por %p410, %p411
    %p413 = scmp.ne.s32.totalorder %s405, %s408
    %p414 = scmp.eq.s32.totalorder %s29, 0
    %p415 = por %p413, %p414
    %p416 = scmp.ne.s32.totalorder %s405, %s408
    %p417 = scmp.eq.s32.totalorder %s34, 3
    %p418 = por %p416, %p417
    %p419 = scmp.ne.s32.totalorder %s408, %s409
    %p420 = scmp.eq.s32.totalorder %s34, 0
    %p421 = por %p419, %p420
    %p422 = scmp.ne.s32.totalorder %s408, %s409
    %p423 = scmp.eq.s32.totalorder %s35, 3
    %p424 = por %p422, %p423
    %p426 = scmp.ne.s32.totalorder %s409, %s425
    %p427 = scmp.eq.s32.totalorder %s35, 0
    %p428 = por %p426, %p427
    %s429 = ssub.s32 %s37, %s44
    %p430 = scmp.eq.s32.totalorder %s429, 0
    %s432 = sadd.s32 %s431, 1
    %s433 = scalar_select %p430, %s431, %s432
    %p436 = pneg %p430
    %p437 = scmp.eq.s32.totalorder %s29, 3
    %p438 = por %p436, %p437
    %p439 = scmp.ne.s32.totalorder %s431, %s434
    %p440 = scmp.eq.s32.totalorder %s29, 0
    %p441 = por %p439, %p440
    %p442 = scmp.ne.s32.totalorder %s431, %s434
    %p443 = scmp.eq.s32.totalorder %s34, 3
    %p444 = por %p442, %p443
    %p445 = scmp.ne.s32.totalorder %s434, %s435
    %p446 = scmp.eq.s32.totalorder %s34, 0
    %p447 = por %p445, %p446
    %p448 = scmp.ne.s32.totalorder %s434, %s435
    %p449 = scmp.eq.s32.totalorder %s35, 3
    %p450 = por %p448, %p449
    %p452 = scmp.ne.s32.totalorder %s435, %s451
    %p453 = scmp.eq.s32.totalorder %s35, 0
    %p454 = por %p452, %p453
    %s455 = ssub.s32 %s37, %s44
    %p456 = scmp.eq.s32.totalorder %s455, 0
    %s458 = sadd.s32 %s457, 1
    %s459 = scalar_select %p456, %s457, %s458
    %p462 = pneg %p456
    %p463 = scmp.eq.s32.totalorder %s29, 3
    %p464 = por %p462, %p463
    %p465 = scmp.ne.s32.totalorder %s457, %s460
    %p466 = scmp.eq.s32.totalorder %s29, 0
    %p467 = por %p465, %p466
    %p468 = scmp.ne.s32.totalorder %s457, %s460
    %p469 = scmp.eq.s32.totalorder %s34, 3
    %p470 = por %p468, %p469
    %p471 = scmp.ne.s32.totalorder %s460, %s461
    %p472 = scmp.eq.s32.totalorder %s34, 0
    %p473 = por %p471, %p472
    %p474 = scmp.ne.s32.totalorder %s460, %s461
    %p475 = scmp.eq.s32.totalorder %s35, 3
    %p476 = por %p474, %p475
    %p478 = scmp.ne.s32.totalorder %s461, %s477
    %p479 = scmp.eq.s32.totalorder %s35, 0
    %p480 = por %p478, %p479
    %s481 = ssub.s32 %s37, %s44
    %p482 = scmp.eq.s32.totalorder %s481, 0
    %s484 = sadd.s32 %s483, 1
    %s485 = scalar_select %p482, %s483, %s484
    %p488 = pneg %p482
    %p489 = scmp.eq.s32.totalorder %s29, 3
    %p490 = por %p488, %p489
    %p491 = scmp.ne.s32.totalorder %s483, %s486
    %p492 = scmp.eq.s32.totalorder %s29, 0
    %p493 = por %p491, %p492
    %p494 = scmp.ne.s32.totalorder %s483, %s486
    %p495 = scmp.eq.s32.totalorder %s34, 3
    %p496 = por %p494, %p495
    %p497 = scmp.ne.s32.totalorder %s486, %s487
    %p498 = scmp.eq.s32.totalorder %s34, 0
    %p499 = por %p497, %p498
    %p500 = scmp.ne.s32.totalorder %s486, %s487
    %p501 = scmp.eq.s32.totalorder %s35, 3
    %p502 = por %p500, %p501
    %p504 = scmp.ne.s32.totalorder %s487, %s503
    %p505 = scmp.eq.s32.totalorder %s35, 0
    %p506 = por %p504, %p505
    %s507 = ssub.s32 %s37, %s44
    %p508 = scmp.eq.s32.totalorder %s507, 0
    %s510 = sadd.s32 %s509, 1
    %s511 = scalar_select %p508, %s509, %s510
    %p514 = pneg %p508
    %p515 = scmp.eq.s32.totalorder %s29, 3
    %p516 = por %p514, %p515
    %p517 = scmp.ne.s32.totalorder %s509, %s512
    %p518 = scmp.eq.s32.totalorder %s29, 0
    %p519 = por %p517, %p518
    %p520 = scmp.ne.s32.totalorder %s509, %s512
    %p521 = scmp.eq.s32.totalorder %s34, 3
    %p522 = por %p520, %p521
    %p523 = scmp.ne.s32.totalorder %s512, %s513
    %p524 = scmp.eq.s32.totalorder %s34, 0
    %p525 = por %p523, %p524
    %p526 = scmp.ne.s32.totalorder %s512, %s513
    %p527 = scmp.eq.s32.totalorder %s35, 3
    %p528 = por %p526, %p527
    %p530 = scmp.ne.s32.totalorder %s513, %s529
    %p531 = scmp.eq.s32.totalorder %s35, 0
    %p532 = por %p530, %p531
    %s534 = sadd.s32 %s533, 1
    %p537 = scmp.eq.s32.totalorder %s29, 3
    %p538 = scmp.ne.s32.totalorder %s533, %s535
    %p539 = scmp.eq.s32.totalorder %s29, 0
    %p540 = por %p538, %p539
    %p541 = scmp.ne.s32.totalorder %s533, %s535
    %p542 = scmp.eq.s32.totalorder %s34, 3
    %p543 = por %p541, %p542
    %p544 = scmp.ne.s32.totalorder %s535, %s536
    %p545 = scmp.eq.s32.totalorder %s34, 0
    %p546 = por %p544, %p545
    %p547 = scmp.ne.s32.totalorder %s535, %s536
    %p548 = scmp.eq.s32.totalorder %s35, 3
    %p549 = por %p547, %p548
    %p551 = scmp.ne.s32.totalorder %s536, %s550
    %p552 = scmp.eq.s32.totalorder %s35, 0
    %p553 = por %p551, %p552
    %s555 = sadd.s32 %s554, 1
    %p558 = scmp.eq.s32.totalorder %s29, 3
    %p559 = scmp.ne.s32.totalorder %s554, %s556
    %p560 = scmp.eq.s32.totalorder %s29, 0
    %p561 = por %p559, %p560
    %p562 = scmp.ne.s32.totalorder %s554, %s556
    %p563 = scmp.eq.s32.totalorder %s34, 3
    %p564 = por %p562, %p563
    %p565 = scmp.ne.s32.totalorder %s556, %s557
    %p566 = scmp.eq.s32.totalorder %s34, 0
    %p567 = por %p565, %p566
    %p568 = scmp.ne.s32.totalorder %s556, %s557
    %p569 = scmp.eq.s32.totalorder %s35, 3
    %p570 = por %p568, %p569
    %p572 = scmp.ne.s32.totalorder %s557, %s571
    %p573 = scmp.eq.s32.totalorder %s35, 0
    %p574 = por %p572, %p573
    %s576 = sadd.s32 %s575, 1
    %p579 = scmp.eq.s32.totalorder %s29, 3
    %p580 = scmp.ne.s32.totalorder %s575, %s577
    %p581 = scmp.eq.s32.totalorder %s29, 0
    %p582 = por %p580, %p581
    %p583 = scmp.ne.s32.totalorder %s575, %s577
    %p584 = scmp.eq.s32.totalorder %s34, 3
    %p585 = por %p583, %p584
    %p586 = scmp.ne.s32.totalorder %s577, %s578
    %p587 = scmp.eq.s32.totalorder %s34, 0
    %p588 = por %p586, %p587
    %p589 = scmp.ne.s32.totalorder %s577, %s578
    %p590 = scmp.eq.s32.totalorder %s35, 3
    %p591 = por %p589, %p590
    %p593 = scmp.ne.s32.totalorder %s578, %s592
    %p594 = scmp.eq.s32.totalorder %s35, 0
    %p595 = por %p593, %p594
    %s597 = sadd.s32 %s596, 1
    %p600 = scmp.eq.s32.totalorder %s29, 3
    %p601 = scmp.ne.s32.totalorder %s596, %s598
    %p602 = scmp.eq.s32.totalorder %s29, 0
    %p603 = por %p601, %p602
    %p604 = scmp.ne.s32.totalorder %s596, %s598
    %p605 = scmp.eq.s32.totalorder %s34, 3
    %p606 = por %p604, %p605
    %p607 = scmp.ne.s32.totalorder %s598, %s599
    %p608 = scmp.eq.s32.totalorder %s34, 0
    %p609 = por %p607, %p608
    %p610 = scmp.ne.s32.totalorder %s598, %s599
    %p611 = scmp.eq.s32.totalorder %s35, 3
    %p612 = por %p610, %p611
    %p614 = scmp.ne.s32.totalorder %s599, %s613
    %p615 = scmp.eq.s32.totalorder %s35, 0
    %p616 = por %p614, %p615
    %s617 = ssub.s32 %s36, %s48
    %p618 = scmp.eq.s32.totalorder %s617, 0
    %s620 = sadd.s32 %s619, 1
    %s621 = scalar_select %p618, %s619, %s620
    %p624 = pneg %p618
    %p625 = scmp.eq.s32.totalorder %s29, 3
    %p626 = por %p624, %p625
    %p627 = scmp.ne.s32.totalorder %s619, %s622
    %p628 = scmp.eq.s32.totalorder %s29, 0
    %p629 = por %p627, %p628
    %p630 = scmp.ne.s32.totalorder %s619, %s622
    %p631 = scmp.eq.s32.totalorder %s34, 3
    %p632 = por %p630, %p631
    %p633 = scmp.ne.s32.totalorder %s622, %s623
    %p634 = scmp.eq.s32.totalorder %s34, 0
    %p635 = por %p633, %p634
    %p636 = scmp.ne.s32.totalorder %s622, %s623
    %p637 = scmp.eq.s32.totalorder %s35, 3
    %p638 = por %p636, %p637
    %p640 = scmp.ne.s32.totalorder %s623, %s639
    %p641 = scmp.eq.s32.totalorder %s35, 0
    %p642 = por %p640, %p641
    %p643 = scmp.le.s32.totalorder 1, %s29
    %p644 = scmp.lt.s32.totalorder %s29, 5
    %p645 = pnand %p643, %p644
    %p646 = pneg %p645
    // Predicated region
    $region9: #{esm1v_token_classification_forward.1} parent=5 // pred_check
      _
    $region10: #{esm1v_token_classification_forward.1} parent=5 // pred_check_branch
      %648 = sbr.rel (%p645) target = $region12
    $region11: #{esm1v_token_classification_forward.1} parent=5 // pred_region
      %s649 = ssub.s32 %s29, 1
      // Predicated region
      $region13: #{esm1v_token_classification_forward.1} parent=11 // pred_check
        %p650 = pneg %p88
      $region14: #{esm1v_token_classification_forward.1} parent=11 // pred_check_branch
        %652 = sbr.rel (%p650) target = $region16
      $region15: #{esm1v_token_classification_forward.1} parent=11 // pred_region
        _
      $region16: #{esm1v_token_classification_forward.1} parent=11 // pred_fallthru
        _
      // Predicated region
      $region17: #{esm1v_token_classification_forward.1} parent=11 // pred_check
        %p653 = pneg %p109
      $region18: #{esm1v_token_classification_forward.1} parent=11 // pred_check_branch
        %655 = sbr.rel (%p653) target = $region20
      $region19: #{esm1v_token_classification_forward.1} parent=11 // pred_region
        _
      $region20: #{esm1v_token_classification_forward.1} parent=11 // pred_fallthru
        _
      // Predicated region
      $region21: #{esm1v_token_classification_forward.1} parent=11 // pred_check
        %p656 = pneg %p546
      $region22: #{esm1v_token_classification_forward.1} parent=11 // pred_check_branch
        %658 = sbr.rel (%p656) target = $region24
      $region23: #{esm1v_token_classification_forward.1} parent=11 // pred_region
        _
      $region24: #{esm1v_token_classification_forward.1} parent=11 // pred_fallthru
        _
      // Predicated region
      $region25: #{esm1v_token_classification_forward.1} parent=11 // pred_check
        %p659 = pneg %p567
      $region26: #{esm1v_token_classification_forward.1} parent=11 // pred_check_branch
        %661 = sbr.rel (%p659) target = $region28
      $region27: #{esm1v_token_classification_forward.1} parent=11 // pred_region
        _
      $region28: #{esm1v_token_classification_forward.1} parent=11 // pred_fallthru
        _
      // Predicated region
      $region29: #{esm1v_token_classification_forward.1} parent=11 // pred_check
        %p662 = pneg %p588
      $region30: #{esm1v_token_classification_forward.1} parent=11 // pred_check_branch
        %664 = sbr.rel (%p662) target = $region32
      $region31: #{esm1v_token_classification_forward.1} parent=11 // pred_region
        _
      $region32: #{esm1v_token_classification_forward.1} parent=11 // pred_fallthru
        _
      // Predicated region
      $region33: #{esm1v_token_classification_forward.1} parent=11 // pred_check
        %p665 = pneg %p609
      $region34: #{esm1v_token_classification_forward.1} parent=11 // pred_check_branch
        %667 = sbr.rel (%p665) target = $region36
      $region35: #{esm1v_token_classification_forward.1} parent=11 // pred_region
        _
      $region36: #{esm1v_token_classification_forward.1} parent=11 // pred_fallthru
        _
    $region12: #{esm1v_token_classification_forward.1} parent=5 // pred_fallthru
      _
    %p668 = scmp.lt.s32.totalorder %s29, 4
    // Predicated region
    $region37: #{esm1v_token_classification_forward.1} parent=5 // pred_check
      %p669 = pneg %p668
    $region38: #{esm1v_token_classification_forward.1} parent=5 // pred_check_branch
      %671 = sbr.rel (%p669) target = $region40
    $region39: #{esm1v_token_classification_forward.1} parent=5 // pred_region
      // Predicated region
      $region41: #{esm1v_token_classification_forward.1} parent=39 // pred_check
        %p672 = pneg %p61
      $region42: #{esm1v_token_classification_forward.1} parent=39 // pred_check_branch
        %674 = sbr.rel (%p672) target = $region44
      $region43: #{esm1v_token_classification_forward.1} parent=39 // pred_region
        %p675 = scmp.lt.s32.totalorder %s36, 1
        %s676 = scalar_select %p675, %s36, 1
        %s677 = smul.addr %s676, 8
        %s678 = scalar_lea.vmem %s0, %s677
      $region44: #{esm1v_token_classification_forward.1} parent=39 // pred_fallthru
        _
      // Predicated region
      $region45: #{esm1v_token_classification_forward.1} parent=39 // pred_check
        %p679 = pneg %p129
      $region46: #{esm1v_token_classification_forward.1} parent=39 // pred_check_branch
        %681 = sbr.rel (%p679) target = $region48
      $region47: #{esm1v_token_classification_forward.1} parent=39 // pred_region
        %p682 = scmp.lt.s32.totalorder %s37, 1
        %s683 = scalar_select %p682, %s37, 1
        %s684 = scalar_lea.vmem %s3, %s683
      $region48: #{esm1v_token_classification_forward.1} parent=39 // pred_fallthru
        _
      // Predicated region
      $region49: #{esm1v_token_classification_forward.1} parent=39 // pred_check
        %p685 = pneg %p155
      $region50: #{esm1v_token_classification_forward.1} parent=39 // pred_check_branch
        %687 = sbr.rel (%p685) target = $region52
      $region51: #{esm1v_token_classification_forward.1} parent=39 // pred_region
        %p688 = scmp.lt.s32.totalorder %s37, 1
        %s689 = scalar_select %p688, %s37, 1
        %s690 = scalar_lea.vmem %s4, %s689
      $region52: #{esm1v_token_classification_forward.1} parent=39 // pred_fallthru
        _
      // Predicated region
      $region53: #{esm1v_token_classification_forward.1} parent=39 // pred_check
        %p691 = pneg %p181
      $region54: #{esm1v_token_classification_forward.1} parent=39 // pred_check_branch
        %693 = sbr.rel (%p691) target = $region56
      $region55: #{esm1v_token_classification_forward.1} parent=39 // pred_region
        %p694 = scmp.lt.s32.totalorder %s37, 1
        %s695 = scalar_select %p694, %s37, 1
        %s696 = smul.addr %s695, 4
        %s697 = smul.addr %s696, 4
        %s698 = scalar_lea.vmem %s5, %s697
      $region56: #{esm1v_token_classification_forward.1} parent=39 // pred_fallthru
        _
      // Predicated region
      $region57: #{esm1v_token_classification_forward.1} parent=39 // pred_check
        %p699 = pneg %p207
      $region58: #{esm1v_token_classification_forward.1} parent=39 // pred_check_branch
        %701 = sbr.rel (%p699) target = $region60
      $region59: #{esm1v_token_classification_forward.1} parent=39 // pred_region
        %p702 = scmp.lt.s32.totalorder %s37, 1
        %s703 = scalar_select %p702, %s37, 1
        %s704 = scalar_lea.vmem %s6, %s703
      $region60: #{esm1v_token_classification_forward.1} parent=39 // pred_fallthru
        _
      // Predicated region
      $region61: #{esm1v_token_classification_forward.1} parent=39 // pred_check
        %p705 = pneg %p233
      $region62: #{esm1v_token_classification_forward.1} parent=39 // pred_check_branch
        %707 = sbr.rel (%p705) target = $region64
      $region63: #{esm1v_token_classification_forward.1} parent=39 // pred_region
        %p708 = scmp.lt.s32.totalorder %s37, 1
        %s709 = scalar_select %p708, %s37, 1
        %s710 = smul.addr %s709, 4
        %s711 = smul.addr %s710, 4
        %s712 = scalar_lea.vmem %s7, %s711
      $region64: #{esm1v_token_classification_forward.1} parent=39 // pred_fallthru
        _
      // Predicated region
      $region65: #{esm1v_token_classification_forward.1} parent=39 // pred_check
        %p713 = pneg %p259
      $region66: #{esm1v_token_classification_forward.1} parent=39 // pred_check_branch
        %715 = sbr.rel (%p713) target = $region68
      $region67: #{esm1v_token_classification_forward.1} parent=39 // pred_region
        %p716 = scmp.lt.s32.totalorder %s37, 1
        %s717 = scalar_select %p716, %s37, 1
        %s718 = scalar_lea.vmem %s8, %s717
      $region68: #{esm1v_token_classification_forward.1} parent=39 // pred_fallthru
        _
      // Predicated region
      $region69: #{esm1v_token_classification_forward.1} parent=39 // pred_check
        %p719 = pneg %p285
      $region70: #{esm1v_token_classification_forward.1} parent=39 // pred_check_branch
        %721 = sbr.rel (%p719) target = $region72
      $region71: #{esm1v_token_classification_forward.1} parent=39 // pred_region
        %p722 = scmp.lt.s32.totalorder %s37, 1
        %s723 = scalar_select %p722, %s37, 1
        %s724 = smul.addr %s723, 4
        %s725 = smul.addr %s724, 4
        %s726 = scalar_lea.vmem %s9, %s725
      $region72: #{esm1v_token_classification_forward.1} parent=39 // pred_fallthru
        _
      // Predicated region
      $region73: #{esm1v_token_classification_forward.1} parent=39 // pred_check
        %p727 = pneg %p311
      $region74: #{esm1v_token_classification_forward.1} parent=39 // pred_check_branch
        %729 = sbr.rel (%p727) target = $region76
      $region75: #{esm1v_token_classification_forward.1} parent=39 // pred_region
        %p730 = scmp.lt.s32.totalorder %s37, 1
        %s731 = scalar_select %p730, %s37, 1
        %s732 = scalar_lea.vmem %s10, %s731
      $region76: #{esm1v_token_classification_forward.1} parent=39 // pred_fallthru
        _
      // Predicated region
      $region77: #{esm1v_token_classification_forward.1} parent=39 // pred_check
        %p733 = pneg %p337
      $region78: #{esm1v_token_classification_forward.1} parent=39 // pred_check_branch
        %735 = sbr.rel (%p733) target = $region80
      $region79: #{esm1v_token_classification_forward.1} parent=39 // pred_region
        %p736 = scmp.lt.s32.totalorder %s37, 1
        %s737 = scalar_select %p736, %s37, 1
        %s738 = smul.addr %s737, 4
        %s739 = smul.addr %s738, 4
        %s740 = scalar_lea.vmem %s11, %s739
      $region80: #{esm1v_token_classification_forward.1} parent=39 // pred_fallthru
        _
      // Predicated region
      $region81: #{esm1v_token_classification_forward.1} parent=39 // pred_check
        %p741 = pneg %p363
      $region82: #{esm1v_token_classification_forward.1} parent=39 // pred_check_branch
        %743 = sbr.rel (%p741) target = $region84
      $region83: #{esm1v_token_classification_forward.1} parent=39 // pred_region
        %p744 = scmp.lt.s32.totalorder %s37, 1
        %s745 = scalar_select %p744, %s37, 1
        %s746 = scalar_lea.vmem %s12, %s745
      $region84: #{esm1v_token_classification_forward.1} parent=39 // pred_fallthru
        _
      // Predicated region
      $region85: #{esm1v_token_classification_forward.1} parent=39 // pred_check
        %p747 = pneg %p389
      $region86: #{esm1v_token_classification_forward.1} parent=39 // pred_check_branch
        %749 = sbr.rel (%p747) target = $region88
      $region87: #{esm1v_token_classification_forward.1} parent=39 // pred_region
        %p750 = scmp.lt.s32.totalorder %s37, 1
        %s751 = scalar_select %p750, %s37, 1
        %s752 = scalar_lea.vmem %s13, %s751
      $region88: #{esm1v_token_classification_forward.1} parent=39 // pred_fallthru
        _
      // Predicated region
      $region89: #{esm1v_token_classification_forward.1} parent=39 // pred_check
        %p753 = pneg %p415
      $region90: #{esm1v_token_classification_forward.1} parent=39 // pred_check_branch
        %755 = sbr.rel (%p753) target = $region92
      $region91: #{esm1v_token_classification_forward.1} parent=39 // pred_region
        %p756 = scmp.lt.s32.totalorder %s37, 1
        %s757 = scalar_select %p756, %s37, 1
        %s758 = scalar_lea.vmem %s14, %s757
      $region92: #{esm1v_token_classification_forward.1} parent=39 // pred_fallthru
        _
      // Predicated region
      $region93: #{esm1v_token_classification_forward.1} parent=39 // pred_check
        %p759 = pneg %p441
      $region94: #{esm1v_token_classification_forward.1} parent=39 // pred_check_branch
        %761 = sbr.rel (%p759) target = $region96
      $region95: #{esm1v_token_classification_forward.1} parent=39 // pred_region
        %p762 = scmp.lt.s32.totalorder %s37, 1
        %s763 = scalar_select %p762, %s37, 1
        %s764 = smul.addr %s763, 4
        %s765 = smul.addr %s764, 4
        %s766 = scalar_lea.vmem %s15, %s765
      $region96: #{esm1v_token_classification_forward.1} parent=39 // pred_fallthru
        _
      // Predicated region
      $region97: #{esm1v_token_classification_forward.1} parent=39 // pred_check
        %p767 = pneg %p467
      $region98: #{esm1v_token_classification_forward.1} parent=39 // pred_check_branch
        %769 = sbr.rel (%p767) target = $region100
      $region99: #{esm1v_token_classification_forward.1} parent=39 // pred_region
        %p770 = scmp.lt.s32.totalorder %s37, 1
        %s771 = scalar_select %p770, %s37, 1
        %s772 = scalar_lea.vmem %s16, %s771
      $region100: #{esm1v_token_classification_forward.1} parent=39 // pred_fallthru
        _
      // Predicated region
      $region101: #{esm1v_token_classification_forward.1} parent=39 // pred_check
        %p773 = pneg %p493
      $region102: #{esm1v_token_classification_forward.1} parent=39 // pred_check_branch
        %775 = sbr.rel (%p773) target = $region104
      $region103: #{esm1v_token_classification_forward.1} parent=39 // pred_region
        %p776 = scmp.lt.s32.totalorder %s37, 1
        %s777 = scalar_select %p776, %s37, 1
        %s778 = smul.addr %s777, 8
        %s779 = smul.addr %s778, 4
        %s780 = scalar_lea.vmem %s17, %s779
      $region104: #{esm1v_token_classification_forward.1} parent=39 // pred_fallthru
        _
      // Predicated region
      $region105: #{esm1v_token_classification_forward.1} parent=39 // pred_check
        %p781 = pneg %p519
      $region106: #{esm1v_token_classification_forward.1} parent=39 // pred_check_branch
        %783 = sbr.rel (%p781) target = $region108
      $region107: #{esm1v_token_classification_forward.1} parent=39 // pred_region
        %p784 = scmp.lt.s32.totalorder %s37, 1
        %s785 = scalar_select %p784, %s37, 1
        %s786 = scalar_lea.vmem %s18, %s785
      $region108: #{esm1v_token_classification_forward.1} parent=39 // pred_fallthru
        _
    $region40: #{esm1v_token_classification_forward.1} parent=5 // pred_fallthru
      _
    %p787 = scmp.le.s32.totalorder 1, %s29
    %p788 = scmp.lt.s32.totalorder %s29, 5
    %p789 = pnand %p787, %p788
    %p790 = pneg %p789
    // Predicated region
    $region109: #{esm1v_token_classification_forward.1} parent=5 // pred_check
      _
    $region110: #{esm1v_token_classification_forward.1} parent=5 // pred_check_branch
      %792 = sbr.rel (%p789) target = $region112
    $region111: #{esm1v_token_classification_forward.1} parent=5 // pred_region
      %s793 = ssub.s32 %s29, 1
      %p794 = scmp.lt.s32.totalorder %s38, 1
      %s795 = scalar_select %p794, %s38, 1
      %s796 = smul.addr %s795, 8
      %s797 = scalar_lea.vmem %s0, %s796
      %p798 = pneg %p67
      %p799 = pneg %p64
      %p800 = pneg %p88
      %p801 = pneg %p85
      %p802 = pneg %p109
      %p803 = pneg %p106
      %p804 = scmp.lt.s32.totalorder %s39, 1
      %s805 = scalar_select %p804, %s39, 1
      %s806 = scalar_lea.vmem %s3, %s805
      %p807 = pneg %p135
      %p808 = pneg %p132
      %p809 = scmp.lt.s32.totalorder %s39, 1
      %s810 = scalar_select %p809, %s39, 1
      %s811 = scalar_lea.vmem %s4, %s810
      %p812 = pneg %p161
      %p813 = pneg %p158
      %p814 = scmp.lt.s32.totalorder %s39, 1
      %s815 = scalar_select %p814, %s39, 1
      %s816 = smul.addr %s815, 4
      %s817 = smul.addr %s816, 4
      %s818 = scalar_lea.vmem %s5, %s817
      %p819 = pneg %p187
      %p820 = pneg %p184
      %p821 = scmp.lt.s32.totalorder %s39, 1
      %s822 = scalar_select %p821, %s39, 1
      %s823 = scalar_lea.vmem %s6, %s822
      %p824 = pneg %p213
      %p825 = pneg %p210
      %p826 = scmp.lt.s32.totalorder %s39, 1
      %s827 = scalar_select %p826, %s39, 1
      %s828 = smul.addr %s827, 4
      %s829 = smul.addr %s828, 4
      %s830 = scalar_lea.vmem %s7, %s829
      %p831 = pneg %p239
      %p832 = pneg %p236
      %p833 = scmp.lt.s32.totalorder %s39, 1
      %s834 = scalar_select %p833, %s39, 1
      %s835 = scalar_lea.vmem %s8, %s834
      %p836 = pneg %p265
      %p837 = pneg %p262
      %p838 = scmp.lt.s32.totalorder %s39, 1
      %s839 = scalar_select %p838, %s39, 1
      %s840 = smul.addr %s839, 4
      %s841 = smul.addr %s840, 4
      %s842 = scalar_lea.vmem %s9, %s841
      %p843 = pneg %p291
      %p844 = pneg %p288
      %p845 = scmp.lt.s32.totalorder %s39, 1
      %s846 = scalar_select %p845, %s39, 1
      %s847 = scalar_lea.vmem %s10, %s846
      %p848 = pneg %p317
      %p849 = pneg %p314
      %p850 = scmp.lt.s32.totalorder %s39, 1
      %s851 = scalar_select %p850, %s39, 1
      %s852 = smul.addr %s851, 4
      %s853 = smul.addr %s852, 4
      %s854 = scalar_lea.vmem %s11, %s853
      %p855 = pneg %p343
      %p856 = pneg %p340
      %p857 = scmp.lt.s32.totalorder %s39, 1
      %s858 = scalar_select %p857, %s39, 1
      %s859 = scalar_lea.vmem %s12, %s858
      %p860 = pneg %p369
      %p861 = pneg %p366
      %p862 = scmp.lt.s32.totalorder %s39, 1
      %s863 = scalar_select %p862, %s39, 1
      %s864 = scalar_lea.vmem %s13, %s863
      %p865 = pneg %p395
      %p866 = pneg %p392
      %p867 = scmp.lt.s32.totalorder %s39, 1
      %s868 = scalar_select %p867, %s39, 1
      %s869 = scalar_lea.vmem %s14, %s868
      %p870 = pneg %p421
      %p871 = pneg %p418
      %p872 = scmp.lt.s32.totalorder %s39, 1
      %s873 = scalar_select %p872, %s39, 1
      %s874 = smul.addr %s873, 4
      %s875 = smul.addr %s874, 4
      %s876 = scalar_lea.vmem %s15, %s875
      %p877 = pneg %p447
      %p878 = pneg %p444
      %p879 = scmp.lt.s32.totalorder %s39, 1
      %s880 = scalar_select %p879, %s39, 1
      %s881 = scalar_lea.vmem %s16, %s880
      %p882 = pneg %p473
      %p883 = pneg %p470
      %p884 = scmp.lt.s32.totalorder %s39, 1
      %s885 = scalar_select %p884, %s39, 1
      %s886 = smul.addr %s885, 8
      %s887 = smul.addr %s886, 4
      %s888 = scalar_lea.vmem %s17, %s887
      %p889 = pneg %p499
      %p890 = pneg %p496
      %p891 = scmp.lt.s32.totalorder %s39, 1
      %s892 = scalar_select %p891, %s39, 1
      %s893 = scalar_lea.vmem %s18, %s892
      %p894 = pneg %p525
      %p895 = pneg %p522
      %p896 = pneg %p546
      %p897 = pneg %p543
      %p898 = pneg %p567
      %p899 = pneg %p564
      %p900 = pneg %p588
      %p901 = pneg %p585
      %p902 = pneg %p609
      %p903 = pneg %p606
      %p904 = pneg %p635
      %p905 = pneg %p632
      %p906 = scmp.lt.s32.totalorder %s38, 1
      %s907 = scalar_select %p906, %s38, 1
      %s908 = smul.addr %s907, 8
      %s909 = scalar_lea.vmem %s23, %s908
      %p910 = scmp.lt.s32.totalorder %s38, 1
      %s911 = scalar_select %p910, %s38, 1
      %s912 = smul.addr %s911, 8
      %s913 = scalar_lea.vmem %s0, %s912
      %p914 = scmp.lt.s32.totalorder %s39, 1
      %s915 = scalar_select %p914, %s39, 1
      %s916 = scalar_lea.vmem %s3, %s915
      %p917 = scmp.lt.s32.totalorder %s39, 1
      %s918 = scalar_select %p917, %s39, 1
      %s919 = scalar_lea.vmem %s4, %s918
      %p920 = scmp.lt.s32.totalorder %s39, 1
      %s921 = scalar_select %p920, %s39, 1
      %s922 = smul.addr %s921, 4
      %s923 = smul.addr %s922, 4
      %s924 = scalar_lea.vmem %s5, %s923
      %p925 = scmp.lt.s32.totalorder %s39, 1
      %s926 = scalar_select %p925, %s39, 1
      %s927 = scalar_lea.vmem %s6, %s926
      %p928 = scmp.lt.s32.totalorder %s39, 1
      %s929 = scalar_select %p928, %s39, 1
      %s930 = smul.addr %s929, 4
      %s931 = smul.addr %s930, 4
      %s932 = scalar_lea.vmem %s7, %s931
      %p933 = scmp.lt.s32.totalorder %s39, 1
      %s934 = scalar_select %p933, %s39, 1
      %s935 = scalar_lea.vmem %s8, %s934
      %p936 = scmp.lt.s32.totalorder %s39, 1
      %s937 = scalar_select %p936, %s39, 1
      %s938 = smul.addr %s937, 4
      %s939 = smul.addr %s938, 4
      %s940 = scalar_lea.vmem %s9, %s939
      %p941 = scmp.lt.s32.totalorder %s39, 1
      %s942 = scalar_select %p941, %s39, 1
      %s943 = scalar_lea.vmem %s10, %s942
      %p944 = scmp.lt.s32.totalorder %s39, 1
      %s945 = scalar_select %p944, %s39, 1
      %s946 = smul.addr %s945, 4
      %s947 = smul.addr %s946, 4
      %s948 = scalar_lea.vmem %s11, %s947
      %p949 = scmp.lt.s32.totalorder %s39, 1
      %s950 = scalar_select %p949, %s39, 1
      %s951 = scalar_lea.vmem %s12, %s950
      %p952 = scmp.lt.s32.totalorder %s39, 1
      %s953 = scalar_select %p952, %s39, 1
      %s954 = scalar_lea.vmem %s13, %s953
      %p955 = scmp.lt.s32.totalorder %s39, 1
      %s956 = scalar_select %p955, %s39, 1
      %s957 = scalar_lea.vmem %s14, %s956
      %p958 = scmp.lt.s32.totalorder %s39, 1
      %s959 = scalar_select %p958, %s39, 1
      %s960 = smul.addr %s959, 4
      %s961 = smul.addr %s960, 4
      %s962 = scalar_lea.vmem %s15, %s961
      %p963 = scmp.lt.s32.totalorder %s39, 1
      %s964 = scalar_select %p963, %s39, 1
      %s965 = scalar_lea.vmem %s16, %s964
      %p966 = scmp.lt.s32.totalorder %s39, 1
      %s967 = scalar_select %p966, %s39, 1
      %s968 = smul.addr %s967, 8
      %s969 = smul.addr %s968, 4
      %s970 = scalar_lea.vmem %s17, %s969
      %p971 = scmp.lt.s32.totalorder %s39, 1
      %s972 = scalar_select %p971, %s39, 1
      %s973 = scalar_lea.vmem %s18, %s972
      %p974 = scmp.lt.s32.totalorder %s38, 1
      %s975 = scalar_select %p974, %s38, 1
      %s976 = smul.addr %s975, 8
      %s977 = scalar_lea.vmem %s23, %s976
      %p979 = scmp.eq.s32.totalorder %s39, 0
      // Predicated region
      $region113: #{esm1v_token_classification_forward.1} parent=111 // pred_check
        %p980 = pneg %p979
      $region114: #{esm1v_token_classification_forward.1} parent=111 // pred_check_branch
        %982 = sbr.rel (%p980) target = $region116
      $region115: #{esm1v_token_classification_forward.1} parent=111 // pred_region
        %v983 = vld [vmem:[%s913] sm:$0xff]
        %vm984 = vcmask 261120
        %985 = vst.msk [vmem:[#allocation2] sm:$0xff] %vm984, %v983
      $region116: #{esm1v_token_classification_forward.1} parent=111 // pred_fallthru
        _
      %v986 = vld [vmem:[#allocation2] sm:$0xff]
      %v987 = vld [vmem:[%s916] sm:$0x1]
      %v988 = vld [vmem:[%s919] sm:$0x1]
      %vm989 = vcmask 261120
      %v990 = vsel %vm989, %v986, 0.0
      %991 = vadd.xlane.f32.xlu0 %v990
      %v992 = vpop.xlane.xlu0 %991
      %v993 = vrcp.pop 32.0
      %v994 = vmul.f32 %v992, %v993
      %v995 = vmul.f32 %v986, %v986
      %v996 = vsel %vm989, %v995, 0.0
      %997 = vadd.xlane.f32.xlu0 %v996
      %v998 = vpop.xlane.xlu0 %997
      %v999 = vmul.f32 %v998, %v993
      %v1000 = vmul.f32 %v994, %v994
      %v1001 = vsub.f32 %v999, %v1000
      %v1002 = vsub.f32 %v986, %v994
      %v1003 = vadd.f32 %v1001, 1e-05
      %v1004 = vrsqrt.pop %v1003
      %v1005 = vmul.f32 %v1002, %v1004
      %v1007 = vlaneseq
      %v1008 = vshrl.u32 %v1007, 7
      %v1009 = vsub.s32 0, %v1008
      %v1010 = vrot.slane %v987, %v1009
      %v1012 = vmul.f32 %v1005, %v1010
      %v1014 = vlaneseq
      %v1015 = vshrl.u32 %v1014, 7
      %v1016 = vsub.s32 0, %v1015
      %v1017 = vrot.slane %v988, %v1016
      %v1019 = vadd.f32 %v1012, %v1017
      %v1020 = vpack.c.bf16 %v1019, %v1019
      %v1021 = vld [vmem:[%s924] sm:$0xf]
      %v1022 = vld [vmem:[%s924 + $0x4] sm:$0xf]
      %v1023 = vld [vmem:[%s924 + $0x8] sm:$0xf]
      %v1024 = vld [vmem:[%s924 + $0xc] sm:$0xf]
      %v1025 = vld [vmem:[%s927] sm:$0x1]
      %v1027 = vlaneseq
      %v1028 = vshrl.u32 %v1027, 7
      %v1029 = vsub.s32 0, %v1028
      %v1030 = vrot.slane %v1025, %v1029
      %v1036 = vunpack.c.l.b16 %v1021
      %v1037 = vunpack.c.l.b16 %v1022
      %v1038 = vunpack.c.l.b16 %v1023
      %v1039 = vunpack.c.l.b16 %v1024
      %v1040 = vpack.c.b16 %v1037, %v1036
      %v1041 = vpack.c.b16 %v1039, %v1038
      %v1045 = vsel %vm989, %v1020, 0
      %1047 = vmatprep.subr.bf16.mxu0 0
      %1048 = vmatpush1.bf16.msra.mxu0 0
      %1049 = vmatprep.subr.bf16.mxu0 0
      %1050 = vmatpush1.bf16.msra.mxu0 0
      %1051 = vmatprep.subr.bf16.mxu0 0
      %1052 = vmatpush1.bf16.msra.mxu0 0
      %1053 = vmatprep.subr.bf16.mxu0 0
      %1054 = vmatpush1.bf16.msra.mxu0 0
      %1055 = vmatprep.subr.bf16.mxu0 0
      %1056 = vmatpush1.bf16.msra.mxu0 0
      %1057 = vmatprep.subr.bf16.mxu0 0
      %1058 = vmatpush1.bf16.msra.mxu0 0
      %1059 = vmatprep.subr.bf16.mxu0 0
      %1060 = vmatpush1.bf16.msra.mxu0 %v1041
      %1061 = vmatprep.subr.bf16.mxu0 0
      %1062 = vmatpush1.bf16.msra.mxu0 %v1040
      %1063 = vmatprep.subr.bf16.mxu0 0
      %1064 = vmatpush2.bf16.msra.mxu0 0
      %1065 = vmatprep.subr.bf16.mxu0 0
      %1066 = vmatpush2.bf16.msra.mxu0 0
      %1067 = vmatprep.subr.bf16.mxu0 0
      %1068 = vmatpush2.bf16.msra.mxu0 0
      %1069 = vmatprep.subr.bf16.mxu0 0
      %1070 = vmatpush2.bf16.msra.mxu0 0
      %1071 = vmatprep.subr.bf16.mxu0 0
      %1072 = vmatpush2.bf16.msra.mxu0 0
      %1073 = vmatprep.subr.bf16.mxu0 0
      %1074 = vmatpush2.bf16.msra.mxu0 0
      %1075 = vmatprep.subr.bf16.mxu0 0
      %1076 = vmatpush2.bf16.msra.mxu0 0
      %1077 = vmatprep.subr.bf16.mxu0 0
      %1078 = vmatpush2.bf16.msra.mxu0 0
      %1079 = vmatprep.mubr.bf16.mxu0 0
      %1080 = vmatmul.mubr.bf16.gmra.mxu0 %v1045
      %v1081 = vpop.f32.mrf.mxu0
      %v1082 = vadd.f32 %v1030, %v1081
      %v1083 = vpop.f32.mrf.mxu0
      %v1084 = vpop.f32.mrf.mxu0
      %v1085 = vpop.f32.mrf.mxu0
      %1086 = vdwg.mxu0
      %v1087 = vld [vmem:[%s932] sm:$0xf]
      %v1088 = vld [vmem:[%s932 + $0x4] sm:$0xf]
      %v1089 = vld [vmem:[%s932 + $0x8] sm:$0xf]
      %v1090 = vld [vmem:[%s932 + $0xc] sm:$0xf]
      %v1091 = vld [vmem:[%s935] sm:$0x1]
      %v1093 = vlaneseq
      %v1094 = vshrl.u32 %v1093, 7
      %v1095 = vsub.s32 0, %v1094
      %v1096 = vrot.slane %v1091, %v1095
      %v1102 = vunpack.c.l.b16 %v1087
      %v1103 = vunpack.c.l.b16 %v1088
      %v1104 = vunpack.c.l.b16 %v1089
      %v1105 = vunpack.c.l.b16 %v1090
      %v1106 = vpack.c.b16 %v1103, %v1102
      %v1107 = vpack.c.b16 %v1105, %v1104
      %1110 = vmatprep.subr.bf16.mxu0 0
      %1111 = vmatpush1.bf16.msra.mxu0 0
      %1112 = vmatprep.subr.bf16.mxu0 0
      %1113 = vmatpush1.bf16.msra.mxu0 0
      %1114 = vmatprep.subr.bf16.mxu0 0
      %1115 = vmatpush1.bf16.msra.mxu0 0
      %1116 = vmatprep.subr.bf16.mxu0 0
      %1117 = vmatpush1.bf16.msra.mxu0 0
      %1118 = vmatprep.subr.bf16.mxu0 0
      %1119 = vmatpush1.bf16.msra.mxu0 0
      %1120 = vmatprep.subr.bf16.mxu0 0
      %1121 = vmatpush1.bf16.msra.mxu0 0
      %1122 = vmatprep.subr.bf16.mxu0 0
      %1123 = vmatpush1.bf16.msra.mxu0 %v1107
      %1124 = vmatprep.subr.bf16.mxu0 0
      %1125 = vmatpush1.bf16.msra.mxu0 %v1106
      %1126 = vmatprep.subr.bf16.mxu0 0
      %1127 = vmatpush2.bf16.msra.mxu0 0
      %1128 = vmatprep.subr.bf16.mxu0 0
      %1129 = vmatpush2.bf16.msra.mxu0 0
      %1130 = vmatprep.subr.bf16.mxu0 0
      %1131 = vmatpush2.bf16.msra.mxu0 0
      %1132 = vmatprep.subr.bf16.mxu0 0
      %1133 = vmatpush2.bf16.msra.mxu0 0
      %1134 = vmatprep.subr.bf16.mxu0 0
      %1135 = vmatpush2.bf16.msra.mxu0 0
      %1136 = vmatprep.subr.bf16.mxu0 0
      %1137 = vmatpush2.bf16.msra.mxu0 0
      %1138 = vmatprep.subr.bf16.mxu0 0
      %1139 = vmatpush2.bf16.msra.mxu0 0
      %1140 = vmatprep.subr.bf16.mxu0 0
      %1141 = vmatpush2.bf16.msra.mxu0 0
      %1142 = vmatprep.mubr.bf16.mxu0 0
      %1143 = vmatmul.mubr.bf16.gmra.mxu0 %v1045
      %v1144 = vpop.f32.mrf.mxu0
      %v1145 = vadd.f32 %v1096, %v1144
      %v1146 = vpop.f32.mrf.mxu0
      %v1147 = vpop.f32.mrf.mxu0
      %v1148 = vpop.f32.mrf.mxu0
      %1149 = vdwg.mxu0
      %v1150 = vld [vmem:[%s940] sm:$0xf]
      %v1151 = vld [vmem:[%s940 + $0x4] sm:$0xf]
      %v1152 = vld [vmem:[%s940 + $0x8] sm:$0xf]
      %v1153 = vld [vmem:[%s940 + $0xc] sm:$0xf]
      %v1154 = vld [vmem:[%s943] sm:$0x1]
      %v1156 = vlaneseq
      %v1157 = vshrl.u32 %v1156, 7
      %v1158 = vsub.s32 0, %v1157
      %v1159 = vrot.slane %v1154, %v1158
      %v1165 = vunpack.c.l.b16 %v1150
      %v1166 = vunpack.c.l.b16 %v1151
      %v1167 = vunpack.c.l.b16 %v1152
      %v1168 = vunpack.c.l.b16 %v1153
      %v1169 = vpack.c.b16 %v1166, %v1165
      %v1170 = vpack.c.b16 %v1168, %v1167
      %1173 = vmatprep.subr.bf16.mxu0 0
      %1174 = vmatpush1.bf16.msra.mxu0 0
      %1175 = vmatprep.subr.bf16.mxu0 0
      %1176 = vmatpush1.bf16.msra.mxu0 0
      %1177 = vmatprep.subr.bf16.mxu0 0
      %1178 = vmatpush1.bf16.msra.mxu0 0
      %1179 = vmatprep.subr.bf16.mxu0 0
      %1180 = vmatpush1.bf16.msra.mxu0 0
      %1181 = vmatprep.subr.bf16.mxu0 0
      %1182 = vmatpush1.bf16.msra.mxu0 0
      %1183 = vmatprep.subr.bf16.mxu0 0
      %1184 = vmatpush1.bf16.msra.mxu0 0
      %1185 = vmatprep.subr.bf16.mxu0 0
      %1186 = vmatpush1.bf16.msra.mxu0 %v1170
      %1187 = vmatprep.subr.bf16.mxu0 0
      %1188 = vmatpush1.bf16.msra.mxu0 %v1169
      %1189 = vmatprep.subr.bf16.mxu0 0
      %1190 = vmatpush2.bf16.msra.mxu0 0
      %1191 = vmatprep.subr.bf16.mxu0 0
      %1192 = vmatpush2.bf16.msra.mxu0 0
      %1193 = vmatprep.subr.bf16.mxu0 0
      %1194 = vmatpush2.bf16.msra.mxu0 0
      %1195 = vmatprep.subr.bf16.mxu0 0
      %1196 = vmatpush2.bf16.msra.mxu0 0
      %1197 = vmatprep.subr.bf16.mxu0 0
      %1198 = vmatpush2.bf16.msra.mxu0 0
      %1199 = vmatprep.subr.bf16.mxu0 0
      %1200 = vmatpush2.bf16.msra.mxu0 0
      %1201 = vmatprep.subr.bf16.mxu0 0
      %1202 = vmatpush2.bf16.msra.mxu0 0
      %1203 = vmatprep.subr.bf16.mxu0 0
      %1204 = vmatpush2.bf16.msra.mxu0 0
      %1205 = vmatprep.mubr.bf16.mxu0 0
      %1206 = vmatmul.mubr.bf16.gmra.mxu0 %v1045
      %v1207 = vpop.f32.mrf.mxu0
      %v1208 = vadd.f32 %v1159, %v1207
      %v1209 = vpop.f32.mrf.mxu0
      %v1210 = vpop.f32.mrf.mxu0
      %v1211 = vpop.f32.mrf.mxu0
      %1212 = vdwg.mxu0
      %1214 = vrot.lane.b32.xlu0 %v1082, 120
      %v1215 = vpop.permute.xlu0 %1214
      %1217 = vrot.lane.b32.xlu0 %v1082, 112
      %v1218 = vpop.permute.xlu0 %1217
      %1220 = vrot.lane.b32.xlu0 %v1082, 104
      %v1221 = vpop.permute.xlu0 %1220
      %v1223 = vcombine.low %v1082, %v1218
      %v1224 = vcombine.high %v1082, %v1218
      %v1226 = vunpack.c.l.s4 1983009808
      %v1227 = vunpack.c.0.s8 %v1226
      %v1228 = vlaneseq
      %v1229 = vshrl.u32 %v1228, 7
      %v1230 = vsub.s32 %v1227, %v1229
      %v1231 = vrot.slane %v1223, %v1230
      %v1233 = vunpack.c.l.s4 1983009808
      %v1234 = vunpack.c.0.s8 %v1233
      %v1235 = vlaneseq
      %v1236 = vshrl.u32 %v1235, 7
      %v1237 = vsub.s32 %v1234, %v1236
      %v1238 = vrot.slane %v1224, %v1237
      %v1239 = vcombine.low %v1215, %v1221
      %v1240 = vcombine.high %v1215, %v1221
      %v1242 = vunpack.c.l.s4 1983009808
      %v1243 = vunpack.c.0.s8 %v1242
      %v1244 = vlaneseq
      %v1245 = vshrl.u32 %v1244, 7
      %v1246 = vsub.s32 %v1243, %v1245
      %v1247 = vrot.slane %v1239, %v1246
      %v1249 = vunpack.c.l.s4 1983009808
      %v1250 = vunpack.c.0.s8 %v1249
      %v1251 = vlaneseq
      %v1252 = vshrl.u32 %v1251, 7
      %v1253 = vsub.s32 %v1250, %v1252
      %v1254 = vrot.slane %v1240, %v1253
      %v1255 = vcombine.low %v1231, %v1247
      %v1256 = vcombine.high %v1231, %v1247
      %v1258 = vunpack.c.l.s4 1934713408
      %v1259 = vunpack.c.0.s8 %v1258
      %v1260 = vlaneseq
      %v1261 = vshrl.u32 %v1260, 7
      %v1262 = vsub.s32 %v1259, %v1261
      %v1263 = vrot.slane %v1255, %v1262
      %v1265 = vunpack.c.l.s4 1934713408
      %v1266 = vunpack.c.0.s8 %v1265
      %v1267 = vlaneseq
      %v1268 = vshrl.u32 %v1267, 7
      %v1269 = vsub.s32 %v1266, %v1268
      %v1270 = vrot.slane %v1256, %v1269
      %v1271 = vcombine.low %v1238, %v1254
      %v1272 = vcombine.high %v1238, %v1254
      %v1274 = vunpack.c.l.s4 1934713408
      %v1275 = vunpack.c.0.s8 %v1274
      %v1276 = vlaneseq
      %v1277 = vshrl.u32 %v1276, 7
      %v1278 = vsub.s32 %v1275, %v1277
      %v1279 = vrot.slane %v1271, %v1278
      %v1281 = vunpack.c.l.s4 1934713408
      %v1282 = vunpack.c.0.s8 %v1281
      %v1283 = vlaneseq
      %v1284 = vshrl.u32 %v1283, 7
      %v1285 = vsub.s32 %v1282, %v1284
      %v1286 = vrot.slane %v1272, %v1285
      %v1287 = vcombine.high %v1263, 0.0
      %v1288 = vcombine.high %v1270, 0.0
      %v1289 = vcombine.high %v1279, 0.0
      %v1290 = vcombine.high %v1286, 0.0
      %v1291 = vcombine.low %v1263, %v1270
      %v1293 = vunpack.c.l.s4 1983009808
      %v1294 = vunpack.c.0.s8 %v1293
      %v1295 = vlaneseq
      %v1296 = vshrl.u32 %v1295, 7
      %v1297 = vsub.s32 %v1294, %v1296
      %v1298 = vrot.slane %v1291, %v1297
      %v1299 = vcombine.low %v1287, %v1288
      %v1301 = vunpack.c.l.s4 1983009808
      %v1302 = vunpack.c.0.s8 %v1301
      %v1303 = vlaneseq
      %v1304 = vshrl.u32 %v1303, 7
      %v1305 = vsub.s32 %v1302, %v1304
      %v1306 = vrot.slane %v1299, %v1305
      %v1307 = vcombine.low %v1279, %v1286
      %v1309 = vunpack.c.l.s4 1983009808
      %v1310 = vunpack.c.0.s8 %v1309
      %v1311 = vlaneseq
      %v1312 = vshrl.u32 %v1311, 7
      %v1313 = vsub.s32 %v1310, %v1312
      %v1314 = vrot.slane %v1307, %v1313
      %v1315 = vcombine.low %v1289, %v1290
      %v1317 = vunpack.c.l.s4 1983009808
      %v1318 = vunpack.c.0.s8 %v1317
      %v1319 = vlaneseq
      %v1320 = vshrl.u32 %v1319, 7
      %v1321 = vsub.s32 %v1318, %v1320
      %v1322 = vrot.slane %v1315, %v1321
      %v1323 = vcombine.low %v1298, %v1306
      %v1324 = vcombine.high %v1298, %v1306
      %v1326 = vunpack.c.l.s4 1934713408
      %v1327 = vunpack.c.0.s8 %v1326
      %v1328 = vlaneseq
      %v1329 = vshrl.u32 %v1328, 7
      %v1330 = vsub.s32 %v1327, %v1329
      %v1331 = vrot.slane %v1323, %v1330
      %v1333 = vunpack.c.l.s4 1934713408
      %v1334 = vunpack.c.0.s8 %v1333
      %v1335 = vlaneseq
      %v1336 = vshrl.u32 %v1335, 7
      %v1337 = vsub.s32 %v1334, %v1336
      %v1338 = vrot.slane %v1324, %v1337
      %v1339 = vcombine.low %v1314, %v1322
      %v1340 = vcombine.high %v1314, %v1322
      %v1342 = vunpack.c.l.s4 1934713408
      %v1343 = vunpack.c.0.s8 %v1342
      %v1344 = vlaneseq
      %v1345 = vshrl.u32 %v1344, 7
      %v1346 = vsub.s32 %v1343, %v1345
      %v1347 = vrot.slane %v1339, %v1346
      %v1349 = vunpack.c.l.s4 1934713408
      %v1350 = vunpack.c.0.s8 %v1349
      %v1351 = vlaneseq
      %v1352 = vshrl.u32 %v1351, 7
      %v1353 = vsub.s32 %v1350, %v1352
      %v1354 = vrot.slane %v1340, %v1353
      %v1355 = vcombine.low %v1331, %v1347
      %v1356 = vcombine.high %v1331, %v1347
      %v1357 = vcombine.low %v1338, %v1354
      %v1358 = vcombine.high %v1338, %v1354
      %1360 = vrot.lane.b32.xlu0 %v1145, 120
      %v1361 = vpop.permute.xlu0 %1360
      %1363 = vrot.lane.b32.xlu0 %v1145, 112
      %v1364 = vpop.permute.xlu0 %1363
      %1366 = vrot.lane.b32.xlu0 %v1145, 104
      %v1367 = vpop.permute.xlu0 %1366
      %v1369 = vcombine.low %v1145, %v1364
      %v1370 = vcombine.high %v1145, %v1364
      %v1372 = vunpack.c.l.s4 1983009808
      %v1373 = vunpack.c.0.s8 %v1372
      %v1374 = vlaneseq
      %v1375 = vshrl.u32 %v1374, 7
      %v1376 = vsub.s32 %v1373, %v1375
      %v1377 = vrot.slane %v1369, %v1376
      %v1379 = vunpack.c.l.s4 1983009808
      %v1380 = vunpack.c.0.s8 %v1379
      %v1381 = vlaneseq
      %v1382 = vshrl.u32 %v1381, 7
      %v1383 = vsub.s32 %v1380, %v1382
      %v1384 = vrot.slane %v1370, %v1383
      %v1385 = vcombine.low %v1361, %v1367
      %v1386 = vcombine.high %v1361, %v1367
      %v1388 = vunpack.c.l.s4 1983009808
      %v1389 = vunpack.c.0.s8 %v1388
      %v1390 = vlaneseq
      %v1391 = vshrl.u32 %v1390, 7
      %v1392 = vsub.s32 %v1389, %v1391
      %v1393 = vrot.slane %v1385, %v1392
      %v1395 = vunpack.c.l.s4 1983009808
      %v1396 = vunpack.c.0.s8 %v1395
      %v1397 = vlaneseq
      %v1398 = vshrl.u32 %v1397, 7
      %v1399 = vsub.s32 %v1396, %v1398
      %v1400 = vrot.slane %v1386, %v1399
      %v1401 = vcombine.low %v1377, %v1393
      %v1402 = vcombine.high %v1377, %v1393
      %v1404 = vunpack.c.l.s4 1934713408
      %v1405 = vunpack.c.0.s8 %v1404
      %v1406 = vlaneseq
      %v1407 = vshrl.u32 %v1406, 7
      %v1408 = vsub.s32 %v1405, %v1407
      %v1409 = vrot.slane %v1401, %v1408
      %v1411 = vunpack.c.l.s4 1934713408
      %v1412 = vunpack.c.0.s8 %v1411
      %v1413 = vlaneseq
      %v1414 = vshrl.u32 %v1413, 7
      %v1415 = vsub.s32 %v1412, %v1414
      %v1416 = vrot.slane %v1402, %v1415
      %v1417 = vcombine.low %v1384, %v1400
      %v1418 = vcombine.high %v1384, %v1400
      %v1420 = vunpack.c.l.s4 1934713408
      %v1421 = vunpack.c.0.s8 %v1420
      %v1422 = vlaneseq
      %v1423 = vshrl.u32 %v1422, 7
      %v1424 = vsub.s32 %v1421, %v1423
      %v1425 = vrot.slane %v1417, %v1424
      %v1427 = vunpack.c.l.s4 1934713408
      %v1428 = vunpack.c.0.s8 %v1427
      %v1429 = vlaneseq
      %v1430 = vshrl.u32 %v1429, 7
      %v1431 = vsub.s32 %v1428, %v1430
      %v1432 = vrot.slane %v1418, %v1431
      %v1433 = vcombine.high %v1409, 0.0
      %v1434 = vcombine.high %v1416, 0.0
      %v1435 = vcombine.high %v1425, 0.0
      %v1436 = vcombine.high %v1432, 0.0
      %v1437 = vcombine.low %v1409, %v1416
      %v1439 = vunpack.c.l.s4 1983009808
      %v1440 = vunpack.c.0.s8 %v1439
      %v1441 = vlaneseq
      %v1442 = vshrl.u32 %v1441, 7
      %v1443 = vsub.s32 %v1440, %v1442
      %v1444 = vrot.slane %v1437, %v1443
      %v1445 = vcombine.low %v1433, %v1434
      %v1447 = vunpack.c.l.s4 1983009808
      %v1448 = vunpack.c.0.s8 %v1447
      %v1449 = vlaneseq
      %v1450 = vshrl.u32 %v1449, 7
      %v1451 = vsub.s32 %v1448, %v1450
      %v1452 = vrot.slane %v1445, %v1451
      %v1453 = vcombine.low %v1425, %v1432
      %v1455 = vunpack.c.l.s4 1983009808
      %v1456 = vunpack.c.0.s8 %v1455
      %v1457 = vlaneseq
      %v1458 = vshrl.u32 %v1457, 7
      %v1459 = vsub.s32 %v1456, %v1458
      %v1460 = vrot.slane %v1453, %v1459
      %v1461 = vcombine.low %v1435, %v1436
      %v1463 = vunpack.c.l.s4 1983009808
      %v1464 = vunpack.c.0.s8 %v1463
      %v1465 = vlaneseq
      %v1466 = vshrl.u32 %v1465, 7
      %v1467 = vsub.s32 %v1464, %v1466
      %v1468 = vrot.slane %v1461, %v1467
      %v1469 = vcombine.low %v1444, %v1452
      %v1470 = vcombine.high %v1444, %v1452
      %v1472 = vunpack.c.l.s4 1934713408
      %v1473 = vunpack.c.0.s8 %v1472
      %v1474 = vlaneseq
      %v1475 = vshrl.u32 %v1474, 7
      %v1476 = vsub.s32 %v1473, %v1475
      %v1477 = vrot.slane %v1469, %v1476
      %v1479 = vunpack.c.l.s4 1934713408
      %v1480 = vunpack.c.0.s8 %v1479
      %v1481 = vlaneseq
      %v1482 = vshrl.u32 %v1481, 7
      %v1483 = vsub.s32 %v1480, %v1482
      %v1484 = vrot.slane %v1470, %v1483
      %v1485 = vcombine.low %v1460, %v1468
      %v1486 = vcombine.high %v1460, %v1468
      %v1488 = vunpack.c.l.s4 1934713408
      %v1489 = vunpack.c.0.s8 %v1488
      %v1490 = vlaneseq
      %v1491 = vshrl.u32 %v1490, 7
      %v1492 = vsub.s32 %v1489, %v1491
      %v1493 = vrot.slane %v1485, %v1492
      %v1495 = vunpack.c.l.s4 1934713408
      %v1496 = vunpack.c.0.s8 %v1495
      %v1497 = vlaneseq
      %v1498 = vshrl.u32 %v1497, 7
      %v1499 = vsub.s32 %v1496, %v1498
      %v1500 = vrot.slane %v1486, %v1499
      %v1501 = vcombine.low %v1477, %v1493
      %v1502 = vcombine.high %v1477, %v1493
      %v1503 = vcombine.low %v1484, %v1500
      %v1504 = vcombine.high %v1484, %v1500
      %1506 = vrot.lane.b32.xlu0 %v1208, 120
      %v1507 = vpop.permute.xlu0 %1506
      %1509 = vrot.lane.b32.xlu0 %v1208, 112
      %v1510 = vpop.permute.xlu0 %1509
      %1512 = vrot.lane.b32.xlu0 %v1208, 104
      %v1513 = vpop.permute.xlu0 %1512
      %v1515 = vcombine.low %v1208, %v1510
      %v1516 = vcombine.high %v1208, %v1510
      %v1518 = vunpack.c.l.s4 1983009808
      %v1519 = vunpack.c.0.s8 %v1518
      %v1520 = vlaneseq
      %v1521 = vshrl.u32 %v1520, 7
      %v1522 = vsub.s32 %v1519, %v1521
      %v1523 = vrot.slane %v1515, %v1522
      %v1525 = vunpack.c.l.s4 1983009808
      %v1526 = vunpack.c.0.s8 %v1525
      %v1527 = vlaneseq
      %v1528 = vshrl.u32 %v1527, 7
      %v1529 = vsub.s32 %v1526, %v1528
      %v1530 = vrot.slane %v1516, %v1529
      %v1531 = vcombine.low %v1507, %v1513
      %v1532 = vcombine.high %v1507, %v1513
      %v1534 = vunpack.c.l.s4 1983009808
      %v1535 = vunpack.c.0.s8 %v1534
      %v1536 = vlaneseq
      %v1537 = vshrl.u32 %v1536, 7
      %v1538 = vsub.s32 %v1535, %v1537
      %v1539 = vrot.slane %v1531, %v1538
      %v1541 = vunpack.c.l.s4 1983009808
      %v1542 = vunpack.c.0.s8 %v1541
      %v1543 = vlaneseq
      %v1544 = vshrl.u32 %v1543, 7
      %v1545 = vsub.s32 %v1542, %v1544
      %v1546 = vrot.slane %v1532, %v1545
      %v1547 = vcombine.low %v1523, %v1539
      %v1548 = vcombine.high %v1523, %v1539
      %v1550 = vunpack.c.l.s4 1934713408
      %v1551 = vunpack.c.0.s8 %v1550
      %v1552 = vlaneseq
      %v1553 = vshrl.u32 %v1552, 7
      %v1554 = vsub.s32 %v1551, %v1553
      %v1555 = vrot.slane %v1547, %v1554
      %v1557 = vunpack.c.l.s4 1934713408
      %v1558 = vunpack.c.0.s8 %v1557
      %v1559 = vlaneseq
      %v1560 = vshrl.u32 %v1559, 7
      %v1561 = vsub.s32 %v1558, %v1560
      %v1562 = vrot.slane %v1548, %v1561
      %v1563 = vcombine.low %v1530, %v1546
      %v1564 = vcombine.high %v1530, %v1546
      %v1566 = vunpack.c.l.s4 1934713408
      %v1567 = vunpack.c.0.s8 %v1566
      %v1568 = vlaneseq
      %v1569 = vshrl.u32 %v1568, 7
      %v1570 = vsub.s32 %v1567, %v1569
      %v1571 = vrot.slane %v1563, %v1570
      %v1573 = vunpack.c.l.s4 1934713408
      %v1574 = vunpack.c.0.s8 %v1573
      %v1575 = vlaneseq
      %v1576 = vshrl.u32 %v1575, 7
      %v1577 = vsub.s32 %v1574, %v1576
      %v1578 = vrot.slane %v1564, %v1577
      %v1579 = vcombine.high %v1555, 0.0
      %v1580 = vcombine.high %v1562, 0.0
      %v1581 = vcombine.high %v1571, 0.0
      %v1582 = vcombine.high %v1578, 0.0
      %v1583 = vcombine.low %v1555, %v1562
      %v1585 = vunpack.c.l.s4 1983009808
      %v1586 = vunpack.c.0.s8 %v1585
      %v1587 = vlaneseq
      %v1588 = vshrl.u32 %v1587, 7
      %v1589 = vsub.s32 %v1586, %v1588
      %v1590 = vrot.slane %v1583, %v1589
      %v1591 = vcombine.low %v1579, %v1580
      %v1593 = vunpack.c.l.s4 1983009808
      %v1594 = vunpack.c.0.s8 %v1593
      %v1595 = vlaneseq
      %v1596 = vshrl.u32 %v1595, 7
      %v1597 = vsub.s32 %v1594, %v1596
      %v1598 = vrot.slane %v1591, %v1597
      %v1599 = vcombine.low %v1571, %v1578
      %v1601 = vunpack.c.l.s4 1983009808
      %v1602 = vunpack.c.0.s8 %v1601
      %v1603 = vlaneseq
      %v1604 = vshrl.u32 %v1603, 7
      %v1605 = vsub.s32 %v1602, %v1604
      %v1606 = vrot.slane %v1599, %v1605
      %v1607 = vcombine.low %v1581, %v1582
      %v1609 = vunpack.c.l.s4 1983009808
      %v1610 = vunpack.c.0.s8 %v1609
      %v1611 = vlaneseq
      %v1612 = vshrl.u32 %v1611, 7
      %v1613 = vsub.s32 %v1610, %v1612
      %v1614 = vrot.slane %v1607, %v1613
      %v1615 = vcombine.low %v1590, %v1598
      %v1616 = vcombine.high %v1590, %v1598
      %v1618 = vunpack.c.l.s4 1934713408
      %v1619 = vunpack.c.0.s8 %v1618
      %v1620 = vlaneseq
      %v1621 = vshrl.u32 %v1620, 7
      %v1622 = vsub.s32 %v1619, %v1621
      %v1623 = vrot.slane %v1615, %v1622
      %v1625 = vunpack.c.l.s4 1934713408
      %v1626 = vunpack.c.0.s8 %v1625
      %v1627 = vlaneseq
      %v1628 = vshrl.u32 %v1627, 7
      %v1629 = vsub.s32 %v1626, %v1628
      %v1630 = vrot.slane %v1616, %v1629
      %v1631 = vcombine.low %v1606, %v1614
      %v1632 = vcombine.high %v1606, %v1614
      %v1634 = vunpack.c.l.s4 1934713408
      %v1635 = vunpack.c.0.s8 %v1634
      %v1636 = vlaneseq
      %v1637 = vshrl.u32 %v1636, 7
      %v1638 = vsub.s32 %v1635, %v1637
      %v1639 = vrot.slane %v1631, %v1638
      %v1641 = vunpack.c.l.s4 1934713408
      %v1642 = vunpack.c.0.s8 %v1641
      %v1643 = vlaneseq
      %v1644 = vshrl.u32 %v1643, 7
      %v1645 = vsub.s32 %v1642, %v1644
      %v1646 = vrot.slane %v1632, %v1645
      %v1647 = vcombine.low %v1623, %v1639
      %v1648 = vcombine.high %v1623, %v1639
      %v1649 = vcombine.low %v1630, %v1646
      %v1650 = vcombine.high %v1630, %v1646
      %v1651 = vld [vmem:[%s1] sm:$0xff]
      %v1652 = vld [vmem:[%s2] sm:$0xff]
      %v1653 = vmul.f32 %v1355, %v1651
      %v1654 = vmul.f32 %v1356, %v1651
      %v1655 = vmul.f32 %v1357, %v1651
      %v1656 = vmul.f32 %v1358, %v1651
      %v1657 = vsub.f32 0.0, %v1355
      %v1658 = vsub.f32 0.0, %v1356
      %v1659 = vsub.f32 0.0, %v1357
      %v1660 = vsub.f32 0.0, %v1358
      %1665 = vrot.lane.b32.xlu0 %v1657, 124
      %v1666 = vpop.permute.xlu0 %1665
      %1667 = vrot.lane.b32.xlu0 %v1658, 124
      %v1668 = vpop.permute.xlu0 %1667
      %1669 = vrot.lane.b32.xlu0 %v1659, 124
      %v1670 = vpop.permute.xlu0 %1669
      %1671 = vrot.lane.b32.xlu0 %v1660, 124
      %v1672 = vpop.permute.xlu0 %1671
      %1681 = vrot.lane.b32.xlu0 %v1355, 4
      %v1682 = vpop.permute.xlu0 %1681
      %1683 = vrot.lane.b32.xlu0 %v1356, 4
      %v1684 = vpop.permute.xlu0 %1683
      %1685 = vrot.lane.b32.xlu0 %v1357, 4
      %v1686 = vpop.permute.xlu0 %1685
      %1687 = vrot.lane.b32.xlu0 %v1358, 4
      %v1688 = vpop.permute.xlu0 %1687
      %vm1693 = vcmask 31744
      %v1694 = vsel %vm1693, %v1666, %v1682
      %v1695 = vsel %vm1693, %v1668, %v1684
      %v1696 = vsel %vm1693, %v1670, %v1686
      %v1697 = vsel %vm1693, %v1672, %v1688
      %v1698 = vmul.f32 %v1694, %v1652
      %v1699 = vmul.f32 %v1695, %v1652
      %v1700 = vmul.f32 %v1696, %v1652
      %v1701 = vmul.f32 %v1697, %v1652
      %v1702 = vadd.f32 %v1653, %v1698
      %v1703 = vadd.f32 %v1654, %v1699
      %v1704 = vadd.f32 %v1655, %v1700
      %v1705 = vadd.f32 %v1656, %v1701
      %v1706 = vmul.f32 %v1501, %v1651
      %v1707 = vmul.f32 %v1502, %v1651
      %v1708 = vmul.f32 %v1503, %v1651
      %v1709 = vmul.f32 %v1504, %v1651
      %v1710 = vsub.f32 0.0, %v1501
      %v1711 = vsub.f32 0.0, %v1502
      %v1712 = vsub.f32 0.0, %v1503
      %v1713 = vsub.f32 0.0, %v1504
      %1718 = vrot.lane.b32.xlu0 %v1710, 124
      %v1719 = vpop.permute.xlu0 %1718
      %1720 = vrot.lane.b32.xlu0 %v1711, 124
      %v1721 = vpop.permute.xlu0 %1720
      %1722 = vrot.lane.b32.xlu0 %v1712, 124
      %v1723 = vpop.permute.xlu0 %1722
      %1724 = vrot.lane.b32.xlu0 %v1713, 124
      %v1725 = vpop.permute.xlu0 %1724
      %1734 = vrot.lane.b32.xlu0 %v1501, 4
      %v1735 = vpop.permute.xlu0 %1734
      %1736 = vrot.lane.b32.xlu0 %v1502, 4
      %v1737 = vpop.permute.xlu0 %1736
      %1738 = vrot.lane.b32.xlu0 %v1503, 4
      %v1739 = vpop.permute.xlu0 %1738
      %1740 = vrot.lane.b32.xlu0 %v1504, 4
      %v1741 = vpop.permute.xlu0 %1740
      %v1746 = vsel %vm1693, %v1719, %v1735
      %v1747 = vsel %vm1693, %v1721, %v1737
      %v1748 = vsel %vm1693, %v1723, %v1739
      %v1749 = vsel %vm1693, %v1725, %v1741
      %v1750 = vmul.f32 %v1746, %v1652
      %v1751 = vmul.f32 %v1747, %v1652
      %v1752 = vmul.f32 %v1748, %v1652
      %v1753 = vmul.f32 %v1749, %v1652
      %v1754 = vadd.f32 %v1706, %v1750
      %v1755 = vadd.f32 %v1707, %v1751
      %v1756 = vadd.f32 %v1708, %v1752
      %v1757 = vadd.f32 %v1709, %v1753
      %v1758 = vpack.c.bf16 %v1702, %v1702
      %v1759 = vpack.c.bf16 %v1703, %v1703
      %v1760 = vpack.c.bf16 %v1704, %v1704
      %v1761 = vpack.c.bf16 %v1705, %v1705
      %v1762 = vpack.c.bf16 %v1754, %v1754
      %v1763 = vpack.c.bf16 %v1755, %v1755
      %v1764 = vpack.c.bf16 %v1756, %v1756
      %v1765 = vpack.c.bf16 %v1757, %v1757
      %vm1766 = vcmask 64512
      %v1768 = vsel %vm1766, %v1758, 0
      %v1771 = vsel %vm1766, %v1762, 0
      %1773 = vmatprep.subr.bf16.mxu0 0
      %1774 = vmatpush1.bf16.xpose.msra.mxu0 0
      %1775 = vmatprep.subr.bf16.mxu0 0
      %1776 = vmatpush1.bf16.xpose.msra.mxu0 0
      %1777 = vmatprep.subr.bf16.mxu0 0
      %1778 = vmatpush1.bf16.xpose.msra.mxu0 0
      %1779 = vmatprep.subr.bf16.mxu0 0
      %1780 = vmatpush1.bf16.xpose.msra.mxu0 0
      %1781 = vmatprep.subr.bf16.mxu0 0
      %1782 = vmatpush1.bf16.xpose.msra.mxu0 0
      %1783 = vmatprep.subr.bf16.mxu0 0
      %1784 = vmatpush1.bf16.xpose.msra.mxu0 0
      %1785 = vmatprep.subr.bf16.mxu0 0
      %1786 = vmatpush1.bf16.xpose.msra.mxu0 0
      %1787 = vmatprep.subr.bf16.mxu0 0
      %1788 = vmatpush1.bf16.xpose.msra.mxu0 %v1771
      %1789 = vmatprep.subr.bf16.mxu0 0
      %1790 = vmatpush2.bf16.xpose.msra.mxu0 0
      %1791 = vmatprep.subr.bf16.mxu0 0
      %1792 = vmatpush2.bf16.xpose.msra.mxu0 0
      %1793 = vmatprep.subr.bf16.mxu0 0
      %1794 = vmatpush2.bf16.xpose.msra.mxu0 0
      %1795 = vmatprep.subr.bf16.mxu0 0
      %1796 = vmatpush2.bf16.xpose.msra.mxu0 0
      %1797 = vmatprep.subr.bf16.mxu0 0
      %1798 = vmatpush2.bf16.xpose.msra.mxu0 0
      %1799 = vmatprep.subr.bf16.mxu0 0
      %1800 = vmatpush2.bf16.xpose.msra.mxu0 0
      %1801 = vmatprep.subr.bf16.mxu0 0
      %1802 = vmatpush2.bf16.xpose.msra.mxu0 0
      %1803 = vmatprep.subr.bf16.mxu0 0
      %1804 = vmatpush2.bf16.xpose.msra.mxu0 0
      %1805 = vmatprep.mubr.bf16.mxu0 0
      %1806 = vmatmul.mubr.bf16.gmra.mxu0 %v1768
      %v1807 = vpop.f32.mrf.mxu0
      %v1808 = vadd.f32 0.0, %v1807
      %v1809 = vpop.f32.mrf.mxu0
      %v1810 = vpop.f32.mrf.mxu0
      %v1811 = vpop.f32.mrf.mxu0
      %1812 = vdwg.mxu0
      %v1814 = vsel %vm1766, %v1759, 0
      %v1817 = vsel %vm1766, %v1763, 0
      %1819 = vmatprep.subr.bf16.mxu0 0
      %1820 = vmatpush1.bf16.xpose.msra.mxu0 0
      %1821 = vmatprep.subr.bf16.mxu0 0
      %1822 = vmatpush1.bf16.xpose.msra.mxu0 0
      %1823 = vmatprep.subr.bf16.mxu0 0
      %1824 = vmatpush1.bf16.xpose.msra.mxu0 0
      %1825 = vmatprep.subr.bf16.mxu0 0
      %1826 = vmatpush1.bf16.xpose.msra.mxu0 0
      %1827 = vmatprep.subr.bf16.mxu0 0
      %1828 = vmatpush1.bf16.xpose.msra.mxu0 0
      %1829 = vmatprep.subr.bf16.mxu0 0
      %1830 = vmatpush1.bf16.xpose.msra.mxu0 0
      %1831 = vmatprep.subr.bf16.mxu0 0
      %1832 = vmatpush1.bf16.xpose.msra.mxu0 0
      %1833 = vmatprep.subr.bf16.mxu0 0
      %1834 = vmatpush1.bf16.xpose.msra.mxu0 %v1817
      %1835 = vmatprep.subr.bf16.mxu0 0
      %1836 = vmatpush2.bf16.xpose.msra.mxu0 0
      %1837 = vmatprep.subr.bf16.mxu0 0
      %1838 = vmatpush2.bf16.xpose.msra.mxu0 0
      %1839 = vmatprep.subr.bf16.mxu0 0
      %1840 = vmatpush2.bf16.xpose.msra.mxu0 0
      %1841 = vmatprep.subr.bf16.mxu0 0
      %1842 = vmatpush2.bf16.xpose.msra.mxu0 0
      %1843 = vmatprep.subr.bf16.mxu0 0
      %1844 = vmatpush2.bf16.xpose.msra.mxu0 0
      %1845 = vmatprep.subr.bf16.mxu0 0
      %1846 = vmatpush2.bf16.xpose.msra.mxu0 0
      %1847 = vmatprep.subr.bf16.mxu0 0
      %1848 = vmatpush2.bf16.xpose.msra.mxu0 0
      %1849 = vmatprep.subr.bf16.mxu0 0
      %1850 = vmatpush2.bf16.xpose.msra.mxu0 0
      %1851 = vmatprep.mubr.bf16.mxu0 0
      %1852 = vmatmul.mubr.bf16.gmra.mxu0 %v1814
      %v1853 = vpop.f32.mrf.mxu0
      %v1854 = vadd.f32 0.0, %v1853
      %v1855 = vpop.f32.mrf.mxu0
      %v1856 = vpop.f32.mrf.mxu0
      %v1857 = vpop.f32.mrf.mxu0
      %1858 = vdwg.mxu0
      %v1860 = vsel %vm1766, %v1760, 0
      %v1863 = vsel %vm1766, %v1764, 0
      %1865 = vmatprep.subr.bf16.mxu0 0
      %1866 = vmatpush1.bf16.xpose.msra.mxu0 0
      %1867 = vmatprep.subr.bf16.mxu0 0
      %1868 = vmatpush1.bf16.xpose.msra.mxu0 0
      %1869 = vmatprep.subr.bf16.mxu0 0
      %1870 = vmatpush1.bf16.xpose.msra.mxu0 0
      %1871 = vmatprep.subr.bf16.mxu0 0
      %1872 = vmatpush1.bf16.xpose.msra.mxu0 0
      %1873 = vmatprep.subr.bf16.mxu0 0
      %1874 = vmatpush1.bf16.xpose.msra.mxu0 0
      %1875 = vmatprep.subr.bf16.mxu0 0
      %1876 = vmatpush1.bf16.xpose.msra.mxu0 0
      %1877 = vmatprep.subr.bf16.mxu0 0
      %1878 = vmatpush1.bf16.xpose.msra.mxu0 0
      %1879 = vmatprep.subr.bf16.mxu0 0
      %1880 = vmatpush1.bf16.xpose.msra.mxu0 %v1863
      %1881 = vmatprep.subr.bf16.mxu0 0
      %1882 = vmatpush2.bf16.xpose.msra.mxu0 0
      %1883 = vmatprep.subr.bf16.mxu0 0
      %1884 = vmatpush2.bf16.xpose.msra.mxu0 0
      %1885 = vmatprep.subr.bf16.mxu0 0
      %1886 = vmatpush2.bf16.xpose.msra.mxu0 0
      %1887 = vmatprep.subr.bf16.mxu0 0
      %1888 = vmatpush2.bf16.xpose.msra.mxu0 0
      %1889 = vmatprep.subr.bf16.mxu0 0
      %1890 = vmatpush2.bf16.xpose.msra.mxu0 0
      %1891 = vmatprep.subr.bf16.mxu0 0
      %1892 = vmatpush2.bf16.xpose.msra.mxu0 0
      %1893 = vmatprep.subr.bf16.mxu0 0
      %1894 = vmatpush2.bf16.xpose.msra.mxu0 0
      %1895 = vmatprep.subr.bf16.mxu0 0
      %1896 = vmatpush2.bf16.xpose.msra.mxu0 0
      %1897 = vmatprep.mubr.bf16.mxu0 0
      %1898 = vmatmul.mubr.bf16.gmra.mxu0 %v1860
      %v1899 = vpop.f32.mrf.mxu0
      %v1900 = vadd.f32 0.0, %v1899
      %v1901 = vpop.f32.mrf.mxu0
      %v1902 = vpop.f32.mrf.mxu0
      %v1903 = vpop.f32.mrf.mxu0
      %1904 = vdwg.mxu0
      %v1906 = vsel %vm1766, %v1761, 0
      %v1909 = vsel %vm1766, %v1765, 0
      %1911 = vmatprep.subr.bf16.mxu0 0
      %1912 = vmatpush1.bf16.xpose.msra.mxu0 0
      %1913 = vmatprep.subr.bf16.mxu0 0
      %1914 = vmatpush1.bf16.xpose.msra.mxu0 0
      %1915 = vmatprep.subr.bf16.mxu0 0
      %1916 = vmatpush1.bf16.xpose.msra.mxu0 0
      %1917 = vmatprep.subr.bf16.mxu0 0
      %1918 = vmatpush1.bf16.xpose.msra.mxu0 0
      %1919 = vmatprep.subr.bf16.mxu0 0
      %1920 = vmatpush1.bf16.xpose.msra.mxu0 0
      %1921 = vmatprep.subr.bf16.mxu0 0
      %1922 = vmatpush1.bf16.xpose.msra.mxu0 0
      %1923 = vmatprep.subr.bf16.mxu0 0
      %1924 = vmatpush1.bf16.xpose.msra.mxu0 0
      %1925 = vmatprep.subr.bf16.mxu0 0
      %1926 = vmatpush1.bf16.xpose.msra.mxu0 %v1909
      %1927 = vmatprep.subr.bf16.mxu0 0
      %1928 = vmatpush2.bf16.xpose.msra.mxu0 0
      %1929 = vmatprep.subr.bf16.mxu0 0
      %1930 = vmatpush2.bf16.xpose.msra.mxu0 0
      %1931 = vmatprep.subr.bf16.mxu0 0
      %1932 = vmatpush2.bf16.xpose.msra.mxu0 0
      %1933 = vmatprep.subr.bf16.mxu0 0
      %1934 = vmatpush2.bf16.xpose.msra.mxu0 0
      %1935 = vmatprep.subr.bf16.mxu0 0
      %1936 = vmatpush2.bf16.xpose.msra.mxu0 0
      %1937 = vmatprep.subr.bf16.mxu0 0
      %1938 = vmatpush2.bf16.xpose.msra.mxu0 0
      %1939 = vmatprep.subr.bf16.mxu0 0
      %1940 = vmatpush2.bf16.xpose.msra.mxu0 0
      %1941 = vmatprep.subr.bf16.mxu0 0
      %1942 = vmatpush2.bf16.xpose.msra.mxu0 0
      %1943 = vmatprep.mubr.bf16.mxu0 0
      %1944 = vmatmul.mubr.bf16.gmra.mxu0 %v1906
      %v1945 = vpop.f32.mrf.mxu0
      %v1946 = vadd.f32 0.0, %v1945
      %v1947 = vpop.f32.mrf.mxu0
      %v1948 = vpop.f32.mrf.mxu0
      %v1949 = vpop.f32.mrf.mxu0
      %1950 = vdwg.mxu0
      %v1951 = vmul.f32 %v1808, 0.35355338
      %v1952 = vmul.f32 %v1854, 0.35355338
      %v1953 = vmul.f32 %v1900, 0.35355338
      %v1954 = vmul.f32 %v1946, 0.35355338
      %v1955 = vsel %vm1766, %v1951, -inf
      %1956 = vmax.xlane.f32.xlu0 %v1955
      %v1957 = vpop.xlane.xlu0 %1956
      %v1958 = vsel %vm1766, %v1952, -inf
      %1959 = vmax.xlane.f32.xlu0 %v1958
      %v1960 = vpop.xlane.xlu0 %1959
      %v1961 = vsel %vm1766, %v1953, -inf
      %1962 = vmax.xlane.f32.xlu0 %v1961
      %v1963 = vpop.xlane.xlu0 %1962
      %v1964 = vsel %vm1766, %v1954, -inf
      %1965 = vmax.xlane.f32.xlu0 %v1964
      %v1966 = vpop.xlane.xlu0 %1965
      %v1967 = vsub.f32 %v1951, %v1957
      %v1968 = vsub.f32 %v1952, %v1960
      %v1969 = vsub.f32 %v1953, %v1963
      %v1970 = vsub.f32 %v1954, %v1966
      %v1971 = vmul.f32 %v1967, 1.442695
      %v1972 = vpow.pop %v1971
      %v1973 = vmul.f32 %v1968, 1.442695
      %v1974 = vpow.pop %v1973
      %v1975 = vmul.f32 %v1969, 1.442695
      %v1976 = vpow.pop %v1975
      %v1977 = vmul.f32 %v1970, 1.442695
      %v1978 = vpow.pop %v1977
      %v1979 = vsel %vm1766, %v1972, 0.0
      %1980 = vadd.xlane.f32.xlu0 %v1979
      %v1981 = vpop.xlane.xlu0 %1980
      %v1982 = vsel %vm1766, %v1974, 0.0
      %1983 = vadd.xlane.f32.xlu0 %v1982
      %v1984 = vpop.xlane.xlu0 %1983
      %v1985 = vsel %vm1766, %v1976, 0.0
      %1986 = vadd.xlane.f32.xlu0 %v1985
      %v1987 = vpop.xlane.xlu0 %1986
      %v1988 = vsel %vm1766, %v1978, 0.0
      %1989 = vadd.xlane.f32.xlu0 %v1988
      %v1990 = vpop.xlane.xlu0 %1989
      %v1991 = vrcp.pop %v1981
      %v1992 = vrcp.pop %v1984
      %v1993 = vrcp.pop %v1987
      %v1994 = vrcp.pop %v1990
      %v1995 = vmul.f32 %v1972, %v1991
      %v1996 = vmul.f32 %v1974, %v1992
      %v1997 = vmul.f32 %v1976, %v1993
      %v1998 = vmul.f32 %v1978, %v1994
      %v1999 = vpack.c.bf16 %v1995, %v1995
      %v2000 = vpack.c.bf16 %v1996, %v1996
      %v2001 = vpack.c.bf16 %v1997, %v1997
      %v2002 = vpack.c.bf16 %v1998, %v1998
      %v2003 = vpack.c.bf16 %v1647, %v1647
      %v2004 = vpack.c.bf16 %v1648, %v1648
      %v2005 = vpack.c.bf16 %v1649, %v1649
      %v2006 = vpack.c.bf16 %v1650, %v1650
      %v2008 = vsel %vm1766, %v1999, 0
      %vm2010 = vcmask 1043456
      %v2012 = vsel %vm2010, %v2003, 0
      %2014 = vmatprep.subr.bf16.mxu0 0
      %2015 = vmatpush1.bf16.msra.mxu0 0
      %2016 = vmatprep.subr.bf16.mxu0 0
      %2017 = vmatpush1.bf16.msra.mxu0 0
      %2018 = vmatprep.subr.bf16.mxu0 0
      %2019 = vmatpush1.bf16.msra.mxu0 0
      %2020 = vmatprep.subr.bf16.mxu0 0
      %2021 = vmatpush1.bf16.msra.mxu0 0
      %2022 = vmatprep.subr.bf16.mxu0 0
      %2023 = vmatpush1.bf16.msra.mxu0 0
      %2024 = vmatprep.subr.bf16.mxu0 0
      %2025 = vmatpush1.bf16.msra.mxu0 0
      %2026 = vmatprep.subr.bf16.mxu0 0
      %2027 = vmatpush1.bf16.msra.mxu0 0
      %2028 = vmatprep.subr.bf16.mxu0 0
      %2029 = vmatpush1.bf16.msra.mxu0 %v2012
      %2030 = vmatprep.subr.bf16.mxu0 0
      %2031 = vmatpush2.bf16.msra.mxu0 0
      %2032 = vmatprep.subr.bf16.mxu0 0
      %2033 = vmatpush2.bf16.msra.mxu0 0
      %2034 = vmatprep.subr.bf16.mxu0 0
      %2035 = vmatpush2.bf16.msra.mxu0 0
      %2036 = vmatprep.subr.bf16.mxu0 0
      %2037 = vmatpush2.bf16.msra.mxu0 0
      %2038 = vmatprep.subr.bf16.mxu0 0
      %2039 = vmatpush2.bf16.msra.mxu0 0
      %2040 = vmatprep.subr.bf16.mxu0 0
      %2041 = vmatpush2.bf16.msra.mxu0 0
      %2042 = vmatprep.subr.bf16.mxu0 0
      %2043 = vmatpush2.bf16.msra.mxu0 0
      %2044 = vmatprep.subr.bf16.mxu0 0
      %2045 = vmatpush2.bf16.msra.mxu0 0
      %2046 = vmatprep.mubr.bf16.mxu0 0
      %2047 = vmatmul.mubr.bf16.gmra.mxu0 %v2008
      %v2048 = vpop.f32.mrf.mxu0
      %v2049 = vadd.f32 0.0, %v2048
      %v2050 = vpop.f32.mrf.mxu0
      %v2051 = vpop.f32.mrf.mxu0
      %v2052 = vpop.f32.mrf.mxu0
      %2053 = vdwg.mxu0
      %v2055 = vsel %vm1766, %v2000, 0
      %v2058 = vsel %vm2010, %v2004, 0
      %2060 = vmatprep.subr.bf16.mxu0 0
      %2061 = vmatpush1.bf16.msra.mxu0 0
      %2062 = vmatprep.subr.bf16.mxu0 0
      %2063 = vmatpush1.bf16.msra.mxu0 0
      %2064 = vmatprep.subr.bf16.mxu0 0
      %2065 = vmatpush1.bf16.msra.mxu0 0
      %2066 = vmatprep.subr.bf16.mxu0 0
      %2067 = vmatpush1.bf16.msra.mxu0 0
      %2068 = vmatprep.subr.bf16.mxu0 0
      %2069 = vmatpush1.bf16.msra.mxu0 0
      %2070 = vmatprep.subr.bf16.mxu0 0
      %2071 = vmatpush1.bf16.msra.mxu0 0
      %2072 = vmatprep.subr.bf16.mxu0 0
      %2073 = vmatpush1.bf16.msra.mxu0 0
      %2074 = vmatprep.subr.bf16.mxu0 0
      %2075 = vmatpush1.bf16.msra.mxu0 %v2058
      %2076 = vmatprep.subr.bf16.mxu0 0
      %2077 = vmatpush2.bf16.msra.mxu0 0
      %2078 = vmatprep.subr.bf16.mxu0 0
      %2079 = vmatpush2.bf16.msra.mxu0 0
      %2080 = vmatprep.subr.bf16.mxu0 0
      %2081 = vmatpush2.bf16.msra.mxu0 0
      %2082 = vmatprep.subr.bf16.mxu0 0
      %2083 = vmatpush2.bf16.msra.mxu0 0
      %2084 = vmatprep.subr.bf16.mxu0 0
      %2085 = vmatpush2.bf16.msra.mxu0 0
      %2086 = vmatprep.subr.bf16.mxu0 0
      %2087 = vmatpush2.bf16.msra.mxu0 0
      %2088 = vmatprep.subr.bf16.mxu0 0
      %2089 = vmatpush2.bf16.msra.mxu0 0
      %2090 = vmatprep.subr.bf16.mxu0 0
      %2091 = vmatpush2.bf16.msra.mxu0 0
      %2092 = vmatprep.mubr.bf16.mxu0 0
      %2093 = vmatmul.mubr.bf16.gmra.mxu0 %v2055
      %v2094 = vpop.f32.mrf.mxu0
      %v2095 = vadd.f32 0.0, %v2094
      %v2096 = vpop.f32.mrf.mxu0
      %v2097 = vpop.f32.mrf.mxu0
      %v2098 = vpop.f32.mrf.mxu0
      %2099 = vdwg.mxu0
      %v2101 = vsel %vm1766, %v2001, 0
      %v2104 = vsel %vm2010, %v2005, 0
      %2106 = vmatprep.subr.bf16.mxu0 0
      %2107 = vmatpush1.bf16.msra.mxu0 0
      %2108 = vmatprep.subr.bf16.mxu0 0
      %2109 = vmatpush1.bf16.msra.mxu0 0
      %2110 = vmatprep.subr.bf16.mxu0 0
      %2111 = vmatpush1.bf16.msra.mxu0 0
      %2112 = vmatprep.subr.bf16.mxu0 0
      %2113 = vmatpush1.bf16.msra.mxu0 0
      %2114 = vmatprep.subr.bf16.mxu0 0
      %2115 = vmatpush1.bf16.msra.mxu0 0
      %2116 = vmatprep.subr.bf16.mxu0 0
      %2117 = vmatpush1.bf16.msra.mxu0 0
      %2118 = vmatprep.subr.bf16.mxu0 0
      %2119 = vmatpush1.bf16.msra.mxu0 0
      %2120 = vmatprep.subr.bf16.mxu0 0
      %2121 = vmatpush1.bf16.msra.mxu0 %v2104
      %2122 = vmatprep.subr.bf16.mxu0 0
      %2123 = vmatpush2.bf16.msra.mxu0 0
      %2124 = vmatprep.subr.bf16.mxu0 0
      %2125 = vmatpush2.bf16.msra.mxu0 0
      %2126 = vmatprep.subr.bf16.mxu0 0
      %2127 = vmatpush2.bf16.msra.mxu0 0
      %2128 = vmatprep.subr.bf16.mxu0 0
      %2129 = vmatpush2.bf16.msra.mxu0 0
      %2130 = vmatprep.subr.bf16.mxu0 0
      %2131 = vmatpush2.bf16.msra.mxu0 0
      %2132 = vmatprep.subr.bf16.mxu0 0
      %2133 = vmatpush2.bf16.msra.mxu0 0
      %2134 = vmatprep.subr.bf16.mxu0 0
      %2135 = vmatpush2.bf16.msra.mxu0 0
      %2136 = vmatprep.subr.bf16.mxu0 0
      %2137 = vmatpush2.bf16.msra.mxu0 0
      %2138 = vmatprep.mubr.bf16.mxu0 0
      %2139 = vmatmul.mubr.bf16.gmra.mxu0 %v2101
      %v2140 = vpop.f32.mrf.mxu0
      %v2141 = vadd.f32 0.0, %v2140
      %v2142 = vpop.f32.mrf.mxu0
      %v2143 = vpop.f32.mrf.mxu0
      %v2144 = vpop.f32.mrf.mxu0
      %2145 = vdwg.mxu0
      %v2147 = vsel %vm1766, %v2002, 0
      %v2150 = vsel %vm2010, %v2006, 0
      %2152 = vmatprep.subr.bf16.mxu0 0
      %2153 = vmatpush1.bf16.msra.mxu0 0
      %2154 = vmatprep.subr.bf16.mxu0 0
      %2155 = vmatpush1.bf16.msra.mxu0 0
      %2156 = vmatprep.subr.bf16.mxu0 0
      %2157 = vmatpush1.bf16.msra.mxu0 0
      %2158 = vmatprep.subr.bf16.mxu0 0
      %2159 = vmatpush1.bf16.msra.mxu0 0
      %2160 = vmatprep.subr.bf16.mxu0 0
      %2161 = vmatpush1.bf16.msra.mxu0 0
      %2162 = vmatprep.subr.bf16.mxu0 0
      %2163 = vmatpush1.bf16.msra.mxu0 0
      %2164 = vmatprep.subr.bf16.mxu0 0
      %2165 = vmatpush1.bf16.msra.mxu0 0
      %2166 = vmatprep.subr.bf16.mxu0 0
      %2167 = vmatpush1.bf16.msra.mxu0 %v2150
      %2168 = vmatprep.subr.bf16.mxu0 0
      %2169 = vmatpush2.bf16.msra.mxu0 0
      %2170 = vmatprep.subr.bf16.mxu0 0
      %2171 = vmatpush2.bf16.msra.mxu0 0
      %2172 = vmatprep.subr.bf16.mxu0 0
      %2173 = vmatpush2.bf16.msra.mxu0 0
      %2174 = vmatprep.subr.bf16.mxu0 0
      %2175 = vmatpush2.bf16.msra.mxu0 0
      %2176 = vmatprep.subr.bf16.mxu0 0
      %2177 = vmatpush2.bf16.msra.mxu0 0
      %2178 = vmatprep.subr.bf16.mxu0 0
      %2179 = vmatpush2.bf16.msra.mxu0 0
      %2180 = vmatprep.subr.bf16.mxu0 0
      %2181 = vmatpush2.bf16.msra.mxu0 0
      %2182 = vmatprep.subr.bf16.mxu0 0
      %2183 = vmatpush2.bf16.msra.mxu0 0
      %2184 = vmatprep.mubr.bf16.mxu0 0
      %2185 = vmatmul.mubr.bf16.gmra.mxu0 %v2147
      %v2186 = vpop.f32.mrf.mxu0
      %v2187 = vadd.f32 0.0, %v2186
      %v2188 = vpop.f32.mrf.mxu0
      %v2189 = vpop.f32.mrf.mxu0
      %v2190 = vpop.f32.mrf.mxu0
      %2191 = vdwg.mxu0
      %v2192 = vcombine.low %v2049, %v2141
      %v2193 = vcombine.high %v2049, %v2141
      %v2195 = vunpack.c.l.s4 1983009808
      %v2196 = vunpack.c.0.s8 %v2195
      %v2197 = vlaneseq
      %v2198 = vshrl.u32 %v2197, 7
      %v2199 = vsub.s32 %v2196, %v2198
      %v2200 = vrot.slane %v2192, %v2199
      %v2202 = vunpack.c.l.s4 1983009808
      %v2203 = vunpack.c.0.s8 %v2202
      %v2204 = vlaneseq
      %v2205 = vshrl.u32 %v2204, 7
      %v2206 = vsub.s32 %v2203, %v2205
      %v2207 = vrot.slane %v2193, %v2206
      %v2208 = vcombine.low %v2095, %v2187
      %v2209 = vcombine.high %v2095, %v2187
      %v2211 = vunpack.c.l.s4 1983009808
      %v2212 = vunpack.c.0.s8 %v2211
      %v2213 = vlaneseq
      %v2214 = vshrl.u32 %v2213, 7
      %v2215 = vsub.s32 %v2212, %v2214
      %v2216 = vrot.slane %v2208, %v2215
      %v2218 = vunpack.c.l.s4 1983009808
      %v2219 = vunpack.c.0.s8 %v2218
      %v2220 = vlaneseq
      %v2221 = vshrl.u32 %v2220, 7
      %v2222 = vsub.s32 %v2219, %v2221
      %v2223 = vrot.slane %v2209, %v2222
      %v2224 = vcombine.low %v2200, %v2216
      %v2225 = vcombine.high %v2200, %v2216
      %v2227 = vunpack.c.l.s4 1934713408
      %v2228 = vunpack.c.0.s8 %v2227
      %v2229 = vlaneseq
      %v2230 = vshrl.u32 %v2229, 7
      %v2231 = vsub.s32 %v2228, %v2230
      %v2232 = vrot.slane %v2224, %v2231
      %v2234 = vunpack.c.l.s4 1934713408
      %v2235 = vunpack.c.0.s8 %v2234
      %v2236 = vlaneseq
      %v2237 = vshrl.u32 %v2236, 7
      %v2238 = vsub.s32 %v2235, %v2237
      %v2239 = vrot.slane %v2225, %v2238
      %v2240 = vcombine.low %v2207, %v2223
      %v2241 = vcombine.high %v2207, %v2223
      %v2243 = vunpack.c.l.s4 1934713408
      %v2244 = vunpack.c.0.s8 %v2243
      %v2245 = vlaneseq
      %v2246 = vshrl.u32 %v2245, 7
      %v2247 = vsub.s32 %v2244, %v2246
      %v2248 = vrot.slane %v2240, %v2247
      %v2250 = vunpack.c.l.s4 1934713408
      %v2251 = vunpack.c.0.s8 %v2250
      %v2252 = vlaneseq
      %v2253 = vshrl.u32 %v2252, 7
      %v2254 = vsub.s32 %v2251, %v2253
      %v2255 = vrot.slane %v2241, %v2254
      %v2256 = vcombine.high %v2232, 0.0
      %v2257 = vcombine.high %v2239, 0.0
      %v2258 = vcombine.high %v2248, 0.0
      %v2259 = vcombine.high %v2255, 0.0
      %v2260 = vcombine.low %v2232, %v2239
      %v2262 = vunpack.c.l.s4 1983009808
      %v2263 = vunpack.c.0.s8 %v2262
      %v2264 = vlaneseq
      %v2265 = vshrl.u32 %v2264, 7
      %v2266 = vsub.s32 %v2263, %v2265
      %v2267 = vrot.slane %v2260, %v2266
      %v2268 = vcombine.low %v2256, %v2257
      %v2270 = vunpack.c.l.s4 1983009808
      %v2271 = vunpack.c.0.s8 %v2270
      %v2272 = vlaneseq
      %v2273 = vshrl.u32 %v2272, 7
      %v2274 = vsub.s32 %v2271, %v2273
      %v2275 = vrot.slane %v2268, %v2274
      %v2276 = vcombine.low %v2248, %v2255
      %v2278 = vunpack.c.l.s4 1983009808
      %v2279 = vunpack.c.0.s8 %v2278
      %v2280 = vlaneseq
      %v2281 = vshrl.u32 %v2280, 7
      %v2282 = vsub.s32 %v2279, %v2281
      %v2283 = vrot.slane %v2276, %v2282
      %v2284 = vcombine.low %v2258, %v2259
      %v2286 = vunpack.c.l.s4 1983009808
      %v2287 = vunpack.c.0.s8 %v2286
      %v2288 = vlaneseq
      %v2289 = vshrl.u32 %v2288, 7
      %v2290 = vsub.s32 %v2287, %v2289
      %v2291 = vrot.slane %v2284, %v2290
      %v2292 = vcombine.low %v2267, %v2275
      %v2293 = vcombine.high %v2267, %v2275
      %v2295 = vunpack.c.l.s4 1934713408
      %v2296 = vunpack.c.0.s8 %v2295
      %v2297 = vlaneseq
      %v2298 = vshrl.u32 %v2297, 7
      %v2299 = vsub.s32 %v2296, %v2298
      %v2300 = vrot.slane %v2292, %v2299
      %v2302 = vunpack.c.l.s4 1934713408
      %v2303 = vunpack.c.0.s8 %v2302
      %v2304 = vlaneseq
      %v2305 = vshrl.u32 %v2304, 7
      %v2306 = vsub.s32 %v2303, %v2305
      %v2307 = vrot.slane %v2293, %v2306
      %v2308 = vcombine.low %v2283, %v2291
      %v2309 = vcombine.high %v2283, %v2291
      %v2311 = vunpack.c.l.s4 1934713408
      %v2312 = vunpack.c.0.s8 %v2311
      %v2313 = vlaneseq
      %v2314 = vshrl.u32 %v2313, 7
      %v2315 = vsub.s32 %v2312, %v2314
      %v2316 = vrot.slane %v2308, %v2315
      %v2318 = vunpack.c.l.s4 1934713408
      %v2319 = vunpack.c.0.s8 %v2318
      %v2320 = vlaneseq
      %v2321 = vshrl.u32 %v2320, 7
      %v2322 = vsub.s32 %v2319, %v2321
      %v2323 = vrot.slane %v2309, %v2322
      %v2324 = vcombine.low %v2300, %v2316
      %v2325 = vcombine.high %v2300, %v2316
      %v2326 = vcombine.low %v2307, %v2323
      %v2327 = vcombine.high %v2307, %v2323
      %2329 = vrot.lane.b32.xlu0 %v2325, 8
      %v2330 = vpop.permute.xlu0 %2329
      %2333 = vrot.lane.b32.xlu0 %v2326, 16
      %v2334 = vpop.permute.xlu0 %2333
      %2337 = vrot.lane.b32.xlu0 %v2327, 24
      %v2338 = vpop.permute.xlu0 %2337
      %v2340 = vsel %vm1766, %v2324, %v2330
      %vm2341 = vcmask 130048
      %v2342 = vsel %vm2341, %v2340, %v2334
      %vm2343 = vcmask 195584
      %v2344 = vsel %vm2343, %v2342, %v2338
      %v2345 = vpack.c.bf16 %v2344, %v2344
      %v2346 = vld [vmem:[%s948] sm:$0xf]
      %v2347 = vld [vmem:[%s948 + $0x4] sm:$0xf]
      %v2348 = vld [vmem:[%s948 + $0x8] sm:$0xf]
      %v2349 = vld [vmem:[%s948 + $0xc] sm:$0xf]
      %v2354 = vunpack.c.l.b16 %v2346
      %v2355 = vunpack.c.l.b16 %v2347
      %v2356 = vunpack.c.l.b16 %v2348
      %v2357 = vunpack.c.l.b16 %v2349
      %v2358 = vpack.c.b16 %v2355, %v2354
      %v2359 = vpack.c.b16 %v2357, %v2356
      %v2363 = vsel %vm989, %v2345, 0
      %2365 = vmatprep.subr.bf16.mxu0 0
      %2366 = vmatpush1.bf16.msra.mxu0 0
      %2367 = vmatprep.subr.bf16.mxu0 0
      %2368 = vmatpush1.bf16.msra.mxu0 0
      %2369 = vmatprep.subr.bf16.mxu0 0
      %2370 = vmatpush1.bf16.msra.mxu0 0
      %2371 = vmatprep.subr.bf16.mxu0 0
      %2372 = vmatpush1.bf16.msra.mxu0 0
      %2373 = vmatprep.subr.bf16.mxu0 0
      %2374 = vmatpush1.bf16.msra.mxu0 0
      %2375 = vmatprep.subr.bf16.mxu0 0
      %2376 = vmatpush1.bf16.msra.mxu0 0
      %2377 = vmatprep.subr.bf16.mxu0 0
      %2378 = vmatpush1.bf16.msra.mxu0 %v2359
      %2379 = vmatprep.subr.bf16.mxu0 0
      %2380 = vmatpush1.bf16.msra.mxu0 %v2358
      %2381 = vmatprep.subr.bf16.mxu0 0
      %2382 = vmatpush2.bf16.msra.mxu0 0
      %2383 = vmatprep.subr.bf16.mxu0 0
      %2384 = vmatpush2.bf16.msra.mxu0 0
      %2385 = vmatprep.subr.bf16.mxu0 0
      %2386 = vmatpush2.bf16.msra.mxu0 0
      %2387 = vmatprep.subr.bf16.mxu0 0
      %2388 = vmatpush2.bf16.msra.mxu0 0
      %2389 = vmatprep.subr.bf16.mxu0 0
      %2390 = vmatpush2.bf16.msra.mxu0 0
      %2391 = vmatprep.subr.bf16.mxu0 0
      %2392 = vmatpush2.bf16.msra.mxu0 0
      %2393 = vmatprep.subr.bf16.mxu0 0
      %2394 = vmatpush2.bf16.msra.mxu0 0
      %2395 = vmatprep.subr.bf16.mxu0 0
      %2396 = vmatpush2.bf16.msra.mxu0 0
      %2397 = vmatprep.mubr.bf16.mxu0 0
      %2398 = vmatmul.mubr.bf16.gmra.mxu0 %v2363
      %v2399 = vpop.f32.mrf.mxu0
      %v2400 = vadd.f32 0.0, %v2399
      %v2401 = vpop.f32.mrf.mxu0
      %v2402 = vpop.f32.mrf.mxu0
      %v2403 = vpop.f32.mrf.mxu0
      %2404 = vdwg.mxu0
      %v2405 = vadd.f32 %v986, %v2400
      %v2406 = vld [vmem:[%s951] sm:$0x1]
      %v2408 = vlaneseq
      %v2409 = vshrl.u32 %v2408, 7
      %v2410 = vsub.s32 0, %v2409
      %v2411 = vrot.slane %v2406, %v2410
      %v2413 = vadd.f32 %v2405, %v2411
      %v2414 = vld [vmem:[%s954] sm:$0x1]
      %v2415 = vld [vmem:[%s957] sm:$0x1]
      %v2416 = vsel %vm989, %v2413, 0.0
      %2417 = vadd.xlane.f32.xlu0 %v2416
      %v2418 = vpop.xlane.xlu0 %2417
      %v2419 = vmul.f32 %v2418, %v993
      %v2420 = vmul.f32 %v2413, %v2413
      %v2421 = vsel %vm989, %v2420, 0.0
      %2422 = vadd.xlane.f32.xlu0 %v2421
      %v2423 = vpop.xlane.xlu0 %2422
      %v2424 = vmul.f32 %v2423, %v993
      %v2425 = vmul.f32 %v2419, %v2419
      %v2426 = vsub.f32 %v2424, %v2425
      %v2427 = vsub.f32 %v2413, %v2419
      %v2428 = vadd.f32 %v2426, 1e-05
      %v2429 = vrsqrt.pop %v2428
      %v2430 = vmul.f32 %v2427, %v2429
      %v2432 = vlaneseq
      %v2433 = vshrl.u32 %v2432, 7
      %v2434 = vsub.s32 0, %v2433
      %v2435 = vrot.slane %v2414, %v2434
      %v2437 = vmul.f32 %v2430, %v2435
      %v2439 = vlaneseq
      %v2440 = vshrl.u32 %v2439, 7
      %v2441 = vsub.s32 0, %v2440
      %v2442 = vrot.slane %v2415, %v2441
      %v2444 = vadd.f32 %v2437, %v2442
      %v2445 = vpack.c.bf16 %v2444, %v2444
      %v2446 = vld [vmem:[%s962] sm:$0xf]
      %v2447 = vld [vmem:[%s962 + $0x4] sm:$0xf]
      %v2448 = vld [vmem:[%s962 + $0x8] sm:$0xf]
      %v2449 = vld [vmem:[%s962 + $0xc] sm:$0xf]
      %v2450 = vld [vmem:[%s965] sm:$0x1]
      %v2452 = vlaneseq
      %v2453 = vshrl.u32 %v2452, 7
      %v2454 = vsub.s32 0, %v2453
      %v2455 = vrot.slane %v2450, %v2454
      %v2461 = vunpack.c.l.b16 %v2446
      %v2462 = vunpack.c.l.b16 %v2447
      %v2463 = vunpack.c.l.b16 %v2448
      %v2464 = vunpack.c.l.b16 %v2449
      %v2465 = vpack.c.b16 %v2462, %v2461
      %v2466 = vpack.c.b16 %v2464, %v2463
      %v2470 = vsel %vm989, %v2445, 0
      %2472 = vmatprep.subr.bf16.mxu0 0
      %2473 = vmatpush1.bf16.msra.mxu0 0
      %2474 = vmatprep.subr.bf16.mxu0 0
      %2475 = vmatpush1.bf16.msra.mxu0 0
      %2476 = vmatprep.subr.bf16.mxu0 0
      %2477 = vmatpush1.bf16.msra.mxu0 0
      %2478 = vmatprep.subr.bf16.mxu0 0
      %2479 = vmatpush1.bf16.msra.mxu0 0
      %2480 = vmatprep.subr.bf16.mxu0 0
      %2481 = vmatpush1.bf16.msra.mxu0 0
      %2482 = vmatprep.subr.bf16.mxu0 0
      %2483 = vmatpush1.bf16.msra.mxu0 0
      %2484 = vmatprep.subr.bf16.mxu0 0
      %2485 = vmatpush1.bf16.msra.mxu0 %v2466
      %2486 = vmatprep.subr.bf16.mxu0 0
      %2487 = vmatpush1.bf16.msra.mxu0 %v2465
      %2488 = vmatprep.subr.bf16.mxu0 0
      %2489 = vmatpush2.bf16.msra.mxu0 0
      %2490 = vmatprep.subr.bf16.mxu0 0
      %2491 = vmatpush2.bf16.msra.mxu0 0
      %2492 = vmatprep.subr.bf16.mxu0 0
      %2493 = vmatpush2.bf16.msra.mxu0 0
      %2494 = vmatprep.subr.bf16.mxu0 0
      %2495 = vmatpush2.bf16.msra.mxu0 0
      %2496 = vmatprep.subr.bf16.mxu0 0
      %2497 = vmatpush2.bf16.msra.mxu0 0
      %2498 = vmatprep.subr.bf16.mxu0 0
      %2499 = vmatpush2.bf16.msra.mxu0 0
      %2500 = vmatprep.subr.bf16.mxu0 0
      %2501 = vmatpush2.bf16.msra.mxu0 0
      %2502 = vmatprep.subr.bf16.mxu0 0
      %2503 = vmatpush2.bf16.msra.mxu0 0
      %2504 = vmatprep.mubr.bf16.mxu0 0
      %2505 = vmatmul.mubr.bf16.gmra.mxu0 %v2470
      %v2506 = vpop.f32.mrf.mxu0
      %v2507 = vadd.f32 %v2455, %v2506
      %v2508 = vpop.f32.mrf.mxu0
      %v2509 = vpop.f32.mrf.mxu0
      %v2510 = vpop.f32.mrf.mxu0
      %2511 = vdwg.mxu0
      %v2512 = vmul.f32 %v2507, 0.5
      %v2513 = vmul.f32 %v2507, 0.70710677
      %vm2514 = vcmp.ge.f32.partialorder %v2513, 0.0
      %v2515 = vsel %vm2514, 1.0, -1.0
      %v2516 = vand.u32 2147483647, %v2513
      %v2517 = vmul.f32 %v2516, 0.3275911
      %v2518 = vadd.f32 %v2517, 1.0
      %v2519 = vrcp.pop %v2518
      %v2520 = vmul.f32 1.0, %v2519
      %v2521 = vmul.f32 %v2520, 1.0614054
      %v2522 = vadd.f32 %v2521, -1.4531521
      %v2523 = vmul.f32 %v2522, %v2520
      %v2524 = vadd.f32 %v2523, 1.4214138
      %v2525 = vmul.f32 %v2524, %v2520
      %v2526 = vadd.f32 %v2525, -0.28449672
      %v2527 = vmul.f32 %v2526, %v2520
      %v2528 = vadd.f32 %v2527, 0.2548296
      %v2529 = vmul.f32 %v2528, %v2520
      %v2530 = vsub.f32 0.0, %v2516
      %v2531 = vmul.f32 %v2530, %v2516
      %v2532 = vmul.f32 %v2531, 1.442695
      %v2533 = vpow.pop %v2532
      %v2534 = vmul.f32 %v2529, %v2533
      %v2535 = vsub.f32 1.0, %v2534
      %v2536 = vmul.f32 %v2515, %v2535
      %v2537 = vadd.f32 %v2536, 1.0
      %v2538 = vmul.f32 %v2512, %v2537
      %v2539 = vpack.c.bf16 %v2538, %v2538
      %v2540 = vld [vmem:[%s970] sm:$0xf]
      %v2541 = vld [vmem:[%s970 + $0x4] sm:$0xf]
      %v2542 = vld [vmem:[%s970 + $0x8] sm:$0xf]
      %v2543 = vld [vmem:[%s970 + $0xc] sm:$0xf]
      %v2544 = vld [vmem:[%s970 + $0x10] sm:$0xf]
      %v2545 = vld [vmem:[%s970 + $0x14] sm:$0xf]
      %v2546 = vld [vmem:[%s970 + $0x18] sm:$0xf]
      %v2547 = vld [vmem:[%s970 + $0x1c] sm:$0xf]
      %v2548 = vld [vmem:[%s973] sm:$0x1]
      %v2550 = vlaneseq
      %v2551 = vshrl.u32 %v2550, 7
      %v2552 = vsub.s32 0, %v2551
      %v2553 = vrot.slane %v2548, %v2552
      %v2563 = vunpack.c.l.b16 %v2540
      %v2564 = vunpack.c.l.b16 %v2541
      %v2565 = vunpack.c.l.b16 %v2542
      %v2566 = vunpack.c.l.b16 %v2543
      %v2567 = vunpack.c.l.b16 %v2544
      %v2568 = vunpack.c.l.b16 %v2545
      %v2569 = vunpack.c.l.b16 %v2546
      %v2570 = vunpack.c.l.b16 %v2547
      %v2571 = vpack.c.b16 %v2564, %v2563
      %v2572 = vpack.c.b16 %v2566, %v2565
      %v2573 = vpack.c.b16 %v2568, %v2567
      %v2574 = vpack.c.b16 %v2570, %v2569
      %vm2579 = vcmask 523264
      %v2581 = vsel %vm2579, %v2539, 0
      %2583 = vmatprep.subr.bf16.mxu0 0
      %2584 = vmatpush1.bf16.msra.mxu0 0
      %2585 = vmatprep.subr.bf16.mxu0 0
      %2586 = vmatpush1.bf16.msra.mxu0 0
      %2587 = vmatprep.subr.bf16.mxu0 0
      %2588 = vmatpush1.bf16.msra.mxu0 0
      %2589 = vmatprep.subr.bf16.mxu0 0
      %2590 = vmatpush1.bf16.msra.mxu0 0
      %2591 = vmatprep.subr.bf16.mxu0 0
      %2592 = vmatpush1.bf16.msra.mxu0 %v2574
      %2593 = vmatprep.subr.bf16.mxu0 0
      %2594 = vmatpush1.bf16.msra.mxu0 %v2573
      %2595 = vmatprep.subr.bf16.mxu0 0
      %2596 = vmatpush1.bf16.msra.mxu0 %v2572
      %2597 = vmatprep.subr.bf16.mxu0 0
      %2598 = vmatpush1.bf16.msra.mxu0 %v2571
      %2599 = vmatprep.subr.bf16.mxu0 0
      %2600 = vmatpush2.bf16.msra.mxu0 0
      %2601 = vmatprep.subr.bf16.mxu0 0
      %2602 = vmatpush2.bf16.msra.mxu0 0
      %2603 = vmatprep.subr.bf16.mxu0 0
      %2604 = vmatpush2.bf16.msra.mxu0 0
      %2605 = vmatprep.subr.bf16.mxu0 0
      %2606 = vmatpush2.bf16.msra.mxu0 0
      %2607 = vmatprep.subr.bf16.mxu0 0
      %2608 = vmatpush2.bf16.msra.mxu0 0
      %2609 = vmatprep.subr.bf16.mxu0 0
      %2610 = vmatpush2.bf16.msra.mxu0 0
      %2611 = vmatprep.subr.bf16.mxu0 0
      %2612 = vmatpush2.bf16.msra.mxu0 0
      %2613 = vmatprep.subr.bf16.mxu0 0
      %2614 = vmatpush2.bf16.msra.mxu0 0
      %2615 = vmatprep.mubr.bf16.mxu0 0
      %2616 = vmatmul.mubr.bf16.gmra.mxu0 %v2581
      %v2617 = vpop.f32.mrf.mxu0
      %v2618 = vadd.f32 %v2553, %v2617
      %v2619 = vpop.f32.mrf.mxu0
      %v2620 = vpop.f32.mrf.mxu0
      %v2621 = vpop.f32.mrf.mxu0
      %2622 = vdwg.mxu0
      %v2623 = vadd.f32 %v2413, %v2618
      %2624 = vst.msk [vmem:[#allocation2] sm:$0xff] %vm989, %v2623
      %p2625 = scmp.eq.s32.totalorder %s39, 1
      // Predicated region
      $region117: #{esm1v_token_classification_forward.1} parent=111 // pred_check
        %p2626 = pneg %p2625
      $region118: #{esm1v_token_classification_forward.1} parent=111 // pred_check_branch
        %2628 = sbr.rel (%p2626) target = $region120
      $region119: #{esm1v_token_classification_forward.1} parent=111 // pred_region
        %v2629 = vld [vmem:[%s19] sm:$0x1]
        %v2630 = vld [vmem:[%s20] sm:$0x1]
        %vm2631 = vcmask 260097
        %v2632 = vsel %vm2631, %v2623, 0.0
        %2633 = vadd.xlane.f32.xlu0 %v2632
        %v2634 = vpop.xlane.xlu0 %2633
        %v2635 = vmul.f32 %v2634, %v993
        %v2636 = vmul.f32 %v2623, %v2623
        %v2637 = vsel %vm2631, %v2636, 0.0
        %2638 = vadd.xlane.f32.xlu0 %v2637
        %v2639 = vpop.xlane.xlu0 %2638
        %v2640 = vmul.f32 %v2639, %v993
        %v2641 = vmul.f32 %v2635, %v2635
        %v2642 = vsub.f32 %v2640, %v2641
        %v2643 = vsub.f32 %v2623, %v2635
        %v2644 = vadd.f32 %v2642, 1e-05
        %v2645 = vrsqrt.pop %v2644
        %v2646 = vmul.f32 %v2643, %v2645
        %v2648 = vlaneseq
        %v2649 = vshrl.u32 %v2648, 7
        %v2650 = vsub.s32 0, %v2649
        %v2651 = vrot.slane %v2629, %v2650
        %v2653 = vmul.f32 %v2646, %v2651
        %v2655 = vlaneseq
        %v2656 = vshrl.u32 %v2655, 7
        %v2657 = vsub.s32 0, %v2656
        %v2658 = vrot.slane %v2630, %v2657
        %v2660 = vadd.f32 %v2653, %v2658
        %v2661 = vpack.c.bf16 %v2660, %v2660
        %v2662 = vld [vmem:[%s21] sm:$0xf]
        %v2663 = vld [vmem:[%s21 + $0x4] sm:$0xf]
        %v2664 = vld [vmem:[%s21 + $0x8] sm:$0xf]
        %v2665 = vld [vmem:[%s21 + $0xc] sm:$0xf]
        %v2666 = vld [vmem:[%s22] sm:$0x1]
        %v2668 = vlaneseq
        %v2669 = vshrl.u32 %v2668, 7
        %v2670 = vsub.s32 0, %v2669
        %v2671 = vrot.slane %v2666, %v2670
        %v2674 = vshrl.u32 %v2661, 16
        %v2676 = vshll.u32 %v2661, 16
        %v2678 = vrot.slane %v2676, 1
        %v2679 = vor.u32 %v2674, %v2678
        %v2684 = vunpack.c.l.b16 %v2662
        %v2685 = vunpack.c.l.b16 %v2663
        %v2686 = vunpack.c.l.b16 %v2664
        %v2687 = vunpack.c.l.b16 %v2665
        %v2688 = vpack.c.b16 %v2685, %v2684
        %v2689 = vpack.c.b16 %v2687, %v2686
        %v2693 = vsel %vm989, %v2679, 0
        %2695 = vmatprep.subr.bf16.mxu0 0
        %2696 = vmatpush1.bf16.msra.mxu0 0
        %2697 = vmatprep.subr.bf16.mxu0 0
        %2698 = vmatpush1.bf16.msra.mxu0 0
        %2699 = vmatprep.subr.bf16.mxu0 0
        %2700 = vmatpush1.bf16.msra.mxu0 0
        %2701 = vmatprep.subr.bf16.mxu0 0
        %2702 = vmatpush1.bf16.msra.mxu0 0
        %2703 = vmatprep.subr.bf16.mxu0 0
        %2704 = vmatpush1.bf16.msra.mxu0 0
        %2705 = vmatprep.subr.bf16.mxu0 0
        %2706 = vmatpush1.bf16.msra.mxu0 0
        %2707 = vmatprep.subr.bf16.mxu0 0
        %2708 = vmatpush1.bf16.msra.mxu0 %v2689
        %2709 = vmatprep.subr.bf16.mxu0 0
        %2710 = vmatpush1.bf16.msra.mxu0 %v2688
        %2711 = vmatprep.subr.bf16.mxu0 0
        %2712 = vmatpush2.bf16.msra.mxu0 0
        %2713 = vmatprep.subr.bf16.mxu0 0
        %2714 = vmatpush2.bf16.msra.mxu0 0
        %2715 = vmatprep.subr.bf16.mxu0 0
        %2716 = vmatpush2.bf16.msra.mxu0 0
        %2717 = vmatprep.subr.bf16.mxu0 0
        %2718 = vmatpush2.bf16.msra.mxu0 0
        %2719 = vmatprep.subr.bf16.mxu0 0
        %2720 = vmatpush2.bf16.msra.mxu0 0
        %2721 = vmatprep.subr.bf16.mxu0 0
        %2722 = vmatpush2.bf16.msra.mxu0 0
        %2723 = vmatprep.subr.bf16.mxu0 0
        %2724 = vmatpush2.bf16.msra.mxu0 0
        %2725 = vmatprep.subr.bf16.mxu0 0
        %2726 = vmatpush2.bf16.msra.mxu0 0
        %2727 = vmatprep.mubr.bf16.mxu0 0
        %2728 = vmatmul.mubr.bf16.gmra.mxu0 %v2693
        %v2729 = vpop.f32.mrf.mxu0
        %v2730 = vadd.f32 %v2671, %v2729
        %v2731 = vpop.f32.mrf.mxu0
        %v2732 = vpop.f32.mrf.mxu0
        %v2733 = vpop.f32.mrf.mxu0
        %2734 = vdwg.mxu0
        %2735 = vst [vmem:[%s977] sm:$0x3f] %v2730
      $region120: #{esm1v_token_classification_forward.1} parent=111 // pred_fallthru
        _
      %p2736 = scmp.lt.s32.totalorder %s38, 1
      %s2737 = scalar_select %p2736, %s38, 1
      %s2738 = smul.addr %s2737, 8
      %s2739 = scalar_lea.vmem %s23, %s2738
      // Predicated region
      $region121: #{esm1v_token_classification_forward.1} parent=111 // pred_check
        %p2740 = pneg %p632
      $region122: #{esm1v_token_classification_forward.1} parent=111 // pred_check_branch
        %2742 = sbr.rel (%p2740) target = $region124
      $region123: #{esm1v_token_classification_forward.1} parent=111 // pred_region
        _
      $region124: #{esm1v_token_classification_forward.1} parent=111 // pred_fallthru
        _
    $region112: #{esm1v_token_classification_forward.1} parent=5 // pred_fallthru
      _
    %p2743 = scmp.le.s32.totalorder 2, %s29
    // Predicated region
    $region125: #{esm1v_token_classification_forward.1} parent=5 // pred_check
      %p2744 = pneg %p2743
    $region126: #{esm1v_token_classification_forward.1} parent=5 // pred_check_branch
      %2746 = sbr.rel (%p2744) target = $region128
    $region127: #{esm1v_token_classification_forward.1} parent=5 // pred_region
      %s2747 = ssub.s32 %s29, 2
      // Predicated region
      $region129: #{esm1v_token_classification_forward.1} parent=127 // pred_check
        %p2748 = pneg %p638
      $region130: #{esm1v_token_classification_forward.1} parent=127 // pred_check_branch
        %2750 = sbr.rel (%p2748) target = $region132
      $region131: #{esm1v_token_classification_forward.1} parent=127 // pred_region
        %p2751 = scmp.lt.s32.totalorder %s40, 1
        %s2752 = scalar_select %p2751, %s40, 1
        %s2753 = smul.addr %s2752, 8
        %s2754 = scalar_lea.vmem %s23, %s2753
      $region132: #{esm1v_token_classification_forward.1} parent=127 // pred_fallthru
        _
    $region128: #{esm1v_token_classification_forward.1} parent=5 // pred_fallthru
      _
  $region6: #{esm1v_token_classification_forward.1} parent=0 // loop_footer
    %s33 = sadd.s32 1, %s29
  $region7: #{esm1v_token_classification_forward.1} parent=0 // loop_footer_branch
    %28 = sbr.rel target = $region3
  $region8: #{esm1v_token_classification_forward.1} parent=0 // loop_exit
    _

</llo_original>
